<compile_context>
chip_gen: v7x
topology: tpu7x:2x2x1
jax: 0.10.0
libtpu: 0.0.40
codegen_flags: <defaults>
</compile_context>

<pallas_src>
import jax
import jax.numpy as jnp
from jax.experimental import pallas as pl
from jax.experimental.pallas import tpu as pltpu

# ---- small synthetic CLIP-like config -------------------------------------
BATCH    = 2          # number of prompts
SEQ      = 8          # context length
D_MODEL  = 32         # transformer width
N_HEADS  = 4
HEAD_DIM = D_MODEL // N_HEADS
N_LAYERS = 2
EMBED    = 16         # text_projection output dim
DTYPE    = jnp.float32

BL = BATCH * SEQ      # flattened token rows


# ---------------------------------------------------------------------------
# in-kernel helper
# ---------------------------------------------------------------------------
def _layernorm(x, gamma, beta, eps=1e-5):
    mu = jnp.mean(x, axis=-1, keepdims=True)
    var = jnp.mean((x - mu) ** 2, axis=-1, keepdims=True)
    return (x - mu) * jax.lax.rsqrt(var + eps) * gamma + beta


# ---------------------------------------------------------------------------
# fused kernel: grid over transformer layers, activations resident in VMEM.
#   l == 0          : x = prompts + positional_embedding
#   every l         : x = x + MHA(ln_1(x)); x = x + c_proj(QuickGELU(c_fc(ln_2(x))))
#   l == N_LAYERS-1 : out = ln_final(x[EOT rows]) @ text_projection
# ---------------------------------------------------------------------------
def fused_text_encoder_kernel(
        prompts_ref, pos_ref, mask_ref, eot_sel_ref,
        ln1_g_ref, ln1_b_ref,
        qw_ref, qb_ref, kw_ref, kb_ref, vw_ref, vb_ref,
        ow_ref, ob_ref,
        ln2_g_ref, ln2_b_ref,
        fcw_ref, fcb_ref, pjw_ref, pjb_ref,
        lnf_g_ref, lnf_b_ref, proj_ref,
        o_ref,
        x_scratch):
    l = pl.program_id(0)

    # ---- first layer: build the resident activation -------------------------
    @pl.when(l == 0)
    def _init():
        pos = pos_ref[...]                                     # (L, D)
        pos_full = jnp.concatenate([pos] * BATCH, axis=0)      # (B*L, D)
        x_scratch[...] = prompts_ref[...] + pos_full

    x = x_scratch[...]                                         # (B*L, D)

    # ---- multi-head self-attention ------------------------------------------
    h = _layernorm(x, ln1_g_ref[0], ln1_b_ref[0])
    scale = 1.0 / (HEAD_DIM ** 0.5)
    q = (jnp.dot(h, qw_ref[0], preferred_element_type=jnp.float32) + qb_ref[0]) * scale
    k = jnp.dot(h, kw_ref[0], preferred_element_type=jnp.float32) + kb_ref[0]
    v = jnp.dot(h, vw_ref[0], preferred_element_type=jnp.float32) + vb_ref[0]

    mask = mask_ref[...]                                       # (B*L, B*L) block-diag causal
    lane = jax.lax.broadcasted_iota(jnp.int32, (1, D_MODEL), 1)
    attn = jnp.zeros((BL, D_MODEL), jnp.float32)
    for hh in range(N_HEADS):                                  # static unroll
        # per-head lane mask: selects this head's 8 lanes without slicing/concat
        hm = ((lane >= hh * HEAD_DIM) & (lane < (hh + 1) * HEAD_DIM)).astype(jnp.float32)
        s = jax.lax.dot_general(q * hm, k, (((1,), (1,)), ((), ())),
                                preferred_element_type=jnp.float32) + mask
        p = jax.nn.softmax(s, axis=-1)
        attn = attn + jnp.dot(p, v * hm, preferred_element_type=jnp.float32)

    attn = jnp.dot(attn, ow_ref[0], preferred_element_type=jnp.float32) + ob_ref[0]
    x = x + attn

    # ---- MLP with QuickGELU ---------------------------------------------------
    h2 = _layernorm(x, ln2_g_ref[0], ln2_b_ref[0])
    hf = jnp.dot(h2, fcw_ref[0], preferred_element_type=jnp.float32) + fcb_ref[0]
    hf = hf * jax.nn.sigmoid(1.702 * hf)                       # QuickGELU
    x = x + jnp.dot(hf, pjw_ref[0], preferred_element_type=jnp.float32) + pjb_ref[0]

    x_scratch[...] = x

    # ---- last layer: ln_final on EOT rows + text projection -------------------
    @pl.when(l == pl.num_programs(0) - 1)
    def _final():
        rows = jnp.dot(eot_sel_ref[...], x, preferred_element_type=jnp.float32)   # (B, D)
        rows = _layernorm(rows, lnf_g_ref[...], lnf_b_ref[...])
        o_ref[...] = jnp.dot(rows, proj_ref[...], preferred_element_type=jnp.float32)


# ---------------------------------------------------------------------------
# wrapper: layout prep (stack per-layer weights, build masks) + one pallas_call
# ---------------------------------------------------------------------------
@jax.jit
def text_encoder_forward(prompts, tokenized_prompts, params):
    # index glue stays in plain JAX: EOT position -> one-hot gather matrix
    eot = jnp.argmax(tokenized_prompts, axis=-1).astype(jnp.int32)          # (B,)
    flat_idx = jnp.arange(BATCH, dtype=jnp.int32) * SEQ + eot
    eot_sel = jax.nn.one_hot(flat_idx, BL, dtype=DTYPE)                     # (B, B*L)

    # block-diagonal (over batch) causal mask for flattened (B*L, B*L) scores
    bd_mask = jnp.full((BL, BL), -1e30, DTYPE)
    for b in range(BATCH):
        bd_mask = jax.lax.dynamic_update_slice(bd_mask, params["mask"], (b * SEQ, b * SEQ))

    layers = params["layers"]

    def stack_vec(name):      # per-layer vectors -> (NL, 1, dim)
        return jnp.stack([lp[name] for lp in layers], axis=0)[:, None, :]

    def stack_mat(name):      # per-layer matrices -> (NL, rows, cols)
        return jnp.stack([lp[name] for lp in layers], axis=0)

    in_w = stack_mat("in_w")                                   # (NL, D, 3D)
    in_b = stack_vec("in_b")                                   # (NL, 1, 3D)
    q_w, k_w, v_w = (in_w[:, :, 0:D_MODEL],
                     in_w[:, :, D_MODEL:2 * D_MODEL],
                     in_w[:, :, 2 * D_MODEL:3 * D_MODEL])
    q_b, k_b, v_b = (in_b[:, :, 0:D_MODEL],
                     in_b[:, :, D_MODEL:2 * D_MODEL],
                     in_b[:, :, 2 * D_MODEL:3 * D_MODEL])

    args = (
        prompts.reshape(BL, D_MODEL),                          # (B*L, D)
        params["pos"],                                         # (L, D)
        bd_mask,                                               # (B*L, B*L)
        eot_sel,                                               # (B, B*L)
        stack_vec("ln1_g"), stack_vec("ln1_b"),
        q_w, q_b, k_w, k_b, v_w, v_b,
        stack_mat("out_w"), stack_vec("out_b"),
        stack_vec("ln2_g"), stack_vec("ln2_b"),
        stack_mat("fc_w"), stack_vec("fc_b"),
        stack_mat("pj_w"), stack_vec("pj_b"),
        params["lnf_g"][None, :], params["lnf_b"][None, :],    # (1, D)
        params["proj"],                                        # (D, EMBED)
    )

    def const_spec(shape):
        zeros = (0,) * len(shape)
        return pl.BlockSpec(tuple(shape), lambda l: zeros)

    def layer_spec(arr):
        zeros = (0,) * (arr.ndim - 1)
        return pl.BlockSpec((1,) + tuple(arr.shape[1:]), lambda l: (l,) + zeros)

    in_specs = (
        [const_spec(a.shape) for a in args[:4]]        # prompts, pos, mask, eot_sel
        + [layer_spec(a) for a in args[4:-3]]          # stacked per-layer weights
        + [const_spec(a.shape) for a in args[-3:]]     # lnf_g, lnf_b, proj
    )

    grid_spec = pltpu.PrefetchScalarGridSpec(
        num_scalar_prefetch=0,
        grid=(N_LAYERS,),
        in_specs=in_specs,
        out_specs=pl.BlockSpec((BATCH, EMBED), lambda l: (0, 0)),
        scratch_shapes=[pltpu.VMEM((BL, D_MODEL), jnp.float32)],
    )

    return pl.pallas_call(
        fused_text_encoder_kernel,
        out_shape=jax.ShapeDtypeStruct((BATCH, EMBED), DTYPE),
        grid_spec=grid_spec,
        compiler_params=pltpu.CompilerParams(dimension_semantics=("arbitrary",)),
        cost_estimate=pl.CostEstimate(
            flops=1_060_000, transcendentals=6_400, bytes_accessed=120_000),
    )(*args)


# ---------------------------------------------------------------------------
# pure-JAX reference (same math, same weight layout) for a sanity check
# ---------------------------------------------------------------------------
def text_encoder_reference(prompts, tokenized_prompts, params):
    def ln(x, g, b, eps=1e-5):
        mu = x.mean(-1, keepdims=True)
        var = ((x - mu) ** 2).mean(-1, keepdims=True)
        return (x - mu) / jnp.sqrt(var + eps) * g + b

    x = prompts + params["pos"]
    for layer in params["layers"]:
        h = ln(x, layer["ln1_g"], layer["ln1_b"])
        qkv = h @ layer["in_w"] + layer["in_b"]
        q, k, v = jnp.split(qkv, 3, axis=-1)

        def split_heads(t):   # (N, L, D) -> (N, H, L, dh)
            return t.reshape(BATCH, SEQ, N_HEADS, HEAD_DIM).transpose(0, 2, 1, 3)

        qh, kh, vh = split_heads(q), split_heads(k), split_heads(v)
        s = jnp.einsum("nhqd,nhkd->nhqk", qh, kh) / (HEAD_DIM ** 0.5)
        s = s + params["mask"]
        p = jax.nn.softmax(s, axis=-1)
        a = jnp.einsum("nhqk,nhkd->nhqd", p, vh)
        a = a.transpose(0, 2, 1, 3).reshape(BATCH, SEQ, D_MODEL)
        x = x + (a @ layer["out_w"] + layer["out_b"])

        h2 = ln(x, layer["ln2_g"], layer["ln2_b"])
        hf = h2 @ layer["fc_w"] + layer["fc_b"]
        hf = hf * jax.nn.sigmoid(1.702 * hf)
        x = x + (hf @ layer["pj_w"] + layer["pj_b"])

    x = ln(x, params["lnf_g"], params["lnf_b"])
    eot = jnp.argmax(tokenized_prompts, axis=-1)
    return x[jnp.arange(BATCH), eot] @ params["proj"]


# ---------------------------------------------------------------------------
def make_params(key):
    def nrm(k, shape, scale=0.02):
        return (scale * jax.random.normal(k, shape)).astype(DTYPE)

    keys = jax.random.split(key, 2 + 6 * N_LAYERS)
    ki = iter(keys)
    layers = []
    for _ in range(N_LAYERS):
        layers.append(dict(
            ln1_g=jnp.ones((D_MODEL,), DTYPE), ln1_b=jnp.zeros((D_MODEL,), DTYPE),
            # PyTorch stores in_proj_weight as (3D, D); we keep it pre-transposed (D, 3D)
            in_w=nrm(next(ki), (D_MODEL, 3 * D_MODEL)), in_b=jnp.zeros((3 * D_MODEL,), DTYPE),
            out_w=nrm(next(ki), (D_MODEL, D_MODEL)),    out_b=jnp.zeros((D_MODEL,), DTYPE),
            ln2_g=jnp.ones((D_MODEL,), DTYPE), ln2_b=jnp.zeros((D_MODEL,), DTYPE),
            fc_w=nrm(next(ki), (D_MODEL, 4 * D_MODEL)), fc_b=jnp.zeros((4 * D_MODEL,), DTYPE),
            pj_w=nrm(next(ki), (4 * D_MODEL, D_MODEL)), pj_b=jnp.zeros((D_MODEL,), DTYPE),
        ))
        next(ki); next(ki)  # burn for determinism headroom
    return dict(
        pos=nrm(next(ki), (SEQ, D_MODEL)),
        layers=layers,
        lnf_g=jnp.ones((D_MODEL,), DTYPE), lnf_b=jnp.zeros((D_MODEL,), DTYPE),
        proj=nrm(next(ki), (D_MODEL, EMBED)),
        # CLIP build_attention_mask: additive causal mask (-inf above diagonal)
        mask=jnp.triu(jnp.full((SEQ, SEQ), -1e9, DTYPE), k=1),
    )


if __name__ == "__main__":
    root = jax.random.PRNGKey(0)
    k_param, k_prompt, k_tok = jax.random.split(root, 3)

    params = make_params(k_param)
    prompts = (0.02 * jax.random.normal(k_prompt, (BATCH, SEQ, D_MODEL))).astype(DTYPE)
    # token ids; put a large "EOT" id at distinct positions per prompt
    tokenized_prompts = jax.random.randint(k_tok, (BATCH, SEQ), 1, 1000, dtype=jnp.int32)
    tokenized_prompts = tokenized_prompts.at[0, 5].set(49407).at[1, 3].set(49407)

    out = text_encoder_forward(prompts, tokenized_prompts, params)
    out = jax.block_until_ready(out)

    ref = text_encoder_reference(prompts, tokenized_prompts, params)
    assert out.shape == (BATCH, EMBED)
    assert bool(jnp.all(jnp.isfinite(out)))
    assert bool(jnp.allclose(out, ref, atol=2e-2, rtol=2e-2))

    print("KERNEL_OK")
</pallas_src>

<mosaic_0001>
module attributes {stable_mosaic.version = 11 : i64} {
  func.func @fused_text_encoder_kernel(%arg0: i32, %arg1: memref<16x32xf32, #tpu.memory_space<vmem>>, %arg2: memref<8x32xf32, #tpu.memory_space<vmem>>, %arg3: memref<16x16xf32, #tpu.memory_space<vmem>>, %arg4: memref<2x16xf32, #tpu.memory_space<vmem>>, %arg5: memref<1x1x32xf32, #tpu.memory_space<vmem>>, %arg6: memref<1x1x32xf32, #tpu.memory_space<vmem>>, %arg7: memref<1x32x32xf32, #tpu.memory_space<vmem>>, %arg8: memref<1x1x32xf32, #tpu.memory_space<vmem>>, %arg9: memref<1x32x32xf32, #tpu.memory_space<vmem>>, %arg10: memref<1x1x32xf32, #tpu.memory_space<vmem>>, %arg11: memref<1x32x32xf32, #tpu.memory_space<vmem>>, %arg12: memref<1x1x32xf32, #tpu.memory_space<vmem>>, %arg13: memref<1x32x32xf32, #tpu.memory_space<vmem>>, %arg14: memref<1x1x32xf32, #tpu.memory_space<vmem>>, %arg15: memref<1x1x32xf32, #tpu.memory_space<vmem>>, %arg16: memref<1x1x32xf32, #tpu.memory_space<vmem>>, %arg17: memref<1x32x128xf32, #tpu.memory_space<vmem>>, %arg18: memref<1x1x128xf32, #tpu.memory_space<vmem>>, %arg19: memref<1x128x32xf32, #tpu.memory_space<vmem>>, %arg20: memref<1x1x32xf32, #tpu.memory_space<vmem>>, %arg21: memref<1x32xf32, #tpu.memory_space<vmem>>, %arg22: memref<1x32xf32, #tpu.memory_space<vmem>>, %arg23: memref<32x16xf32, #tpu.memory_space<vmem>>, %arg24: memref<2x16xf32, #tpu.memory_space<vmem>>, %arg25: memref<16x32xf32, #tpu.memory_space<vmem>>) attributes {dimension_semantics = [#tpu.dimension_semantics<arbitrary>], iteration_bounds = array<i64: 2>, scalar_prefetch = 0 : i64, scratch_operands = 1 : i64, tpu.core_type = #tpu.core_type<tc>, window_params = [{pipeline_mode = #tpu.pipeline_mode<synchronous>, transform_indices = @transform_0, window_bounds = array<i64: 16, 32>}, {pipeline_mode = #tpu.pipeline_mode<synchronous>, transform_indices = @transform_1, window_bounds = array<i64: 8, 32>}, {pipeline_mode = #tpu.pipeline_mode<synchronous>, transform_indices = @transform_2, window_bounds = array<i64: 16, 16>}, {pipeline_mode = #tpu.pipeline_mode<synchronous>, transform_indices = @transform_3, window_bounds = array<i64: 2, 16>}, {transform_indices = @transform_4, window_bounds = array<i64: 1, 1, 32>}, {transform_indices = @transform_5, window_bounds = array<i64: 1, 1, 32>}, {transform_indices = @transform_6, window_bounds = array<i64: 1, 32, 32>}, {transform_indices = @transform_7, window_bounds = array<i64: 1, 1, 32>}, {transform_indices = @transform_8, window_bounds = array<i64: 1, 32, 32>}, {transform_indices = @transform_9, window_bounds = array<i64: 1, 1, 32>}, {transform_indices = @transform_10, window_bounds = array<i64: 1, 32, 32>}, {transform_indices = @transform_11, window_bounds = array<i64: 1, 1, 32>}, {transform_indices = @transform_12, window_bounds = array<i64: 1, 32, 32>}, {transform_indices = @transform_13, window_bounds = array<i64: 1, 1, 32>}, {transform_indices = @transform_14, window_bounds = array<i64: 1, 1, 32>}, {transform_indices = @transform_15, window_bounds = array<i64: 1, 1, 32>}, {transform_indices = @transform_16, window_bounds = array<i64: 1, 32, 128>}, {transform_indices = @transform_17, window_bounds = array<i64: 1, 1, 128>}, {transform_indices = @transform_18, window_bounds = array<i64: 1, 128, 32>}, {transform_indices = @transform_19, window_bounds = array<i64: 1, 1, 32>}, {pipeline_mode = #tpu.pipeline_mode<synchronous>, transform_indices = @transform_20, window_bounds = array<i64: 1, 32>}, {pipeline_mode = #tpu.pipeline_mode<synchronous>, transform_indices = @transform_21, window_bounds = array<i64: 1, 32>}, {pipeline_mode = #tpu.pipeline_mode<synchronous>, transform_indices = @transform_22, window_bounds = array<i64: 32, 16>}, {pipeline_mode = #tpu.pipeline_mode<synchronous>, transform_indices = @transform_23, window_bounds = array<i64: 2, 16>}]} {
    %c0_i32 = arith.constant 0 : i32
    %0 = arith.cmpi eq, %arg0, %c0_i32 : i32
    %1 = arith.extui %0 : i1 to i32
    %c0_i32_0 = arith.constant 0 : i32
    %2 = arith.cmpi ne, %1, %c0_i32_0 : i32
    scf.if %2 {
      %c0_98 = arith.constant 0 : index
      %c0_99 = arith.constant 0 : index
      %221 = vector.load %arg2[%c0_98, %c0_99] : memref<8x32xf32, #tpu.memory_space<vmem>>, vector<8x32xf32>
      %222 = tpu.concatenate %221, %221 in 0 : vector<8x32xf32>, vector<8x32xf32> -> vector<16x32xf32>
      %c0_100 = arith.constant 0 : index
      %c0_101 = arith.constant 0 : index
      %223 = vector.load %arg1[%c0_100, %c0_101] : memref<16x32xf32, #tpu.memory_space<vmem>>, vector<16x32xf32>
      %224 = arith.addf %223, %222 : vector<16x32xf32>
      %c0_102 = arith.constant 0 : index
      %c0_103 = arith.constant 0 : index
      %225 = vector.load %arg25[%c0_102, %c0_103] : memref<16x32xf32, #tpu.memory_space<vmem>>, vector<16x32xf32>
      tpu.vector_store %arg25[%c0_102, %c0_103], %224 {strides = array<i32>} : memref<16x32xf32, #tpu.memory_space<vmem>>, vector<16x32xf32>,
    } else {
    }
    %c0 = arith.constant 0 : index
    %c0_1 = arith.constant 0 : index
    %3 = vector.load %arg25[%c0, %c0_1] : memref<16x32xf32, #tpu.memory_space<vmem>>, vector<16x32xf32>
    %c0_2 = arith.constant 0 : index
    %c0_3 = arith.constant 0 : index
    %c0_4 = arith.constant 0 : index
    %4 = vector.load %arg5[%c0_2, %c0_3, %c0_4] : memref<1x1x32xf32, #tpu.memory_space<vmem>>, vector<1x1x32xf32>
    %5 = vector.shape_cast %4 : vector<1x1x32xf32> to vector<1x32xf32>
    %c0_5 = arith.constant 0 : index
    %c0_6 = arith.constant 0 : index
    %c0_7 = arith.constant 0 : index
    %6 = vector.load %arg6[%c0_5, %c0_6, %c0_7] : memref<1x1x32xf32, #tpu.memory_space<vmem>>, vector<1x1x32xf32>
    %7 = vector.shape_cast %6 : vector<1x1x32xf32> to vector<1x32xf32>
    %cst = arith.constant dense<0.000000e+00> : vector<16xf32>
    %8 = vector.multi_reduction <add>, %3, %cst [1] : vector<16x32xf32> to vector<16xf32>
    %9 = vector.shape_cast %8 : vector<16xf32> to vector<16x1xf32>
    %cst_8 = arith.constant 3.200000e+01 : f32
    %10 = vector.broadcast %cst_8 : f32 to vector<16x1xf32>
    %11 = arith.divf %9, %10 : vector<16x1xf32>
    %12 = vector.broadcast %11 : vector<16x1xf32> to vector<16x32xf32>
    %13 = arith.subf %3, %12 : vector<16x32xf32>
    %14 = arith.mulf %13, %13 : vector<16x32xf32>
    %cst_9 = arith.constant dense<0.000000e+00> : vector<16xf32>
    %15 = vector.multi_reduction <add>, %14, %cst_9 [1] : vector<16x32xf32> to vector<16xf32>
    %16 = vector.shape_cast %15 : vector<16xf32> to vector<16x1xf32>
    %cst_10 = arith.constant 3.200000e+01 : f32
    %17 = vector.broadcast %cst_10 : f32 to vector<16x1xf32>
    %18 = arith.divf %16, %17 : vector<16x1xf32>
    %19 = vector.broadcast %11 : vector<16x1xf32> to vector<16x32xf32>
    %20 = arith.subf %3, %19 : vector<16x32xf32>
    %cst_11 = arith.constant 9.99999974E-6 : f32
    %21 = vector.broadcast %cst_11 : f32 to vector<16x1xf32>
    %22 = arith.addf %18, %21 : vector<16x1xf32>
    %23 = math.rsqrt %22 : vector<16x1xf32>
    %24 = vector.broadcast %23 : vector<16x1xf32> to vector<16x32xf32>
    %25 = arith.mulf %20, %24 : vector<16x32xf32>
    %26 = vector.broadcast %5 : vector<1x32xf32> to vector<16x32xf32>
    %27 = arith.mulf %25, %26 : vector<16x32xf32>
    %28 = vector.broadcast %7 : vector<1x32xf32> to vector<16x32xf32>
    %29 = arith.addf %27, %28 : vector<16x32xf32>
    %c0_12 = arith.constant 0 : index
    %c0_13 = arith.constant 0 : index
    %c0_14 = arith.constant 0 : index
    %30 = vector.load %arg7[%c0_12, %c0_13, %c0_14] : memref<1x32x32xf32, #tpu.memory_space<vmem>>, vector<1x32x32xf32>
    %31 = vector.shape_cast %30 : vector<1x32x32xf32> to vector<32x32xf32>
    %cst_15 = arith.constant dense<0.000000e+00> : vector<16x32xf32>
    %32 = tpu.matmul %29, %31, %cst_15 {dimension_numbers = #tpu.dot_dimension_numbers<[1], [0], [0], [1], [0, 0, 1, 1], [], []>} : vector<16x32xf32>, vector<32x32xf32>, vector<16x32xf32> -> vector<16x32xf32>
    %c0_16 = arith.constant 0 : index
    %c0_17 = arith.constant 0 : index
    %c0_18 = arith.constant 0 : index
    %33 = vector.load %arg8[%c0_16, %c0_17, %c0_18] : memref<1x1x32xf32, #tpu.memory_space<vmem>>, vector<1x1x32xf32>
    %34 = vector.shape_cast %33 : vector<1x1x32xf32> to vector<1x32xf32>
    %35 = vector.broadcast %34 : vector<1x32xf32> to vector<16x32xf32>
    %36 = arith.addf %32, %35 : vector<16x32xf32>
    %cst_19 = arith.constant 0.353553385 : f32
    %37 = vector.broadcast %cst_19 : f32 to vector<16x32xf32>
    %38 = arith.mulf %36, %37 : vector<16x32xf32>
    %c0_20 = arith.constant 0 : index
    %c0_21 = arith.constant 0 : index
    %c0_22 = arith.constant 0 : index
    %39 = vector.load %arg9[%c0_20, %c0_21, %c0_22] : memref<1x32x32xf32, #tpu.memory_space<vmem>>, vector<1x32x32xf32>
    %40 = vector.shape_cast %39 : vector<1x32x32xf32> to vector<32x32xf32>
    %cst_23 = arith.constant dense<0.000000e+00> : vector<16x32xf32>
    %41 = tpu.matmul %29, %40, %cst_23 {dimension_numbers = #tpu.dot_dimension_numbers<[1], [0], [0], [1], [0, 0, 1, 1], [], []>} : vector<16x32xf32>, vector<32x32xf32>, vector<16x32xf32> -> vector<16x32xf32>
    %c0_24 = arith.constant 0 : index
    %c0_25 = arith.constant 0 : index
    %c0_26 = arith.constant 0 : index
    %42 = vector.load %arg10[%c0_24, %c0_25, %c0_26] : memref<1x1x32xf32, #tpu.memory_space<vmem>>, vector<1x1x32xf32>
    %43 = vector.shape_cast %42 : vector<1x1x32xf32> to vector<1x32xf32>
    %44 = vector.broadcast %43 : vector<1x32xf32> to vector<16x32xf32>
    %45 = arith.addf %41, %44 : vector<16x32xf32>
    %c0_27 = arith.constant 0 : index
    %c0_28 = arith.constant 0 : index
    %c0_29 = arith.constant 0 : index
    %46 = vector.load %arg11[%c0_27, %c0_28, %c0_29] : memref<1x32x32xf32, #tpu.memory_space<vmem>>, vector<1x32x32xf32>
    %47 = vector.shape_cast %46 : vector<1x32x32xf32> to vector<32x32xf32>
    %cst_30 = arith.constant dense<0.000000e+00> : vector<16x32xf32>
    %48 = tpu.matmul %29, %47, %cst_30 {dimension_numbers = #tpu.dot_dimension_numbers<[1], [0], [0], [1], [0, 0, 1, 1], [], []>} : vector<16x32xf32>, vector<32x32xf32>, vector<16x32xf32> -> vector<16x32xf32>
    %c0_31 = arith.constant 0 : index
    %c0_32 = arith.constant 0 : index
    %c0_33 = arith.constant 0 : index
    %49 = vector.load %arg12[%c0_31, %c0_32, %c0_33] : memref<1x1x32xf32, #tpu.memory_space<vmem>>, vector<1x1x32xf32>
    %50 = vector.shape_cast %49 : vector<1x1x32xf32> to vector<1x32xf32>
    %51 = vector.broadcast %50 : vector<1x32xf32> to vector<16x32xf32>
    %52 = arith.addf %48, %51 : vector<16x32xf32>
    %c0_34 = arith.constant 0 : index
    %c0_35 = arith.constant 0 : index
    %53 = vector.load %arg3[%c0_34, %c0_35] : memref<16x16xf32, #tpu.memory_space<vmem>>, vector<16x16xf32>
    %54 = tpu.iota {dimensions = array<i32: 1>} : vector<1x32xi32>
    %cst_36 = arith.constant 0.000000e+00 : f32
    %55 = vector.broadcast %cst_36 : f32 to vector<16x32xf32>
    %c0_i32_37 = arith.constant 0 : i32
    %56 = vector.broadcast %c0_i32_37 : i32 to vector<1x32xi32>
    %57 = arith.cmpi sge, %54, %56 : vector<1x32xi32>
    %c8_i32 = arith.constant 8 : i32
    %58 = vector.broadcast %c8_i32 : i32 to vector<1x32xi32>
    %59 = arith.cmpi slt, %54, %58 : vector<1x32xi32>
    %60 = arith.andi %57, %59 : vector<1x32xi1>
    %61 = arith.extui %60 : vector<1x32xi1> to vector<1x32xi32>
    %62 = arith.sitofp %61 : vector<1x32xi32> to vector<1x32xf32>
    %63 = vector.broadcast %62 : vector<1x32xf32> to vector<16x32xf32>
    %64 = arith.mulf %38, %63 : vector<16x32xf32>
    %cst_38 = arith.constant dense<0.000000e+00> : vector<16x16xf32>
    %65 = tpu.matmul %64, %45, %cst_38 {dimension_numbers = #tpu.dot_dimension_numbers<[1], [1], [0], [0], [0, 0, 1, 0], [], []>} : vector<16x32xf32>, vector<16x32xf32>, vector<16x16xf32> -> vector<16x16xf32>
    %66 = arith.addf %65, %53 : vector<16x16xf32>
    %cst_39 = arith.constant dense<0xFF800000> : vector<16xf32>
    %67 = vector.multi_reduction <maximumf>, %66, %cst_39 [1] : vector<16x16xf32> to vector<16xf32>
    %cst_40 = arith.constant 0xFF800000 : f32
    %68 = vector.broadcast %cst_40 : f32 to vector<16xf32>
    %69 = arith.maximumf %68, %67 : vector<16xf32>
    %70 = vector.shape_cast %69 : vector<16xf32> to vector<16x1xf32>
    %71 = vector.broadcast %70 : vector<16x1xf32> to vector<16x16xf32>
    %72 = arith.subf %66, %71 : vector<16x16xf32>
    %73 = math.exp %72 : vector<16x16xf32>
    %cst_41 = arith.constant dense<0.000000e+00> : vector<16xf32>
    %74 = vector.multi_reduction <add>, %73, %cst_41 [1] : vector<16x16xf32> to vector<16xf32>
    %75 = vector.shape_cast %74 : vector<16xf32> to vector<16x1xf32>
    %76 = vector.broadcast %75 : vector<16x1xf32> to vector<16x16xf32>
    %77 = arith.divf %73, %76 : vector<16x16xf32>
    %78 = vector.broadcast %62 : vector<1x32xf32> to vector<16x32xf32>
    %79 = arith.mulf %52, %78 : vector<16x32xf32>
    %cst_42 = arith.constant dense<0.000000e+00> : vector<16x32xf32>
    %80 = tpu.matmul %77, %79, %cst_42 {dimension_numbers = #tpu.dot_dimension_numbers<[1], [0], [0], [1], [0, 0, 1, 1], [], []>} : vector<16x16xf32>, vector<16x32xf32>, vector<16x32xf32> -> vector<16x32xf32>
    %81 = arith.addf %55, %80 : vector<16x32xf32>
    %c8_i32_43 = arith.constant 8 : i32
    %82 = vector.broadcast %c8_i32_43 : i32 to vector<1x32xi32>
    %83 = arith.cmpi sge, %54, %82 : vector<1x32xi32>
    %c16_i32 = arith.constant 16 : i32
    %84 = vector.broadcast %c16_i32 : i32 to vector<1x32xi32>
    %85 = arith.cmpi slt, %54, %84 : vector<1x32xi32>
    %86 = arith.andi %83, %85 : vector<1x32xi1>
    %87 = arith.extui %86 : vector<1x32xi1> to vector<1x32xi32>
    %88 = arith.sitofp %87 : vector<1x32xi32> to vector<1x32xf32>
    %89 = vector.broadcast %88 : vector<1x32xf32> to vector<16x32xf32>
    %90 = arith.mulf %38, %89 : vector<16x32xf32>
    %cst_44 = arith.constant dense<0.000000e+00> : vector<16x16xf32>
    %91 = tpu.matmul %90, %45, %cst_44 {dimension_numbers = #tpu.dot_dimension_numbers<[1], [1], [0], [0], [0, 0, 1, 0], [], []>} : vector<16x32xf32>, vector<16x32xf32>, vector<16x16xf32> -> vector<16x16xf32>
    %92 = arith.addf %91, %53 : vector<16x16xf32>
    %cst_45 = arith.constant dense<0xFF800000> : vector<16xf32>
    %93 = vector.multi_reduction <maximumf>, %92, %cst_45 [1] : vector<16x16xf32> to vector<16xf32>
    %cst_46 = arith.constant 0xFF800000 : f32
    %94 = vector.broadcast %cst_46 : f32 to vector<16xf32>
    %95 = arith.maximumf %94, %93 : vector<16xf32>
    %96 = vector.shape_cast %95 : vector<16xf32> to vector<16x1xf32>
    %97 = vector.broadcast %96 : vector<16x1xf32> to vector<16x16xf32>
    %98 = arith.subf %92, %97 : vector<16x16xf32>
    %99 = math.exp %98 : vector<16x16xf32>
    %cst_47 = arith.constant dense<0.000000e+00> : vector<16xf32>
    %100 = vector.multi_reduction <add>, %99, %cst_47 [1] : vector<16x16xf32> to vector<16xf32>
    %101 = vector.shape_cast %100 : vector<16xf32> to vector<16x1xf32>
    %102 = vector.broadcast %101 : vector<16x1xf32> to vector<16x16xf32>
    %103 = arith.divf %99, %102 : vector<16x16xf32>
    %104 = vector.broadcast %88 : vector<1x32xf32> to vector<16x32xf32>
    %105 = arith.mulf %52, %104 : vector<16x32xf32>
    %cst_48 = arith.constant dense<0.000000e+00> : vector<16x32xf32>
    %106 = tpu.matmul %103, %105, %cst_48 {dimension_numbers = #tpu.dot_dimension_numbers<[1], [0], [0], [1], [0, 0, 1, 1], [], []>} : vector<16x16xf32>, vector<16x32xf32>, vector<16x32xf32> -> vector<16x32xf32>
    %107 = arith.addf %81, %106 : vector<16x32xf32>
    %c16_i32_49 = arith.constant 16 : i32
    %108 = vector.broadcast %c16_i32_49 : i32 to vector<1x32xi32>
    %109 = arith.cmpi sge, %54, %108 : vector<1x32xi32>
    %c24_i32 = arith.constant 24 : i32
    %110 = vector.broadcast %c24_i32 : i32 to vector<1x32xi32>
    %111 = arith.cmpi slt, %54, %110 : vector<1x32xi32>
    %112 = arith.andi %109, %111 : vector<1x32xi1>
    %113 = arith.extui %112 : vector<1x32xi1> to vector<1x32xi32>
    %114 = arith.sitofp %113 : vector<1x32xi32> to vector<1x32xf32>
    %115 = vector.broadcast %114 : vector<1x32xf32> to vector<16x32xf32>
    %116 = arith.mulf %38, %115 : vector<16x32xf32>
    %cst_50 = arith.constant dense<0.000000e+00> : vector<16x16xf32>
    %117 = tpu.matmul %116, %45, %cst_50 {dimension_numbers = #tpu.dot_dimension_numbers<[1], [1], [0], [0], [0, 0, 1, 0], [], []>} : vector<16x32xf32>, vector<16x32xf32>, vector<16x16xf32> -> vector<16x16xf32>
    %118 = arith.addf %117, %53 : vector<16x16xf32>
    %cst_51 = arith.constant dense<0xFF800000> : vector<16xf32>
    %119 = vector.multi_reduction <maximumf>, %118, %cst_51 [1] : vector<16x16xf32> to vector<16xf32>
    %cst_52 = arith.constant 0xFF800000 : f32
    %120 = vector.broadcast %cst_52 : f32 to vector<16xf32>
    %121 = arith.maximumf %120, %119 : vector<16xf32>
    %122 = vector.shape_cast %121 : vector<16xf32> to vector<16x1xf32>
    %123 = vector.broadcast %122 : vector<16x1xf32> to vector<16x16xf32>
    %124 = arith.subf %118, %123 : vector<16x16xf32>
    %125 = math.exp %124 : vector<16x16xf32>
    %cst_53 = arith.constant dense<0.000000e+00> : vector<16xf32>
    %126 = vector.multi_reduction <add>, %125, %cst_53 [1] : vector<16x16xf32> to vector<16xf32>
    %127 = vector.shape_cast %126 : vector<16xf32> to vector<16x1xf32>
    %128 = vector.broadcast %127 : vector<16x1xf32> to vector<16x16xf32>
    %129 = arith.divf %125, %128 : vector<16x16xf32>
    %130 = vector.broadcast %114 : vector<1x32xf32> to vector<16x32xf32>
    %131 = arith.mulf %52, %130 : vector<16x32xf32>
    %cst_54 = arith.constant dense<0.000000e+00> : vector<16x32xf32>
    %132 = tpu.matmul %129, %131, %cst_54 {dimension_numbers = #tpu.dot_dimension_numbers<[1], [0], [0], [1], [0, 0, 1, 1], [], []>} : vector<16x16xf32>, vector<16x32xf32>, vector<16x32xf32> -> vector<16x32xf32>
    %133 = arith.addf %107, %132 : vector<16x32xf32>
    %c24_i32_55 = arith.constant 24 : i32
    %134 = vector.broadcast %c24_i32_55 : i32 to vector<1x32xi32>
    %135 = arith.cmpi sge, %54, %134 : vector<1x32xi32>
    %c32_i32 = arith.constant 32 : i32
    %136 = vector.broadcast %c32_i32 : i32 to vector<1x32xi32>
    %137 = arith.cmpi slt, %54, %136 : vector<1x32xi32>
    %138 = arith.andi %135, %137 : vector<1x32xi1>
    %139 = arith.extui %138 : vector<1x32xi1> to vector<1x32xi32>
    %140 = arith.sitofp %139 : vector<1x32xi32> to vector<1x32xf32>
    %141 = vector.broadcast %140 : vector<1x32xf32> to vector<16x32xf32>
    %142 = arith.mulf %38, %141 : vector<16x32xf32>
    %cst_56 = arith.constant dense<0.000000e+00> : vector<16x16xf32>
    %143 = tpu.matmul %142, %45, %cst_56 {dimension_numbers = #tpu.dot_dimension_numbers<[1], [1], [0], [0], [0, 0, 1, 0], [], []>} : vector<16x32xf32>, vector<16x32xf32>, vector<16x16xf32> -> vector<16x16xf32>
    %144 = arith.addf %143, %53 : vector<16x16xf32>
    %cst_57 = arith.constant dense<0xFF800000> : vector<16xf32>
    %145 = vector.multi_reduction <maximumf>, %144, %cst_57 [1] : vector<16x16xf32> to vector<16xf32>
    %cst_58 = arith.constant 0xFF800000 : f32
    %146 = vector.broadcast %cst_58 : f32 to vector<16xf32>
    %147 = arith.maximumf %146, %145 : vector<16xf32>
    %148 = vector.shape_cast %147 : vector<16xf32> to vector<16x1xf32>
    %149 = vector.broadcast %148 : vector<16x1xf32> to vector<16x16xf32>
    %150 = arith.subf %144, %149 : vector<16x16xf32>
    %151 = math.exp %150 : vector<16x16xf32>
    %cst_59 = arith.constant dense<0.000000e+00> : vector<16xf32>
    %152 = vector.multi_reduction <add>, %151, %cst_59 [1] : vector<16x16xf32> to vector<16xf32>
    %153 = vector.shape_cast %152 : vector<16xf32> to vector<16x1xf32>
    %154 = vector.broadcast %153 : vector<16x1xf32> to vector<16x16xf32>
    %155 = arith.divf %151, %154 : vector<16x16xf32>
    %156 = vector.broadcast %140 : vector<1x32xf32> to vector<16x32xf32>
    %157 = arith.mulf %52, %156 : vector<16x32xf32>
    %cst_60 = arith.constant dense<0.000000e+00> : vector<16x32xf32>
    %158 = tpu.matmul %155, %157, %cst_60 {dimension_numbers = #tpu.dot_dimension_numbers<[1], [0], [0], [1], [0, 0, 1, 1], [], []>} : vector<16x16xf32>, vector<16x32xf32>, vector<16x32xf32> -> vector<16x32xf32>
    %159 = arith.addf %133, %158 : vector<16x32xf32>
    %c0_61 = arith.constant 0 : index
    %c0_62 = arith.constant 0 : index
    %c0_63 = arith.constant 0 : index
    %160 = vector.load %arg13[%c0_61, %c0_62, %c0_63] : memref<1x32x32xf32, #tpu.memory_space<vmem>>, vector<1x32x32xf32>
    %161 = vector.shape_cast %160 : vector<1x32x32xf32> to vector<32x32xf32>
    %cst_64 = arith.constant dense<0.000000e+00> : vector<16x32xf32>
    %162 = tpu.matmul %159, %161, %cst_64 {dimension_numbers = #tpu.dot_dimension_numbers<[1], [0], [0], [1], [0, 0, 1, 1], [], []>} : vector<16x32xf32>, vector<32x32xf32>, vector<16x32xf32> -> vector<16x32xf32>
    %c0_65 = arith.constant 0 : index
    %c0_66 = arith.constant 0 : index
    %c0_67 = arith.constant 0 : index
    %163 = vector.load %arg14[%c0_65, %c0_66, %c0_67] : memref<1x1x32xf32, #tpu.memory_space<vmem>>, vector<1x1x32xf32>
    %164 = vector.shape_cast %163 : vector<1x1x32xf32> to vector<1x32xf32>
    %165 = vector.broadcast %164 : vector<1x32xf32> to vector<16x32xf32>
    %166 = arith.addf %162, %165 : vector<16x32xf32>
    %167 = arith.addf %3, %166 : vector<16x32xf32>
    %c0_68 = arith.constant 0 : index
    %c0_69 = arith.constant 0 : index
    %c0_70 = arith.constant 0 : index
    %168 = vector.load %arg15[%c0_68, %c0_69, %c0_70] : memref<1x1x32xf32, #tpu.memory_space<vmem>>, vector<1x1x32xf32>
    %169 = vector.shape_cast %168 : vector<1x1x32xf32> to vector<1x32xf32>
    %c0_71 = arith.constant 0 : index
    %c0_72 = arith.constant 0 : index
    %c0_73 = arith.constant 0 : index
    %170 = vector.load %arg16[%c0_71, %c0_72, %c0_73] : memref<1x1x32xf32, #tpu.memory_space<vmem>>, vector<1x1x32xf32>
    %171 = vector.shape_cast %170 : vector<1x1x32xf32> to vector<1x32xf32>
    %cst_74 = arith.constant dense<0.000000e+00> : vector<16xf32>
    %172 = vector.multi_reduction <add>, %167, %cst_74 [1] : vector<16x32xf32> to vector<16xf32>
    %173 = vector.shape_cast %172 : vector<16xf32> to vector<16x1xf32>
    %cst_75 = arith.constant 3.200000e+01 : f32
    %174 = vector.broadcast %cst_75 : f32 to vector<16x1xf32>
    %175 = arith.divf %173, %174 : vector<16x1xf32>
    %176 = vector.broadcast %175 : vector<16x1xf32> to vector<16x32xf32>
    %177 = arith.subf %167, %176 : vector<16x32xf32>
    %178 = arith.mulf %177, %177 : vector<16x32xf32>
    %cst_76 = arith.constant dense<0.000000e+00> : vector<16xf32>
    %179 = vector.multi_reduction <add>, %178, %cst_76 [1] : vector<16x32xf32> to vector<16xf32>
    %180 = vector.shape_cast %179 : vector<16xf32> to vector<16x1xf32>
    %cst_77 = arith.constant 3.200000e+01 : f32
    %181 = vector.broadcast %cst_77 : f32 to vector<16x1xf32>
    %182 = arith.divf %180, %181 : vector<16x1xf32>
    %183 = vector.broadcast %175 : vector<16x1xf32> to vector<16x32xf32>
    %184 = arith.subf %167, %183 : vector<16x32xf32>
    %cst_78 = arith.constant 9.99999974E-6 : f32
    %185 = vector.broadcast %cst_78 : f32 to vector<16x1xf32>
    %186 = arith.addf %182, %185 : vector<16x1xf32>
    %187 = math.rsqrt %186 : vector<16x1xf32>
    %188 = vector.broadcast %187 : vector<16x1xf32> to vector<16x32xf32>
    %189 = arith.mulf %184, %188 : vector<16x32xf32>
    %190 = vector.broadcast %169 : vector<1x32xf32> to vector<16x32xf32>
    %191 = arith.mulf %189, %190 : vector<16x32xf32>
    %192 = vector.broadcast %171 : vector<1x32xf32> to vector<16x32xf32>
    %193 = arith.addf %191, %192 : vector<16x32xf32>
    %c0_79 = arith.constant 0 : index
    %c0_80 = arith.constant 0 : index
    %c0_81 = arith.constant 0 : index
    %194 = vector.load %arg17[%c0_79, %c0_80, %c0_81] : memref<1x32x128xf32, #tpu.memory_space<vmem>>, vector<1x32x128xf32>
    %195 = vector.shape_cast %194 : vector<1x32x128xf32> to vector<32x128xf32>
    %cst_82 = arith.constant dense<0.000000e+00> : vector<16x128xf32>
    %196 = tpu.matmul %193, %195, %cst_82 {dimension_numbers = #tpu.dot_dimension_numbers<[1], [0], [0], [1], [0, 0, 1, 1], [], []>} : vector<16x32xf32>, vector<32x128xf32>, vector<16x128xf32> -> vector<16x128xf32>
    %c0_83 = arith.constant 0 : index
    %c0_84 = arith.constant 0 : index
    %c0_85 = arith.constant 0 : index
    %197 = vector.load %arg18[%c0_83, %c0_84, %c0_85] : memref<1x1x128xf32, #tpu.memory_space<vmem>>, vector<1x1x128xf32>
    %198 = vector.shape_cast %197 : vector<1x1x128xf32> to vector<1x128xf32>
    %199 = vector.broadcast %198 : vector<1x128xf32> to vector<16x128xf32>
    %200 = arith.addf %196, %199 : vector<16x128xf32>
    %cst_86 = arith.constant 1.702000e+00 : f32
    %201 = vector.broadcast %cst_86 : f32 to vector<16x128xf32>
    %202 = arith.mulf %201, %200 : vector<16x128xf32>
    %203 = arith.negf %202 : vector<16x128xf32>
    %204 = math.exp %203 : vector<16x128xf32>
    %cst_87 = arith.constant 1.000000e+00 : f32
    %205 = vector.broadcast %cst_87 : f32 to vector<16x128xf32>
    %206 = arith.addf %205, %204 : vector<16x128xf32>
    %207 = arith.divf %205, %206 : vector<16x128xf32>
    %208 = arith.mulf %200, %207 : vector<16x128xf32>
    %c0_88 = arith.constant 0 : index
    %c0_89 = arith.constant 0 : index
    %c0_90 = arith.constant 0 : index
    %209 = vector.load %arg19[%c0_88, %c0_89, %c0_90] : memref<1x128x32xf32, #tpu.memory_space<vmem>>, vector<1x128x32xf32>
    %210 = vector.shape_cast %209 : vector<1x128x32xf32> to vector<128x32xf32>
    %cst_91 = arith.constant dense<0.000000e+00> : vector<16x32xf32>
    %211 = tpu.matmul %208, %210, %cst_91 {dimension_numbers = #tpu.dot_dimension_numbers<[1], [0], [0], [1], [0, 0, 1, 1], [], []>} : vector<16x128xf32>, vector<128x32xf32>, vector<16x32xf32> -> vector<16x32xf32>
    %212 = arith.addf %167, %211 : vector<16x32xf32>
    %c0_92 = arith.constant 0 : index
    %c0_93 = arith.constant 0 : index
    %c0_94 = arith.constant 0 : index
    %213 = vector.load %arg20[%c0_92, %c0_93, %c0_94] : memref<1x1x32xf32, #tpu.memory_space<vmem>>, vector<1x1x32xf32>
    %214 = vector.shape_cast %213 : vector<1x1x32xf32> to vector<1x32xf32>
    %215 = vector.broadcast %214 : vector<1x32xf32> to vector<16x32xf32>
    %216 = arith.addf %212, %215 : vector<16x32xf32>
    %c0_95 = arith.constant 0 : index
    %c0_96 = arith.constant 0 : index
    %217 = vector.load %arg25[%c0_95, %c0_96] : memref<16x32xf32, #tpu.memory_space<vmem>>, vector<16x32xf32>
    tpu.vector_store %arg25[%c0_95, %c0_96], %216 {strides = array<i32>} : memref<16x32xf32, #tpu.memory_space<vmem>>, vector<16x32xf32>,
    %c1_i32 = arith.constant 1 : i32
    %218 = arith.cmpi eq, %arg0, %c1_i32 : i32
    %219 = arith.extui %218 : i1 to i32
    %c0_i32_97 = arith.constant 0 : i32
    %220 = arith.cmpi ne, %219, %c0_i32_97 : i32
    scf.if %220 {
      %c0_98 = arith.constant 0 : index
      %c0_99 = arith.constant 0 : index
      %221 = vector.load %arg4[%c0_98, %c0_99] : memref<2x16xf32, #tpu.memory_space<vmem>>, vector<2x16xf32>
      %cst_100 = arith.constant dense<0.000000e+00> : vector<2x32xf32>
      %222 = tpu.matmul %221, %216, %cst_100 {dimension_numbers = #tpu.dot_dimension_numbers<[1], [0], [0], [1], [0, 0, 1, 1], [], []>} : vector<2x16xf32>, vector<16x32xf32>, vector<2x32xf32> -> vector<2x32xf32>
      %c0_101 = arith.constant 0 : index
      %c0_102 = arith.constant 0 : index
      %223 = vector.load %arg21[%c0_101, %c0_102] : memref<1x32xf32, #tpu.memory_space<vmem>>, vector<1x32xf32>
      %c0_103 = arith.constant 0 : index
      %c0_104 = arith.constant 0 : index
      %224 = vector.load %arg22[%c0_103, %c0_104] : memref<1x32xf32, #tpu.memory_space<vmem>>, vector<1x32xf32>
      %cst_105 = arith.constant dense<0.000000e+00> : vector<2xf32>
      %225 = vector.multi_reduction <add>, %222, %cst_105 [1] : vector<2x32xf32> to vector<2xf32>
      %226 = vector.shape_cast %225 : vector<2xf32> to vector<2x1xf32>
      %cst_106 = arith.constant 3.200000e+01 : f32
      %227 = vector.broadcast %cst_106 : f32 to vector<2x1xf32>
      %228 = arith.divf %226, %227 : vector<2x1xf32>
      %229 = vector.broadcast %228 : vector<2x1xf32> to vector<2x32xf32>
      %230 = arith.subf %222, %229 : vector<2x32xf32>
      %231 = arith.mulf %230, %230 : vector<2x32xf32>
      %cst_107 = arith.constant dense<0.000000e+00> : vector<2xf32>
      %232 = vector.multi_reduction <add>, %231, %cst_107 [1] : vector<2x32xf32> to vector<2xf32>
      %233 = vector.shape_cast %232 : vector<2xf32> to vector<2x1xf32>
      %cst_108 = arith.constant 3.200000e+01 : f32
      %234 = vector.broadcast %cst_108 : f32 to vector<2x1xf32>
      %235 = arith.divf %233, %234 : vector<2x1xf32>
      %236 = vector.broadcast %228 : vector<2x1xf32> to vector<2x32xf32>
      %237 = arith.subf %222, %236 : vector<2x32xf32>
      %cst_109 = arith.constant 9.99999974E-6 : f32
      %238 = vector.broadcast %cst_109 : f32 to vector<2x1xf32>
      %239 = arith.addf %235, %238 : vector<2x1xf32>
      %240 = math.rsqrt %239 : vector<2x1xf32>
      %241 = vector.broadcast %240 : vector<2x1xf32> to vector<2x32xf32>
      %242 = arith.mulf %237, %241 : vector<2x32xf32>
      %243 = vector.broadcast %223 : vector<1x32xf32> to vector<2x32xf32>
      %244 = arith.mulf %242, %243 : vector<2x32xf32>
      %245 = vector.broadcast %224 : vector<1x32xf32> to vector<2x32xf32>
      %246 = arith.addf %244, %245 : vector<2x32xf32>
      %c0_110 = arith.constant 0 : index
      %c0_111 = arith.constant 0 : index
      %247 = vector.load %arg23[%c0_110, %c0_111] : memref<32x16xf32, #tpu.memory_space<vmem>>, vector<32x16xf32>
      %cst_112 = arith.constant dense<0.000000e+00> : vector<2x16xf32>
      %248 = tpu.matmul %246, %247, %cst_112 {dimension_numbers = #tpu.dot_dimension_numbers<[1], [0], [0], [1], [0, 0, 1, 1], [], []>} : vector<2x32xf32>, vector<32x16xf32>, vector<2x16xf32> -> vector<2x16xf32>
      %c0_113 = arith.constant 0 : index
      %c0_114 = arith.constant 0 : index
      %249 = vector.load %arg24[%c0_113, %c0_114] : memref<2x16xf32, #tpu.memory_space<vmem>>, vector<2x16xf32>
      tpu.vector_store %arg24[%c0_113, %c0_114], %248 {strides = array<i32>} : memref<2x16xf32, #tpu.memory_space<vmem>>, vector<2x16xf32>,
    } else {
    }
    return
  }
  func.func @transform_0(%arg0: i32) -> (i32, i32) {
    %c0_i32 = arith.constant 0 : i32
    %c0_i32_0 = arith.constant 0 : i32
    %c0_i32_1 = arith.constant 0 : i32
    return %c0_i32, %c0_i32_0 : i32, i32
  }
  func.func @transform_1(%arg0: i32) -> (i32, i32) {
    %c0_i32 = arith.constant 0 : i32
    %c0_i32_0 = arith.constant 0 : i32
    %c0_i32_1 = arith.constant 0 : i32
    return %c0_i32, %c0_i32_0 : i32, i32
  }
  func.func @transform_2(%arg0: i32) -> (i32, i32) {
    %c0_i32 = arith.constant 0 : i32
    %c0_i32_0 = arith.constant 0 : i32
    %c0_i32_1 = arith.constant 0 : i32
    return %c0_i32, %c0_i32_0 : i32, i32
  }
  func.func @transform_3(%arg0: i32) -> (i32, i32) {
    %c0_i32 = arith.constant 0 : i32
    %c0_i32_0 = arith.constant 0 : i32
    %c0_i32_1 = arith.constant 0 : i32
    return %c0_i32, %c0_i32_0 : i32, i32
  }
  func.func @transform_4(%arg0: i32) -> (i32, i32, i32) {
    %c0_i32 = arith.constant 0 : i32
    %c0_i32_0 = arith.constant 0 : i32
    %c0_i32_1 = arith.constant 0 : i32
    return %arg0, %c0_i32, %c0_i32_0 : i32, i32, i32
  }
  func.func @transform_5(%arg0: i32) -> (i32, i32, i32) {
    %c0_i32 = arith.constant 0 : i32
    %c0_i32_0 = arith.constant 0 : i32
    %c0_i32_1 = arith.constant 0 : i32
    return %arg0, %c0_i32, %c0_i32_0 : i32, i32, i32
  }
  func.func @transform_6(%arg0: i32) -> (i32, i32, i32) {
    %c0_i32 = arith.constant 0 : i32
    %c0_i32_0 = arith.constant 0 : i32
    %c0_i32_1 = arith.constant 0 : i32
    return %arg0, %c0_i32, %c0_i32_0 : i32, i32, i32
  }
  func.func @transform_7(%arg0: i32) -> (i32, i32, i32) {
    %c0_i32 = arith.constant 0 : i32
    %c0_i32_0 = arith.constant 0 : i32
    %c0_i32_1 = arith.constant 0 : i32
    return %arg0, %c0_i32, %c0_i32_0 : i32, i32, i32
  }
  func.func @transform_8(%arg0: i32) -> (i32, i32, i32) {
    %c0_i32 = arith.constant 0 : i32
    %c0_i32_0 = arith.constant 0 : i32
    %c0_i32_1 = arith.constant 0 : i32
    return %arg0, %c0_i32, %c0_i32_0 : i32, i32, i32
  }
  func.func @transform_9(%arg0: i32) -> (i32, i32, i32) {
    %c0_i32 = arith.constant 0 : i32
    %c0_i32_0 = arith.constant 0 : i32
    %c0_i32_1 = arith.constant 0 : i32
    return %arg0, %c0_i32, %c0_i32_0 : i32, i32, i32
  }
  func.func @transform_10(%arg0: i32) -> (i32, i32, i32) {
    %c0_i32 = arith.constant 0 : i32
    %c0_i32_0 = arith.constant 0 : i32
    %c0_i32_1 = arith.constant 0 : i32
    return %arg0, %c0_i32, %c0_i32_0 : i32, i32, i32
  }
  func.func @transform_11(%arg0: i32) -> (i32, i32, i32) {
    %c0_i32 = arith.constant 0 : i32
    %c0_i32_0 = arith.constant 0 : i32
    %c0_i32_1 = arith.constant 0 : i32
    return %arg0, %c0_i32, %c0_i32_0 : i32, i32, i32
  }
  func.func @transform_12(%arg0: i32) -> (i32, i32, i32) {
    %c0_i32 = arith.constant 0 : i32
    %c0_i32_0 = arith.constant 0 : i32
    %c0_i32_1 = arith.constant 0 : i32
    return %arg0, %c0_i32, %c0_i32_0 : i32, i32, i32
  }
  func.func @transform_13(%arg0: i32) -> (i32, i32, i32) {
    %c0_i32 = arith.constant 0 : i32
    %c0_i32_0 = arith.constant 0 : i32
    %c0_i32_1 = arith.constant 0 : i32
    return %arg0, %c0_i32, %c0_i32_0 : i32, i32, i32
  }
  func.func @transform_14(%arg0: i32) -> (i32, i32, i32) {
    %c0_i32 = arith.constant 0 : i32
    %c0_i32_0 = arith.constant 0 : i32
    %c0_i32_1 = arith.constant 0 : i32
    return %arg0, %c0_i32, %c0_i32_0 : i32, i32, i32
  }
  func.func @transform_15(%arg0: i32) -> (i32, i32, i32) {
    %c0_i32 = arith.constant 0 : i32
    %c0_i32_0 = arith.constant 0 : i32
    %c0_i32_1 = arith.constant 0 : i32
    return %arg0, %c0_i32, %c0_i32_0 : i32, i32, i32
  }
  func.func @transform_16(%arg0: i32) -> (i32, i32, i32) {
    %c0_i32 = arith.constant 0 : i32
    %c0_i32_0 = arith.constant 0 : i32
    %c0_i32_1 = arith.constant 0 : i32
    return %arg0, %c0_i32, %c0_i32_0 : i32, i32, i32
  }
  func.func @transform_17(%arg0: i32) -> (i32, i32, i32) {
    %c0_i32 = arith.constant 0 : i32
    %c0_i32_0 = arith.constant 0 : i32
    %c0_i32_1 = arith.constant 0 : i32
    return %arg0, %c0_i32, %c0_i32_0 : i32, i32, i32
  }
  func.func @transform_18(%arg0: i32) -> (i32, i32, i32) {
    %c0_i32 = arith.constant 0 : i32
    %c0_i32_0 = arith.constant 0 : i32
    %c0_i32_1 = arith.constant 0 : i32
    return %arg0, %c0_i32, %c0_i32_0 : i32, i32, i32
  }
  func.func @transform_19(%arg0: i32) -> (i32, i32, i32) {
    %c0_i32 = arith.constant 0 : i32
    %c0_i32_0 = arith.constant 0 : i32
    %c0_i32_1 = arith.constant 0 : i32
    return %arg0, %c0_i32, %c0_i32_0 : i32, i32, i32
  }
  func.func @transform_20(%arg0: i32) -> (i32, i32) {
    %c0_i32 = arith.constant 0 : i32
    %c0_i32_0 = arith.constant 0 : i32
    %c0_i32_1 = arith.constant 0 : i32
    return %c0_i32, %c0_i32_0 : i32, i32
  }
  func.func @transform_21(%arg0: i32) -> (i32, i32) {
    %c0_i32 = arith.constant 0 : i32
    %c0_i32_0 = arith.constant 0 : i32
    %c0_i32_1 = arith.constant 0 : i32
    return %c0_i32, %c0_i32_0 : i32, i32
  }
  func.func @transform_22(%arg0: i32) -> (i32, i32) {
    %c0_i32 = arith.constant 0 : i32
    %c0_i32_0 = arith.constant 0 : i32
    %c0_i32_1 = arith.constant 0 : i32
    return %c0_i32, %c0_i32_0 : i32, i32
  }
  func.func @transform_23(%arg0: i32) -> (i32, i32) {
    %c0_i32 = arith.constant 0 : i32
    %c0_i32_0 = arith.constant 0 : i32
    %c0_i32_1 = arith.constant 0 : i32
    return %c0_i32, %c0_i32_0 : i32, i32
  }
}

</mosaic_0001>

<llo_original>
// kernel: text_encoder_forward.1
$region0: #{text_encoder_forward.1}
  #allocation0 [shape = 'u32[]', space=smem, size = 0x4, offset = 0x4, fixed_abs, tag = 'smem constant byte address 0x4 - core index']
  #allocation1 [shape = 'u32[144,128]{1,0:T(1,128)}', space=vmem, size = 0x12000, scoped, tag = 'internal scratch']
  #allocation2 [shape = 'f32[16,32]{1,0:T(8,128)}', space=vmem, size = 0x2000, scoped, tag = 'scratch operand']
  %s0 = inlined_call_operand.vmem [shape: f32[16,32], index: 0, kind: input, shape index: {}]
  %s1 = inlined_call_operand.vmem [shape: f32[8,32], index: 1, kind: input, shape index: {}]
  %s2 = inlined_call_operand.vmem [shape: f32[16,16], index: 2, kind: input, shape index: {}]
  %s3 = inlined_call_operand.vmem [shape: f32[2,16], index: 3, kind: input, shape index: {}]
  %s4 = inlined_call_operand.vmem [shape: f32[2,1,32], index: 4, kind: input, shape index: {}]
  %s5 = inlined_call_operand.vmem [shape: f32[2,1,32], index: 5, kind: input, shape index: {}]
  %s6 = inlined_call_operand.vmem [shape: f32[2,32,32], index: 6, kind: input, shape index: {}]
  %s7 = inlined_call_operand.vmem [shape: f32[2,1,32], index: 7, kind: input, shape index: {}]
  %s8 = inlined_call_operand.vmem [shape: f32[2,32,32], index: 8, kind: input, shape index: {}]
  %s9 = inlined_call_operand.vmem [shape: f32[2,1,32], index: 9, kind: input, shape index: {}]
  %s10 = inlined_call_operand.vmem [shape: f32[2,32,32], index: 10, kind: input, shape index: {}]
  %s11 = inlined_call_operand.vmem [shape: f32[2,1,32], index: 11, kind: input, shape index: {}]
  %s12 = inlined_call_operand.vmem [shape: f32[2,32,32], index: 12, kind: input, shape index: {}]
  %s13 = inlined_call_operand.vmem [shape: f32[2,1,32], index: 13, kind: input, shape index: {}]
  %s14 = inlined_call_operand.vmem [shape: f32[2,1,32], index: 14, kind: input, shape index: {}]
  %s15 = inlined_call_operand.vmem [shape: f32[2,1,32], index: 15, kind: input, shape index: {}]
  %s16 = inlined_call_operand.vmem [shape: f32[2,32,128], index: 16, kind: input, shape index: {}]
  %s17 = inlined_call_operand.vmem [shape: f32[2,1,128], index: 17, kind: input, shape index: {}]
  %s18 = inlined_call_operand.vmem [shape: f32[2,128,32], index: 18, kind: input, shape index: {}]
  %s19 = inlined_call_operand.vmem [shape: f32[2,1,32], index: 19, kind: input, shape index: {}]
  %s20 = inlined_call_operand.vmem [shape: f32[1,32], index: 20, kind: input, shape index: {}]
  %s21 = inlined_call_operand.vmem [shape: f32[1,32], index: 21, kind: input, shape index: {}]
  %s22 = inlined_call_operand.vmem [shape: f32[32,16], index: 22, kind: input, shape index: {}]
  %s23 = inlined_call_operand.hbm [shape: f32[2,16], index: 23, kind: output, shape index: {}]
  %s24 = sld [smem:[#allocation0]]
  $region133: #{text_encoder_forward.1} parent=0
    _
  %s26 = ssub.s32 1, %s24
  %s27 = scalar_select 0, %s26, %s24
  $region1: #{text_encoder_forward.1} parent=0
    #allocation3 [shape = 'u8[1024]{0}', space=vmem, size = 0x400, scoped, tag = 'output window, operand 0, single buffered']
    #allocation4 [shape = 's32[2]{0}', space=sflag, size = 0x8, scoped, tag = 'scoped memory for text_encoder_forward.1']
    %28 = vsyncpa [#allocation4], 0
    loop: start=0, step=1, limit=4
    $region2: #{text_encoder_forward.1} parent=1 // loop_pre_header
      _
    $region3: #{text_encoder_forward.1} parent=1 // loop_header
      %s30 = sphi 0, %s34
      %p31 = scmp.ge.s32.totalorder %s30, 4
      %s38 = sphi 0, %s38
      %s40 = sphi 0, %s38
      %s41 = sphi 0, %s40
      %s55 = sphi 0, %s41
      %s59 = sphi 0, %s59
      %s61 = sphi 0, %s59
      %s62 = sphi 0, %s61
      %s76 = sphi 0, %s62
      %s80 = sphi 0, %s80
      %s82 = sphi 0, %s80
      %s83 = sphi 0, %s82
      %s97 = sphi 0, %s83
      %s101 = sphi 0, %s101
      %s103 = sphi 0, %s101
      %s104 = sphi 0, %s103
      %s118 = sphi 0, %s104
      %s124 = sphi 0, %s126
      %s127 = sphi 0, %s124
      %s128 = sphi 0, %s127
      %s144 = sphi 0, %s128
      %s150 = sphi 0, %s152
      %s153 = sphi 0, %s150
      %s154 = sphi 0, %s153
      %s170 = sphi 0, %s154
      %s176 = sphi 0, %s178
      %s179 = sphi 0, %s176
      %s180 = sphi 0, %s179
      %s196 = sphi 0, %s180
      %s202 = sphi 0, %s204
      %s205 = sphi 0, %s202
      %s206 = sphi 0, %s205
      %s222 = sphi 0, %s206
      %s228 = sphi 0, %s230
      %s231 = sphi 0, %s228
      %s232 = sphi 0, %s231
      %s248 = sphi 0, %s232
      %s254 = sphi 0, %s256
      %s257 = sphi 0, %s254
      %s258 = sphi 0, %s257
      %s274 = sphi 0, %s258
      %s280 = sphi 0, %s282
      %s283 = sphi 0, %s280
      %s284 = sphi 0, %s283
      %s300 = sphi 0, %s284
      %s306 = sphi 0, %s308
      %s309 = sphi 0, %s306
      %s310 = sphi 0, %s309
      %s326 = sphi 0, %s310
      %s332 = sphi 0, %s334
      %s335 = sphi 0, %s332
      %s336 = sphi 0, %s335
      %s352 = sphi 0, %s336
      %s358 = sphi 0, %s360
      %s361 = sphi 0, %s358
      %s362 = sphi 0, %s361
      %s378 = sphi 0, %s362
      %s384 = sphi 0, %s386
      %s387 = sphi 0, %s384
      %s388 = sphi 0, %s387
      %s404 = sphi 0, %s388
      %s410 = sphi 0, %s412
      %s413 = sphi 0, %s410
      %s414 = sphi 0, %s413
      %s430 = sphi 0, %s414
      %s436 = sphi 0, %s438
      %s439 = sphi 0, %s436
      %s440 = sphi 0, %s439
      %s456 = sphi 0, %s440
      %s462 = sphi 0, %s464
      %s465 = sphi 0, %s462
      %s466 = sphi 0, %s465
      %s482 = sphi 0, %s466
      %s488 = sphi 0, %s490
      %s491 = sphi 0, %s488
      %s492 = sphi 0, %s491
      %s508 = sphi 0, %s492
      %s514 = sphi 0, %s516
      %s517 = sphi 0, %s514
      %s518 = sphi 0, %s517
      %s534 = sphi 0, %s518
      %s538 = sphi 0, %s538
      %s540 = sphi 0, %s538
      %s541 = sphi 0, %s540
      %s555 = sphi 0, %s541
      %s559 = sphi 0, %s559
      %s561 = sphi 0, %s559
      %s562 = sphi 0, %s561
      %s576 = sphi 0, %s562
      %s580 = sphi 0, %s580
      %s582 = sphi 0, %s580
      %s583 = sphi 0, %s582
      %s597 = sphi 0, %s583
      %s601 = sphi 0, %s601
      %s603 = sphi 0, %s601
      %s604 = sphi 0, %s603
      %s618 = sphi 0, %s604
    $region4: #{text_encoder_forward.1} parent=1 // loop_header_branch
      %33 = sbr.rel (%p31) target = $region8
    $region5: #{text_encoder_forward.1} parent=1 // loop_body
      %s35 = ssub.s32 %s30, 1
      %s36 = ssub.s32 %s30, 2
      %s37 = sadd.s32 %s30, 1
      %s39 = sadd.s32 %s38, 1
      %p42 = scmp.eq.s32.totalorder %s30, 1
      %p43 = scmp.ne.s32.totalorder %s38, %s40
      %p44 = scmp.eq.s32.totalorder %s30, 0
      %p45 = por %p43, %p44
      %p46 = scmp.ne.s32.totalorder %s38, %s40
      %p47 = scmp.eq.s32.totalorder %s35, 1
      %p48 = por %p46, %p47
      %p49 = scmp.ne.s32.totalorder %s40, %s41
      %p50 = scmp.eq.s32.totalorder %s35, 0
      %p51 = por %p49, %p50
      %p52 = scmp.ne.s32.totalorder %s40, %s41
      %p53 = scmp.eq.s32.totalorder %s36, 1
      %p54 = por %p52, %p53
      %p56 = scmp.ne.s32.totalorder %s41, %s55
      %p57 = scmp.eq.s32.totalorder %s36, 0
      %p58 = por %p56, %p57
      %s60 = sadd.s32 %s59, 1
      %p63 = scmp.eq.s32.totalorder %s30, 1
      %p64 = scmp.ne.s32.totalorder %s59, %s61
      %p65 = scmp.eq.s32.totalorder %s30, 0
      %p66 = por %p64, %p65
      %p67 = scmp.ne.s32.totalorder %s59, %s61
      %p68 = scmp.eq.s32.totalorder %s35, 1
      %p69 = por %p67, %p68
      %p70 = scmp.ne.s32.totalorder %s61, %s62
      %p71 = scmp.eq.s32.totalorder %s35, 0
      %p72 = por %p70, %p71
      %p73 = scmp.ne.s32.totalorder %s61, %s62
      %p74 = scmp.eq.s32.totalorder %s36, 1
      %p75 = por %p73, %p74
      %p77 = scmp.ne.s32.totalorder %s62, %s76
      %p78 = scmp.eq.s32.totalorder %s36, 0
      %p79 = por %p77, %p78
      %s81 = sadd.s32 %s80, 1
      %p84 = scmp.eq.s32.totalorder %s30, 1
      %p85 = scmp.ne.s32.totalorder %s80, %s82
      %p86 = scmp.eq.s32.totalorder %s30, 0
      %p87 = por %p85, %p86
      %p88 = scmp.ne.s32.totalorder %s80, %s82
      %p89 = scmp.eq.s32.totalorder %s35, 1
      %p90 = por %p88, %p89
      %p91 = scmp.ne.s32.totalorder %s82, %s83
      %p92 = scmp.eq.s32.totalorder %s35, 0
      %p93 = por %p91, %p92
      %p94 = scmp.ne.s32.totalorder %s82, %s83
      %p95 = scmp.eq.s32.totalorder %s36, 1
      %p96 = por %p94, %p95
      %p98 = scmp.ne.s32.totalorder %s83, %s97
      %p99 = scmp.eq.s32.totalorder %s36, 0
      %p100 = por %p98, %p99
      %s102 = sadd.s32 %s101, 1
      %p105 = scmp.eq.s32.totalorder %s30, 1
      %p106 = scmp.ne.s32.totalorder %s101, %s103
      %p107 = scmp.eq.s32.totalorder %s30, 0
      %p108 = por %p106, %p107
      %p109 = scmp.ne.s32.totalorder %s101, %s103
      %p110 = scmp.eq.s32.totalorder %s35, 1
      %p111 = por %p109, %p110
      %p112 = scmp.ne.s32.totalorder %s103, %s104
      %p113 = scmp.eq.s32.totalorder %s35, 0
      %p114 = por %p112, %p113
      %p115 = scmp.ne.s32.totalorder %s103, %s104
      %p116 = scmp.eq.s32.totalorder %s36, 1
      %p117 = por %p115, %p116
      %p119 = scmp.ne.s32.totalorder %s104, %s118
      %p120 = scmp.eq.s32.totalorder %s36, 0
      %p121 = por %p119, %p120
      %s122 = ssub.s32 %s30, %s37
      %p123 = scmp.eq.s32.totalorder %s122, 0
      %s125 = sadd.s32 %s124, 1
      %s126 = scalar_select %p123, %s124, %s125
      %p129 = pneg %p123
      %p130 = scmp.eq.s32.totalorder %s30, 1
      %p131 = por %p129, %p130
      %p132 = scmp.ne.s32.totalorder %s124, %s127
      %p133 = scmp.eq.s32.totalorder %s30, 0
      %p134 = por %p132, %p133
      %p135 = scmp.ne.s32.totalorder %s124, %s127
      %p136 = scmp.eq.s32.totalorder %s35, 1
      %p137 = por %p135, %p136
      %p138 = scmp.ne.s32.totalorder %s127, %s128
      %p139 = scmp.eq.s32.totalorder %s35, 0
      %p140 = por %p138, %p139
      %p141 = scmp.ne.s32.totalorder %s127, %s128
      %p142 = scmp.eq.s32.totalorder %s36, 1
      %p143 = por %p141, %p142
      %p145 = scmp.ne.s32.totalorder %s128, %s144
      %p146 = scmp.eq.s32.totalorder %s36, 0
      %p147 = por %p145, %p146
      %s148 = ssub.s32 %s30, %s37
      %p149 = scmp.eq.s32.totalorder %s148, 0
      %s151 = sadd.s32 %s150, 1
      %s152 = scalar_select %p149, %s150, %s151
      %p155 = pneg %p149
      %p156 = scmp.eq.s32.totalorder %s30, 1
      %p157 = por %p155, %p156
      %p158 = scmp.ne.s32.totalorder %s150, %s153
      %p159 = scmp.eq.s32.totalorder %s30, 0
      %p160 = por %p158, %p159
      %p161 = scmp.ne.s32.totalorder %s150, %s153
      %p162 = scmp.eq.s32.totalorder %s35, 1
      %p163 = por %p161, %p162
      %p164 = scmp.ne.s32.totalorder %s153, %s154
      %p165 = scmp.eq.s32.totalorder %s35, 0
      %p166 = por %p164, %p165
      %p167 = scmp.ne.s32.totalorder %s153, %s154
      %p168 = scmp.eq.s32.totalorder %s36, 1
      %p169 = por %p167, %p168
      %p171 = scmp.ne.s32.totalorder %s154, %s170
      %p172 = scmp.eq.s32.totalorder %s36, 0
      %p173 = por %p171, %p172
      %s174 = ssub.s32 %s30, %s37
      %p175 = scmp.eq.s32.totalorder %s174, 0
      %s177 = sadd.s32 %s176, 1
      %s178 = scalar_select %p175, %s176, %s177
      %p181 = pneg %p175
      %p182 = scmp.eq.s32.totalorder %s30, 1
      %p183 = por %p181, %p182
      %p184 = scmp.ne.s32.totalorder %s176, %s179
      %p185 = scmp.eq.s32.totalorder %s30, 0
      %p186 = por %p184, %p185
      %p187 = scmp.ne.s32.totalorder %s176, %s179
      %p188 = scmp.eq.s32.totalorder %s35, 1
      %p189 = por %p187, %p188
      %p190 = scmp.ne.s32.totalorder %s179, %s180
      %p191 = scmp.eq.s32.totalorder %s35, 0
      %p192 = por %p190, %p191
      %p193 = scmp.ne.s32.totalorder %s179, %s180
      %p194 = scmp.eq.s32.totalorder %s36, 1
      %p195 = por %p193, %p194
      %p197 = scmp.ne.s32.totalorder %s180, %s196
      %p198 = scmp.eq.s32.totalorder %s36, 0
      %p199 = por %p197, %p198
      %s200 = ssub.s32 %s30, %s37
      %p201 = scmp.eq.s32.totalorder %s200, 0
      %s203 = sadd.s32 %s202, 1
      %s204 = scalar_select %p201, %s202, %s203
      %p207 = pneg %p201
      %p208 = scmp.eq.s32.totalorder %s30, 1
      %p209 = por %p207, %p208
      %p210 = scmp.ne.s32.totalorder %s202, %s205
      %p211 = scmp.eq.s32.totalorder %s30, 0
      %p212 = por %p210, %p211
      %p213 = scmp.ne.s32.totalorder %s202, %s205
      %p214 = scmp.eq.s32.totalorder %s35, 1
      %p215 = por %p213, %p214
      %p216 = scmp.ne.s32.totalorder %s205, %s206
      %p217 = scmp.eq.s32.totalorder %s35, 0
      %p218 = por %p216, %p217
      %p219 = scmp.ne.s32.totalorder %s205, %s206
      %p220 = scmp.eq.s32.totalorder %s36, 1
      %p221 = por %p219, %p220
      %p223 = scmp.ne.s32.totalorder %s206, %s222
      %p224 = scmp.eq.s32.totalorder %s36, 0
      %p225 = por %p223, %p224
      %s226 = ssub.s32 %s30, %s37
      %p227 = scmp.eq.s32.totalorder %s226, 0
      %s229 = sadd.s32 %s228, 1
      %s230 = scalar_select %p227, %s228, %s229
      %p233 = pneg %p227
      %p234 = scmp.eq.s32.totalorder %s30, 1
      %p235 = por %p233, %p234
      %p236 = scmp.ne.s32.totalorder %s228, %s231
      %p237 = scmp.eq.s32.totalorder %s30, 0
      %p238 = por %p236, %p237
      %p239 = scmp.ne.s32.totalorder %s228, %s231
      %p240 = scmp.eq.s32.totalorder %s35, 1
      %p241 = por %p239, %p240
      %p242 = scmp.ne.s32.totalorder %s231, %s232
      %p243 = scmp.eq.s32.totalorder %s35, 0
      %p244 = por %p242, %p243
      %p245 = scmp.ne.s32.totalorder %s231, %s232
      %p246 = scmp.eq.s32.totalorder %s36, 1
      %p247 = por %p245, %p246
      %p249 = scmp.ne.s32.totalorder %s232, %s248
      %p250 = scmp.eq.s32.totalorder %s36, 0
      %p251 = por %p249, %p250
      %s252 = ssub.s32 %s30, %s37
      %p253 = scmp.eq.s32.totalorder %s252, 0
      %s255 = sadd.s32 %s254, 1
      %s256 = scalar_select %p253, %s254, %s255
      %p259 = pneg %p253
      %p260 = scmp.eq.s32.totalorder %s30, 1
      %p261 = por %p259, %p260
      %p262 = scmp.ne.s32.totalorder %s254, %s257
      %p263 = scmp.eq.s32.totalorder %s30, 0
      %p264 = por %p262, %p263
      %p265 = scmp.ne.s32.totalorder %s254, %s257
      %p266 = scmp.eq.s32.totalorder %s35, 1
      %p267 = por %p265, %p266
      %p268 = scmp.ne.s32.totalorder %s257, %s258
      %p269 = scmp.eq.s32.totalorder %s35, 0
      %p270 = por %p268, %p269
      %p271 = scmp.ne.s32.totalorder %s257, %s258
      %p272 = scmp.eq.s32.totalorder %s36, 1
      %p273 = por %p271, %p272
      %p275 = scmp.ne.s32.totalorder %s258, %s274
      %p276 = scmp.eq.s32.totalorder %s36, 0
      %p277 = por %p275, %p276
      %s278 = ssub.s32 %s30, %s37
      %p279 = scmp.eq.s32.totalorder %s278, 0
      %s281 = sadd.s32 %s280, 1
      %s282 = scalar_select %p279, %s280, %s281
      %p285 = pneg %p279
      %p286 = scmp.eq.s32.totalorder %s30, 1
      %p287 = por %p285, %p286
      %p288 = scmp.ne.s32.totalorder %s280, %s283
      %p289 = scmp.eq.s32.totalorder %s30, 0
      %p290 = por %p288, %p289
      %p291 = scmp.ne.s32.totalorder %s280, %s283
      %p292 = scmp.eq.s32.totalorder %s35, 1
      %p293 = por %p291, %p292
      %p294 = scmp.ne.s32.totalorder %s283, %s284
      %p295 = scmp.eq.s32.totalorder %s35, 0
      %p296 = por %p294, %p295
      %p297 = scmp.ne.s32.totalorder %s283, %s284
      %p298 = scmp.eq.s32.totalorder %s36, 1
      %p299 = por %p297, %p298
      %p301 = scmp.ne.s32.totalorder %s284, %s300
      %p302 = scmp.eq.s32.totalorder %s36, 0
      %p303 = por %p301, %p302
      %s304 = ssub.s32 %s30, %s37
      %p305 = scmp.eq.s32.totalorder %s304, 0
      %s307 = sadd.s32 %s306, 1
      %s308 = scalar_select %p305, %s306, %s307
      %p311 = pneg %p305
      %p312 = scmp.eq.s32.totalorder %s30, 1
      %p313 = por %p311, %p312
      %p314 = scmp.ne.s32.totalorder %s306, %s309
      %p315 = scmp.eq.s32.totalorder %s30, 0
      %p316 = por %p314, %p315
      %p317 = scmp.ne.s32.totalorder %s306, %s309
      %p318 = scmp.eq.s32.totalorder %s35, 1
      %p319 = por %p317, %p318
      %p320 = scmp.ne.s32.totalorder %s309, %s310
      %p321 = scmp.eq.s32.totalorder %s35, 0
      %p322 = por %p320, %p321
      %p323 = scmp.ne.s32.totalorder %s309, %s310
      %p324 = scmp.eq.s32.totalorder %s36, 1
      %p325 = por %p323, %p324
      %p327 = scmp.ne.s32.totalorder %s310, %s326
      %p328 = scmp.eq.s32.totalorder %s36, 0
      %p329 = por %p327, %p328
      %s330 = ssub.s32 %s30, %s37
      %p331 = scmp.eq.s32.totalorder %s330, 0
      %s333 = sadd.s32 %s332, 1
      %s334 = scalar_select %p331, %s332, %s333
      %p337 = pneg %p331
      %p338 = scmp.eq.s32.totalorder %s30, 1
      %p339 = por %p337, %p338
      %p340 = scmp.ne.s32.totalorder %s332, %s335
      %p341 = scmp.eq.s32.totalorder %s30, 0
      %p342 = por %p340, %p341
      %p343 = scmp.ne.s32.totalorder %s332, %s335
      %p344 = scmp.eq.s32.totalorder %s35, 1
      %p345 = por %p343, %p344
      %p346 = scmp.ne.s32.totalorder %s335, %s336
      %p347 = scmp.eq.s32.totalorder %s35, 0
      %p348 = por %p346, %p347
      %p349 = scmp.ne.s32.totalorder %s335, %s336
      %p350 = scmp.eq.s32.totalorder %s36, 1
      %p351 = por %p349, %p350
      %p353 = scmp.ne.s32.totalorder %s336, %s352
      %p354 = scmp.eq.s32.totalorder %s36, 0
      %p355 = por %p353, %p354
      %s356 = ssub.s32 %s30, %s37
      %p357 = scmp.eq.s32.totalorder %s356, 0
      %s359 = sadd.s32 %s358, 1
      %s360 = scalar_select %p357, %s358, %s359
      %p363 = pneg %p357
      %p364 = scmp.eq.s32.totalorder %s30, 1
      %p365 = por %p363, %p364
      %p366 = scmp.ne.s32.totalorder %s358, %s361
      %p367 = scmp.eq.s32.totalorder %s30, 0
      %p368 = por %p366, %p367
      %p369 = scmp.ne.s32.totalorder %s358, %s361
      %p370 = scmp.eq.s32.totalorder %s35, 1
      %p371 = por %p369, %p370
      %p372 = scmp.ne.s32.totalorder %s361, %s362
      %p373 = scmp.eq.s32.totalorder %s35, 0
      %p374 = por %p372, %p373
      %p375 = scmp.ne.s32.totalorder %s361, %s362
      %p376 = scmp.eq.s32.totalorder %s36, 1
      %p377 = por %p375, %p376
      %p379 = scmp.ne.s32.totalorder %s362, %s378
      %p380 = scmp.eq.s32.totalorder %s36, 0
      %p381 = por %p379, %p380
      %s382 = ssub.s32 %s30, %s37
      %p383 = scmp.eq.s32.totalorder %s382, 0
      %s385 = sadd.s32 %s384, 1
      %s386 = scalar_select %p383, %s384, %s385
      %p389 = pneg %p383
      %p390 = scmp.eq.s32.totalorder %s30, 1
      %p391 = por %p389, %p390
      %p392 = scmp.ne.s32.totalorder %s384, %s387
      %p393 = scmp.eq.s32.totalorder %s30, 0
      %p394 = por %p392, %p393
      %p395 = scmp.ne.s32.totalorder %s384, %s387
      %p396 = scmp.eq.s32.totalorder %s35, 1
      %p397 = por %p395, %p396
      %p398 = scmp.ne.s32.totalorder %s387, %s388
      %p399 = scmp.eq.s32.totalorder %s35, 0
      %p400 = por %p398, %p399
      %p401 = scmp.ne.s32.totalorder %s387, %s388
      %p402 = scmp.eq.s32.totalorder %s36, 1
      %p403 = por %p401, %p402
      %p405 = scmp.ne.s32.totalorder %s388, %s404
      %p406 = scmp.eq.s32.totalorder %s36, 0
      %p407 = por %p405, %p406
      %s408 = ssub.s32 %s30, %s37
      %p409 = scmp.eq.s32.totalorder %s408, 0
      %s411 = sadd.s32 %s410, 1
      %s412 = scalar_select %p409, %s410, %s411
      %p415 = pneg %p409
      %p416 = scmp.eq.s32.totalorder %s30, 1
      %p417 = por %p415, %p416
      %p418 = scmp.ne.s32.totalorder %s410, %s413
      %p419 = scmp.eq.s32.totalorder %s30, 0
      %p420 = por %p418, %p419
      %p421 = scmp.ne.s32.totalorder %s410, %s413
      %p422 = scmp.eq.s32.totalorder %s35, 1
      %p423 = por %p421, %p422
      %p424 = scmp.ne.s32.totalorder %s413, %s414
      %p425 = scmp.eq.s32.totalorder %s35, 0
      %p426 = por %p424, %p425
      %p427 = scmp.ne.s32.totalorder %s413, %s414
      %p428 = scmp.eq.s32.totalorder %s36, 1
      %p429 = por %p427, %p428
      %p431 = scmp.ne.s32.totalorder %s414, %s430
      %p432 = scmp.eq.s32.totalorder %s36, 0
      %p433 = por %p431, %p432
      %s434 = ssub.s32 %s30, %s37
      %p435 = scmp.eq.s32.totalorder %s434, 0
      %s437 = sadd.s32 %s436, 1
      %s438 = scalar_select %p435, %s436, %s437
      %p441 = pneg %p435
      %p442 = scmp.eq.s32.totalorder %s30, 1
      %p443 = por %p441, %p442
      %p444 = scmp.ne.s32.totalorder %s436, %s439
      %p445 = scmp.eq.s32.totalorder %s30, 0
      %p446 = por %p444, %p445
      %p447 = scmp.ne.s32.totalorder %s436, %s439
      %p448 = scmp.eq.s32.totalorder %s35, 1
      %p449 = por %p447, %p448
      %p450 = scmp.ne.s32.totalorder %s439, %s440
      %p451 = scmp.eq.s32.totalorder %s35, 0
      %p452 = por %p450, %p451
      %p453 = scmp.ne.s32.totalorder %s439, %s440
      %p454 = scmp.eq.s32.totalorder %s36, 1
      %p455 = por %p453, %p454
      %p457 = scmp.ne.s32.totalorder %s440, %s456
      %p458 = scmp.eq.s32.totalorder %s36, 0
      %p459 = por %p457, %p458
      %s460 = ssub.s32 %s30, %s37
      %p461 = scmp.eq.s32.totalorder %s460, 0
      %s463 = sadd.s32 %s462, 1
      %s464 = scalar_select %p461, %s462, %s463
      %p467 = pneg %p461
      %p468 = scmp.eq.s32.totalorder %s30, 1
      %p469 = por %p467, %p468
      %p470 = scmp.ne.s32.totalorder %s462, %s465
      %p471 = scmp.eq.s32.totalorder %s30, 0
      %p472 = por %p470, %p471
      %p473 = scmp.ne.s32.totalorder %s462, %s465
      %p474 = scmp.eq.s32.totalorder %s35, 1
      %p475 = por %p473, %p474
      %p476 = scmp.ne.s32.totalorder %s465, %s466
      %p477 = scmp.eq.s32.totalorder %s35, 0
      %p478 = por %p476, %p477
      %p479 = scmp.ne.s32.totalorder %s465, %s466
      %p480 = scmp.eq.s32.totalorder %s36, 1
      %p481 = por %p479, %p480
      %p483 = scmp.ne.s32.totalorder %s466, %s482
      %p484 = scmp.eq.s32.totalorder %s36, 0
      %p485 = por %p483, %p484
      %s486 = ssub.s32 %s30, %s37
      %p487 = scmp.eq.s32.totalorder %s486, 0
      %s489 = sadd.s32 %s488, 1
      %s490 = scalar_select %p487, %s488, %s489
      %p493 = pneg %p487
      %p494 = scmp.eq.s32.totalorder %s30, 1
      %p495 = por %p493, %p494
      %p496 = scmp.ne.s32.totalorder %s488, %s491
      %p497 = scmp.eq.s32.totalorder %s30, 0
      %p498 = por %p496, %p497
      %p499 = scmp.ne.s32.totalorder %s488, %s491
      %p500 = scmp.eq.s32.totalorder %s35, 1
      %p501 = por %p499, %p500
      %p502 = scmp.ne.s32.totalorder %s491, %s492
      %p503 = scmp.eq.s32.totalorder %s35, 0
      %p504 = por %p502, %p503
      %p505 = scmp.ne.s32.totalorder %s491, %s492
      %p506 = scmp.eq.s32.totalorder %s36, 1
      %p507 = por %p505, %p506
      %p509 = scmp.ne.s32.totalorder %s492, %s508
      %p510 = scmp.eq.s32.totalorder %s36, 0
      %p511 = por %p509, %p510
      %s512 = ssub.s32 %s30, %s37
      %p513 = scmp.eq.s32.totalorder %s512, 0
      %s515 = sadd.s32 %s514, 1
      %s516 = scalar_select %p513, %s514, %s515
      %p519 = pneg %p513
      %p520 = scmp.eq.s32.totalorder %s30, 1
      %p521 = por %p519, %p520
      %p522 = scmp.ne.s32.totalorder %s514, %s517
      %p523 = scmp.eq.s32.totalorder %s30, 0
      %p524 = por %p522, %p523
      %p525 = scmp.ne.s32.totalorder %s514, %s517
      %p526 = scmp.eq.s32.totalorder %s35, 1
      %p527 = por %p525, %p526
      %p528 = scmp.ne.s32.totalorder %s517, %s518
      %p529 = scmp.eq.s32.totalorder %s35, 0
      %p530 = por %p528, %p529
      %p531 = scmp.ne.s32.totalorder %s517, %s518
      %p532 = scmp.eq.s32.totalorder %s36, 1
      %p533 = por %p531, %p532
      %p535 = scmp.ne.s32.totalorder %s518, %s534
      %p536 = scmp.eq.s32.totalorder %s36, 0
      %p537 = por %p535, %p536
      %s539 = sadd.s32 %s538, 1
      %p542 = scmp.eq.s32.totalorder %s30, 1
      %p543 = scmp.ne.s32.totalorder %s538, %s540
      %p544 = scmp.eq.s32.totalorder %s30, 0
      %p545 = por %p543, %p544
      %p546 = scmp.ne.s32.totalorder %s538, %s540
      %p547 = scmp.eq.s32.totalorder %s35, 1
      %p548 = por %p546, %p547
      %p549 = scmp.ne.s32.totalorder %s540, %s541
      %p550 = scmp.eq.s32.totalorder %s35, 0
      %p551 = por %p549, %p550
      %p552 = scmp.ne.s32.totalorder %s540, %s541
      %p553 = scmp.eq.s32.totalorder %s36, 1
      %p554 = por %p552, %p553
      %p556 = scmp.ne.s32.totalorder %s541, %s555
      %p557 = scmp.eq.s32.totalorder %s36, 0
      %p558 = por %p556, %p557
      %s560 = sadd.s32 %s559, 1
      %p563 = scmp.eq.s32.totalorder %s30, 1
      %p564 = scmp.ne.s32.totalorder %s559, %s561
      %p565 = scmp.eq.s32.totalorder %s30, 0
      %p566 = por %p564, %p565
      %p567 = scmp.ne.s32.totalorder %s559, %s561
      %p568 = scmp.eq.s32.totalorder %s35, 1
      %p569 = por %p567, %p568
      %p570 = scmp.ne.s32.totalorder %s561, %s562
      %p571 = scmp.eq.s32.totalorder %s35, 0
      %p572 = por %p570, %p571
      %p573 = scmp.ne.s32.totalorder %s561, %s562
      %p574 = scmp.eq.s32.totalorder %s36, 1
      %p575 = por %p573, %p574
      %p577 = scmp.ne.s32.totalorder %s562, %s576
      %p578 = scmp.eq.s32.totalorder %s36, 0
      %p579 = por %p577, %p578
      %s581 = sadd.s32 %s580, 1
      %p584 = scmp.eq.s32.totalorder %s30, 1
      %p585 = scmp.ne.s32.totalorder %s580, %s582
      %p586 = scmp.eq.s32.totalorder %s30, 0
      %p587 = por %p585, %p586
      %p588 = scmp.ne.s32.totalorder %s580, %s582
      %p589 = scmp.eq.s32.totalorder %s35, 1
      %p590 = por %p588, %p589
      %p591 = scmp.ne.s32.totalorder %s582, %s583
      %p592 = scmp.eq.s32.totalorder %s35, 0
      %p593 = por %p591, %p592
      %p594 = scmp.ne.s32.totalorder %s582, %s583
      %p595 = scmp.eq.s32.totalorder %s36, 1
      %p596 = por %p594, %p595
      %p598 = scmp.ne.s32.totalorder %s583, %s597
      %p599 = scmp.eq.s32.totalorder %s36, 0
      %p600 = por %p598, %p599
      %s602 = sadd.s32 %s601, 1
      %p605 = scmp.eq.s32.totalorder %s30, 1
      %p606 = scmp.ne.s32.totalorder %s601, %s603
      %p607 = scmp.eq.s32.totalorder %s30, 0
      %p608 = por %p606, %p607
      %p609 = scmp.ne.s32.totalorder %s601, %s603
      %p610 = scmp.eq.s32.totalorder %s35, 1
      %p611 = por %p609, %p610
      %p612 = scmp.ne.s32.totalorder %s603, %s604
      %p613 = scmp.eq.s32.totalorder %s35, 0
      %p614 = por %p612, %p613
      %p615 = scmp.ne.s32.totalorder %s603, %s604
      %p616 = scmp.eq.s32.totalorder %s36, 1
      %p617 = por %p615, %p616
      %p619 = scmp.ne.s32.totalorder %s604, %s618
      %p620 = scmp.eq.s32.totalorder %s36, 0
      %p621 = por %p619, %p620
      %p622 = scmp.le.s32.totalorder 1, %s30
      %p623 = scmp.lt.s32.totalorder %s30, 3
      %p624 = pnand %p622, %p623
      %p625 = pneg %p624
      // Predicated region
      $region9: #{text_encoder_forward.1} parent=5 // pred_check
        _
      $region10: #{text_encoder_forward.1} parent=5 // pred_check_branch
        %627 = sbr.rel (%p624) target = $region12
      $region11: #{text_encoder_forward.1} parent=5 // pred_region
        %s628 = ssub.s32 %s30, 1
        // Predicated region
        $region13: #{text_encoder_forward.1} parent=11 // pred_check
          %p629 = pneg %p51
        $region14: #{text_encoder_forward.1} parent=11 // pred_check_branch
          %631 = sbr.rel (%p629) target = $region16
        $region15: #{text_encoder_forward.1} parent=11 // pred_region
          _
        $region16: #{text_encoder_forward.1} parent=11 // pred_fallthru
          _
        // Predicated region
        $region17: #{text_encoder_forward.1} parent=11 // pred_check
          %p632 = pneg %p72
        $region18: #{text_encoder_forward.1} parent=11 // pred_check_branch
          %634 = sbr.rel (%p632) target = $region20
        $region19: #{text_encoder_forward.1} parent=11 // pred_region
          _
        $region20: #{text_encoder_forward.1} parent=11 // pred_fallthru
          _
        // Predicated region
        $region21: #{text_encoder_forward.1} parent=11 // pred_check
          %p635 = pneg %p93
        $region22: #{text_encoder_forward.1} parent=11 // pred_check_branch
          %637 = sbr.rel (%p635) target = $region24
        $region23: #{text_encoder_forward.1} parent=11 // pred_region
          _
        $region24: #{text_encoder_forward.1} parent=11 // pred_fallthru
          _
        // Predicated region
        $region25: #{text_encoder_forward.1} parent=11 // pred_check
          %p638 = pneg %p114
        $region26: #{text_encoder_forward.1} parent=11 // pred_check_branch
          %640 = sbr.rel (%p638) target = $region28
        $region27: #{text_encoder_forward.1} parent=11 // pred_region
          _
        $region28: #{text_encoder_forward.1} parent=11 // pred_fallthru
          _
        // Predicated region
        $region29: #{text_encoder_forward.1} parent=11 // pred_check
          %p641 = pneg %p551
        $region30: #{text_encoder_forward.1} parent=11 // pred_check_branch
          %643 = sbr.rel (%p641) target = $region32
        $region31: #{text_encoder_forward.1} parent=11 // pred_region
          _
        $region32: #{text_encoder_forward.1} parent=11 // pred_fallthru
          _
        // Predicated region
        $region33: #{text_encoder_forward.1} parent=11 // pred_check
          %p644 = pneg %p572
        $region34: #{text_encoder_forward.1} parent=11 // pred_check_branch
          %646 = sbr.rel (%p644) target = $region36
        $region35: #{text_encoder_forward.1} parent=11 // pred_region
          _
        $region36: #{text_encoder_forward.1} parent=11 // pred_fallthru
          _
        // Predicated region
        $region37: #{text_encoder_forward.1} parent=11 // pred_check
          %p647 = pneg %p593
        $region38: #{text_encoder_forward.1} parent=11 // pred_check_branch
          %649 = sbr.rel (%p647) target = $region40
        $region39: #{text_encoder_forward.1} parent=11 // pred_region
          _
        $region40: #{text_encoder_forward.1} parent=11 // pred_fallthru
          _
      $region12: #{text_encoder_forward.1} parent=5 // pred_fallthru
        _
      %p650 = scmp.lt.s32.totalorder %s30, 2
      // Predicated region
      $region41: #{text_encoder_forward.1} parent=5 // pred_check
        %p651 = pneg %p650
      $region42: #{text_encoder_forward.1} parent=5 // pred_check_branch
        %653 = sbr.rel (%p651) target = $region44
      $region43: #{text_encoder_forward.1} parent=5 // pred_region
        // Predicated region
        $region45: #{text_encoder_forward.1} parent=43 // pred_check
          %p654 = pneg %p134
        $region46: #{text_encoder_forward.1} parent=43 // pred_check_branch
          %656 = sbr.rel (%p654) target = $region48
        $region47: #{text_encoder_forward.1} parent=43 // pred_region
          %p657 = scmp.lt.s32.totalorder %s30, 1
          %s658 = scalar_select %p657, %s30, 1
          %s659 = scalar_lea.vmem %s4, %s658
        $region48: #{text_encoder_forward.1} parent=43 // pred_fallthru
          _
        // Predicated region
        $region49: #{text_encoder_forward.1} parent=43 // pred_check
          %p660 = pneg %p160
        $region50: #{text_encoder_forward.1} parent=43 // pred_check_branch
          %662 = sbr.rel (%p660) target = $region52
        $region51: #{text_encoder_forward.1} parent=43 // pred_region
          %p663 = scmp.lt.s32.totalorder %s30, 1
          %s664 = scalar_select %p663, %s30, 1
          %s665 = scalar_lea.vmem %s5, %s664
        $region52: #{text_encoder_forward.1} parent=43 // pred_fallthru
          _
        // Predicated region
        $region53: #{text_encoder_forward.1} parent=43 // pred_check
          %p666 = pneg %p186
        $region54: #{text_encoder_forward.1} parent=43 // pred_check_branch
          %668 = sbr.rel (%p666) target = $region56
        $region55: #{text_encoder_forward.1} parent=43 // pred_region
          %p669 = scmp.lt.s32.totalorder %s30, 1
          %s670 = scalar_select %p669, %s30, 1
          %s671 = smul.addr %s670, 4
          %s672 = smul.addr %s671, 8
          %s673 = scalar_lea.vmem %s6, %s672
        $region56: #{text_encoder_forward.1} parent=43 // pred_fallthru
          _
        // Predicated region
        $region57: #{text_encoder_forward.1} parent=43 // pred_check
          %p674 = pneg %p212
        $region58: #{text_encoder_forward.1} parent=43 // pred_check_branch
          %676 = sbr.rel (%p674) target = $region60
        $region59: #{text_encoder_forward.1} parent=43 // pred_region
          %p677 = scmp.lt.s32.totalorder %s30, 1
          %s678 = scalar_select %p677, %s30, 1
          %s679 = scalar_lea.vmem %s7, %s678
        $region60: #{text_encoder_forward.1} parent=43 // pred_fallthru
          _
        // Predicated region
        $region61: #{text_encoder_forward.1} parent=43 // pred_check
          %p680 = pneg %p238
        $region62: #{text_encoder_forward.1} parent=43 // pred_check_branch
          %682 = sbr.rel (%p680) target = $region64
        $region63: #{text_encoder_forward.1} parent=43 // pred_region
          %p683 = scmp.lt.s32.totalorder %s30, 1
          %s684 = scalar_select %p683, %s30, 1
          %s685 = smul.addr %s684, 4
          %s686 = smul.addr %s685, 8
          %s687 = scalar_lea.vmem %s8, %s686
        $region64: #{text_encoder_forward.1} parent=43 // pred_fallthru
          _
        // Predicated region
        $region65: #{text_encoder_forward.1} parent=43 // pred_check
          %p688 = pneg %p264
        $region66: #{text_encoder_forward.1} parent=43 // pred_check_branch
          %690 = sbr.rel (%p688) target = $region68
        $region67: #{text_encoder_forward.1} parent=43 // pred_region
          %p691 = scmp.lt.s32.totalorder %s30, 1
          %s692 = scalar_select %p691, %s30, 1
          %s693 = scalar_lea.vmem %s9, %s692
        $region68: #{text_encoder_forward.1} parent=43 // pred_fallthru
          _
        // Predicated region
        $region69: #{text_encoder_forward.1} parent=43 // pred_check
          %p694 = pneg %p290
        $region70: #{text_encoder_forward.1} parent=43 // pred_check_branch
          %696 = sbr.rel (%p694) target = $region72
        $region71: #{text_encoder_forward.1} parent=43 // pred_region
          %p697 = scmp.lt.s32.totalorder %s30, 1
          %s698 = scalar_select %p697, %s30, 1
          %s699 = smul.addr %s698, 4
          %s700 = smul.addr %s699, 8
          %s701 = scalar_lea.vmem %s10, %s700
        $region72: #{text_encoder_forward.1} parent=43 // pred_fallthru
          _
        // Predicated region
        $region73: #{text_encoder_forward.1} parent=43 // pred_check
          %p702 = pneg %p316
        $region74: #{text_encoder_forward.1} parent=43 // pred_check_branch
          %704 = sbr.rel (%p702) target = $region76
        $region75: #{text_encoder_forward.1} parent=43 // pred_region
          %p705 = scmp.lt.s32.totalorder %s30, 1
          %s706 = scalar_select %p705, %s30, 1
          %s707 = scalar_lea.vmem %s11, %s706
        $region76: #{text_encoder_forward.1} parent=43 // pred_fallthru
          _
        // Predicated region
        $region77: #{text_encoder_forward.1} parent=43 // pred_check
          %p708 = pneg %p342
        $region78: #{text_encoder_forward.1} parent=43 // pred_check_branch
          %710 = sbr.rel (%p708) target = $region80
        $region79: #{text_encoder_forward.1} parent=43 // pred_region
          %p711 = scmp.lt.s32.totalorder %s30, 1
          %s712 = scalar_select %p711, %s30, 1
          %s713 = smul.addr %s712, 4
          %s714 = smul.addr %s713, 8
          %s715 = scalar_lea.vmem %s12, %s714
        $region80: #{text_encoder_forward.1} parent=43 // pred_fallthru
          _
        // Predicated region
        $region81: #{text_encoder_forward.1} parent=43 // pred_check
          %p716 = pneg %p368
        $region82: #{text_encoder_forward.1} parent=43 // pred_check_branch
          %718 = sbr.rel (%p716) target = $region84
        $region83: #{text_encoder_forward.1} parent=43 // pred_region
          %p719 = scmp.lt.s32.totalorder %s30, 1
          %s720 = scalar_select %p719, %s30, 1
          %s721 = scalar_lea.vmem %s13, %s720
        $region84: #{text_encoder_forward.1} parent=43 // pred_fallthru
          _
        // Predicated region
        $region85: #{text_encoder_forward.1} parent=43 // pred_check
          %p722 = pneg %p394
        $region86: #{text_encoder_forward.1} parent=43 // pred_check_branch
          %724 = sbr.rel (%p722) target = $region88
        $region87: #{text_encoder_forward.1} parent=43 // pred_region
          %p725 = scmp.lt.s32.totalorder %s30, 1
          %s726 = scalar_select %p725, %s30, 1
          %s727 = scalar_lea.vmem %s14, %s726
        $region88: #{text_encoder_forward.1} parent=43 // pred_fallthru
          _
        // Predicated region
        $region89: #{text_encoder_forward.1} parent=43 // pred_check
          %p728 = pneg %p420
        $region90: #{text_encoder_forward.1} parent=43 // pred_check_branch
          %730 = sbr.rel (%p728) target = $region92
        $region91: #{text_encoder_forward.1} parent=43 // pred_region
          %p731 = scmp.lt.s32.totalorder %s30, 1
          %s732 = scalar_select %p731, %s30, 1
          %s733 = scalar_lea.vmem %s15, %s732
        $region92: #{text_encoder_forward.1} parent=43 // pred_fallthru
          _
        // Predicated region
        $region93: #{text_encoder_forward.1} parent=43 // pred_check
          %p734 = pneg %p446
        $region94: #{text_encoder_forward.1} parent=43 // pred_check_branch
          %736 = sbr.rel (%p734) target = $region96
        $region95: #{text_encoder_forward.1} parent=43 // pred_region
          %p737 = scmp.lt.s32.totalorder %s30, 1
          %s738 = scalar_select %p737, %s30, 1
          %s739 = smul.addr %s738, 4
          %s740 = smul.addr %s739, 8
          %s741 = scalar_lea.vmem %s16, %s740
        $region96: #{text_encoder_forward.1} parent=43 // pred_fallthru
          _
        // Predicated region
        $region97: #{text_encoder_forward.1} parent=43 // pred_check
          %p742 = pneg %p472
        $region98: #{text_encoder_forward.1} parent=43 // pred_check_branch
          %744 = sbr.rel (%p742) target = $region100
        $region99: #{text_encoder_forward.1} parent=43 // pred_region
          %p745 = scmp.lt.s32.totalorder %s30, 1
          %s746 = scalar_select %p745, %s30, 1
          %s747 = scalar_lea.vmem %s17, %s746
        $region100: #{text_encoder_forward.1} parent=43 // pred_fallthru
          _
        // Predicated region
        $region101: #{text_encoder_forward.1} parent=43 // pred_check
          %p748 = pneg %p498
        $region102: #{text_encoder_forward.1} parent=43 // pred_check_branch
          %750 = sbr.rel (%p748) target = $region104
        $region103: #{text_encoder_forward.1} parent=43 // pred_region
          %p751 = scmp.lt.s32.totalorder %s30, 1
          %s752 = scalar_select %p751, %s30, 1
          %s753 = smul.addr %s752, 16
          %s754 = smul.addr %s753, 8
          %s755 = scalar_lea.vmem %s18, %s754
        $region104: #{text_encoder_forward.1} parent=43 // pred_fallthru
          _
        // Predicated region
        $region105: #{text_encoder_forward.1} parent=43 // pred_check
          %p756 = pneg %p524
        $region106: #{text_encoder_forward.1} parent=43 // pred_check_branch
          %758 = sbr.rel (%p756) target = $region108
        $region107: #{text_encoder_forward.1} parent=43 // pred_region
          %p759 = scmp.lt.s32.totalorder %s30, 1
          %s760 = scalar_select %p759, %s30, 1
          %s761 = scalar_lea.vmem %s19, %s760
        $region108: #{text_encoder_forward.1} parent=43 // pred_fallthru
          _
      $region44: #{text_encoder_forward.1} parent=5 // pred_fallthru
        _
      %p762 = scmp.le.s32.totalorder 1, %s30
      %p763 = scmp.lt.s32.totalorder %s30, 3
      %p764 = pnand %p762, %p763
      %p765 = pneg %p764
      // Predicated region
      $region109: #{text_encoder_forward.1} parent=5 // pred_check
        _
      $region110: #{text_encoder_forward.1} parent=5 // pred_check_branch
        %767 = sbr.rel (%p764) target = $region112
      $region111: #{text_encoder_forward.1} parent=5 // pred_region
        %s768 = ssub.s32 %s30, 1
        %p769 = pneg %p51
        %p770 = pneg %p48
        %p771 = pneg %p72
        %p772 = pneg %p69
        %p773 = pneg %p93
        %p774 = pneg %p90
        %p775 = pneg %p114
        %p776 = pneg %p111
        %p777 = scmp.lt.s32.totalorder %s35, 1
        %s778 = scalar_select %p777, %s35, 1
        %s779 = scalar_lea.vmem %s4, %s778
        %p780 = pneg %p140
        %p781 = pneg %p137
        %p782 = scmp.lt.s32.totalorder %s35, 1
        %s783 = scalar_select %p782, %s35, 1
        %s784 = scalar_lea.vmem %s5, %s783
        %p785 = pneg %p166
        %p786 = pneg %p163
        %p787 = scmp.lt.s32.totalorder %s35, 1
        %s788 = scalar_select %p787, %s35, 1
        %s789 = smul.addr %s788, 4
        %s790 = smul.addr %s789, 8
        %s791 = scalar_lea.vmem %s6, %s790
        %p792 = pneg %p192
        %p793 = pneg %p189
        %p794 = scmp.lt.s32.totalorder %s35, 1
        %s795 = scalar_select %p794, %s35, 1
        %s796 = scalar_lea.vmem %s7, %s795
        %p797 = pneg %p218
        %p798 = pneg %p215
        %p799 = scmp.lt.s32.totalorder %s35, 1
        %s800 = scalar_select %p799, %s35, 1
        %s801 = smul.addr %s800, 4
        %s802 = smul.addr %s801, 8
        %s803 = scalar_lea.vmem %s8, %s802
        %p804 = pneg %p244
        %p805 = pneg %p241
        %p806 = scmp.lt.s32.totalorder %s35, 1
        %s807 = scalar_select %p806, %s35, 1
        %s808 = scalar_lea.vmem %s9, %s807
        %p809 = pneg %p270
        %p810 = pneg %p267
        %p811 = scmp.lt.s32.totalorder %s35, 1
        %s812 = scalar_select %p811, %s35, 1
        %s813 = smul.addr %s812, 4
        %s814 = smul.addr %s813, 8
        %s815 = scalar_lea.vmem %s10, %s814
        %p816 = pneg %p296
        %p817 = pneg %p293
        %p818 = scmp.lt.s32.totalorder %s35, 1
        %s819 = scalar_select %p818, %s35, 1
        %s820 = scalar_lea.vmem %s11, %s819
        %p821 = pneg %p322
        %p822 = pneg %p319
        %p823 = scmp.lt.s32.totalorder %s35, 1
        %s824 = scalar_select %p823, %s35, 1
        %s825 = smul.addr %s824, 4
        %s826 = smul.addr %s825, 8
        %s827 = scalar_lea.vmem %s12, %s826
        %p828 = pneg %p348
        %p829 = pneg %p345
        %p830 = scmp.lt.s32.totalorder %s35, 1
        %s831 = scalar_select %p830, %s35, 1
        %s832 = scalar_lea.vmem %s13, %s831
        %p833 = pneg %p374
        %p834 = pneg %p371
        %p835 = scmp.lt.s32.totalorder %s35, 1
        %s836 = scalar_select %p835, %s35, 1
        %s837 = scalar_lea.vmem %s14, %s836
        %p838 = pneg %p400
        %p839 = pneg %p397
        %p840 = scmp.lt.s32.totalorder %s35, 1
        %s841 = scalar_select %p840, %s35, 1
        %s842 = scalar_lea.vmem %s15, %s841
        %p843 = pneg %p426
        %p844 = pneg %p423
        %p845 = scmp.lt.s32.totalorder %s35, 1
        %s846 = scalar_select %p845, %s35, 1
        %s847 = smul.addr %s846, 4
        %s848 = smul.addr %s847, 8
        %s849 = scalar_lea.vmem %s16, %s848
        %p850 = pneg %p452
        %p851 = pneg %p449
        %p852 = scmp.lt.s32.totalorder %s35, 1
        %s853 = scalar_select %p852, %s35, 1
        %s854 = scalar_lea.vmem %s17, %s853
        %p855 = pneg %p478
        %p856 = pneg %p475
        %p857 = scmp.lt.s32.totalorder %s35, 1
        %s858 = scalar_select %p857, %s35, 1
        %s859 = smul.addr %s858, 16
        %s860 = smul.addr %s859, 8
        %s861 = scalar_lea.vmem %s18, %s860
        %p862 = pneg %p504
        %p863 = pneg %p501
        %p864 = scmp.lt.s32.totalorder %s35, 1
        %s865 = scalar_select %p864, %s35, 1
        %s866 = scalar_lea.vmem %s19, %s865
        %p867 = pneg %p530
        %p868 = pneg %p527
        %p869 = pneg %p551
        %p870 = pneg %p548
        %p871 = pneg %p572
        %p872 = pneg %p569
        %p873 = pneg %p593
        %p874 = pneg %p590
        %p875 = pneg %p614
        %p876 = pneg %p611
        %p877 = scmp.lt.s32.totalorder %s35, 1
        %s878 = scalar_select %p877, %s35, 1
        %s879 = scalar_lea.vmem %s4, %s878
        %p880 = scmp.lt.s32.totalorder %s35, 1
        %s881 = scalar_select %p880, %s35, 1
        %s882 = scalar_lea.vmem %s5, %s881
        %p883 = scmp.lt.s32.totalorder %s35, 1
        %s884 = scalar_select %p883, %s35, 1
        %s885 = smul.addr %s884, 4
        %s886 = smul.addr %s885, 8
        %s887 = scalar_lea.vmem %s6, %s886
        %p888 = scmp.lt.s32.totalorder %s35, 1
        %s889 = scalar_select %p888, %s35, 1
        %s890 = scalar_lea.vmem %s7, %s889
        %p891 = scmp.lt.s32.totalorder %s35, 1
        %s892 = scalar_select %p891, %s35, 1
        %s893 = smul.addr %s892, 4
        %s894 = smul.addr %s893, 8
        %s895 = scalar_lea.vmem %s8, %s894
        %p896 = scmp.lt.s32.totalorder %s35, 1
        %s897 = scalar_select %p896, %s35, 1
        %s898 = scalar_lea.vmem %s9, %s897
        %p899 = scmp.lt.s32.totalorder %s35, 1
        %s900 = scalar_select %p899, %s35, 1
        %s901 = smul.addr %s900, 4
        %s902 = smul.addr %s901, 8
        %s903 = scalar_lea.vmem %s10, %s902
        %p904 = scmp.lt.s32.totalorder %s35, 1
        %s905 = scalar_select %p904, %s35, 1
        %s906 = scalar_lea.vmem %s11, %s905
        %p907 = scmp.lt.s32.totalorder %s35, 1
        %s908 = scalar_select %p907, %s35, 1
        %s909 = smul.addr %s908, 4
        %s910 = smul.addr %s909, 8
        %s911 = scalar_lea.vmem %s12, %s910
        %p912 = scmp.lt.s32.totalorder %s35, 1
        %s913 = scalar_select %p912, %s35, 1
        %s914 = scalar_lea.vmem %s13, %s913
        %p915 = scmp.lt.s32.totalorder %s35, 1
        %s916 = scalar_select %p915, %s35, 1
        %s917 = scalar_lea.vmem %s14, %s916
        %p918 = scmp.lt.s32.totalorder %s35, 1
        %s919 = scalar_select %p918, %s35, 1
        %s920 = scalar_lea.vmem %s15, %s919
        %p921 = scmp.lt.s32.totalorder %s35, 1
        %s922 = scalar_select %p921, %s35, 1
        %s923 = smul.addr %s922, 4
        %s924 = smul.addr %s923, 8
        %s925 = scalar_lea.vmem %s16, %s924
        %p926 = scmp.lt.s32.totalorder %s35, 1
        %s927 = scalar_select %p926, %s35, 1
        %s928 = scalar_lea.vmem %s17, %s927
        %p929 = scmp.lt.s32.totalorder %s35, 1
        %s930 = scalar_select %p929, %s35, 1
        %s931 = smul.addr %s930, 16
        %s932 = smul.addr %s931, 8
        %s933 = scalar_lea.vmem %s18, %s932
        %p934 = scmp.lt.s32.totalorder %s35, 1
        %s935 = scalar_select %p934, %s35, 1
        %s936 = scalar_lea.vmem %s19, %s935
        %p937 = scmp.eq.s32.totalorder %s35, 0
        // Predicated region
        $region113: #{text_encoder_forward.1} parent=111 // pred_check
          %p938 = pneg %p937
        $region114: #{text_encoder_forward.1} parent=111 // pred_check_branch
          %940 = sbr.rel (%p938) target = $region116
        $region115: #{text_encoder_forward.1} parent=111 // pred_region
          %v941 = vld [vmem:[%s1] sm:$0xff]
          %v942 = vld [vmem:[%s0] sm:$0xff]
          %v943 = vld [vmem:[%s0 + $0x8] sm:$0xff]
          %v944 = vadd.f32 %v942, %v941
          %v945 = vadd.f32 %v943, %v941
          %vm946 = vcmask 261120
          %947 = vst.msk [vmem:[#allocation2] sm:$0xff] %vm946, %v944
          %948 = vst.msk [vmem:[#allocation2 + $0x8] sm:$0xff] %vm946, %v945
        $region116: #{text_encoder_forward.1} parent=111 // pred_fallthru
          _
        %v949 = vld [vmem:[#allocation2] sm:$0xff]
        %v950 = vld [vmem:[#allocation2 + $0x8] sm:$0xff]
        %v951 = vld [vmem:[%s879] sm:$0x1]
        %v952 = vld [vmem:[%s882] sm:$0x1]
        %vm953 = vcmask 261120
        %v954 = vsel %vm953, %v949, 0.0
        %955 = vadd.xlane.f32.xlu0 %v954
        %v956 = vpop.xlane.xlu0 %955
        %v957 = vsel %vm953, %v950, 0.0
        %958 = vadd.xlane.f32.xlu0 %v957
        %v959 = vpop.xlane.xlu0 %958
        %v960 = vrcp.pop 32.0
        %v961 = vmul.f32 %v956, %v960
        %v962 = vmul.f32 %v959, %v960
        %v963 = vsub.f32 %v949, %v961
        %v964 = vsub.f32 %v950, %v962
        %v965 = vmul.f32 %v963, %v963
        %v966 = vmul.f32 %v964, %v964
        %v967 = vsel %vm953, %v965, 0.0
        %968 = vadd.xlane.f32.xlu0 %v967
        %v969 = vpop.xlane.xlu0 %968
        %v970 = vsel %vm953, %v966, 0.0
        %971 = vadd.xlane.f32.xlu0 %v970
        %v972 = vpop.xlane.xlu0 %971
        %v973 = vmul.f32 %v969, %v960
        %v974 = vmul.f32 %v972, %v960
        %v975 = vadd.f32 %v973, 1e-05
        %v976 = vadd.f32 %v974, 1e-05
        %v977 = vrsqrt.pop %v975
        %v978 = vrsqrt.pop %v976
        %v979 = vmul.f32 %v963, %v977
        %v980 = vmul.f32 %v964, %v978
        %v982 = vlaneseq
        %v983 = vshrl.u32 %v982, 7
        %v984 = vsub.s32 0, %v983
        %v985 = vrot.slane %v951, %v984
        %v987 = vmul.f32 %v979, %v985
        %v988 = vmul.f32 %v980, %v985
        %v990 = vlaneseq
        %v991 = vshrl.u32 %v990, 7
        %v992 = vsub.s32 0, %v991
        %v993 = vrot.slane %v952, %v992
        %v995 = vadd.f32 %v987, %v993
        %v996 = vadd.f32 %v988, %v993
        %v997 = vld [vmem:[%s887] sm:$0xff]
        %v998 = vld [vmem:[%s887 + $0x8] sm:$0xff]
        %v999 = vld [vmem:[%s887 + $0x10] sm:$0xff]
        %v1000 = vld [vmem:[%s887 + $0x18] sm:$0xff]
        %v1001 = vld [vmem:[%s890] sm:$0x1]
        %v1003 = vlaneseq
        %v1004 = vshrl.u32 %v1003, 7
        %v1005 = vsub.s32 0, %v1004
        %v1006 = vrot.slane %v1001, %v1005
        %v1009 = vsel %vm953, %v995, 0
        %v1012 = vsel %vm953, %v996, 0
        %1014 = vmatprep.subr.mxu0 0.0
        %1015 = vmatpush1.msra.mxu0 %v997
        %1016 = vmatprep.subr.mxu0 0.0
        %1017 = vmatpush1.msra.mxu0 %v998
        %1018 = vmatprep.subr.mxu0 0.0
        %1019 = vmatpush1.msra.mxu0 %v999
        %1020 = vmatprep.subr.mxu0 0.0
        %1021 = vmatpush1.msra.mxu0 %v1000
        %1022 = vmatprep.subr.mxu0 0.0
        %1023 = vmatpush1.msra.mxu0 0.0
        %1024 = vmatprep.subr.mxu0 0.0
        %1025 = vmatpush1.msra.mxu0 0.0
        %1026 = vmatprep.subr.mxu0 0.0
        %1027 = vmatpush1.msra.mxu0 0.0
        %1028 = vmatprep.subr.mxu0 0.0
        %1029 = vmatpush1.msra.mxu0 0.0
        %1030 = vmatprep.subr.mxu0 0.0
        %1031 = vmatpush1.msra.mxu0 0.0
        %1032 = vmatprep.subr.mxu0 0.0
        %1033 = vmatpush1.msra.mxu0 0.0
        %1034 = vmatprep.subr.mxu0 0.0
        %1035 = vmatpush1.msra.mxu0 0.0
        %1036 = vmatprep.subr.mxu0 0.0
        %1037 = vmatpush1.msra.mxu0 0.0
        %1038 = vmatprep.subr.mxu0 0.0
        %1039 = vmatpush1.msra.mxu0 0.0
        %1040 = vmatprep.subr.mxu0 0.0
        %1041 = vmatpush1.msra.mxu0 0.0
        %1042 = vmatprep.subr.mxu0 0.0
        %1043 = vmatpush1.msra.mxu0 0.0
        %1044 = vmatprep.subr.mxu0 0.0
        %1045 = vmatpush1.msra.mxu0 0.0
        %1046 = vmatprep.subr.mxu0 0.0
        %1047 = vmatpush1.msra.mxu0 0.0
        %1048 = vmatprep.subr.mxu0 0.0
        %1049 = vmatpush1.msra.mxu0 0.0
        %1050 = vmatprep.subr.mxu0 0.0
        %1051 = vmatpush1.msra.mxu0 0.0
        %1052 = vmatprep.subr.mxu0 0.0
        %1053 = vmatpush1.msra.mxu0 0.0
        %1054 = vmatprep.subr.mxu0 0.0
        %1055 = vmatpush1.msra.mxu0 0.0
        %1056 = vmatprep.subr.mxu0 0.0
        %1057 = vmatpush1.msra.mxu0 0.0
        %1058 = vmatprep.subr.mxu0 0.0
        %1059 = vmatpush1.msra.mxu0 0.0
        %1060 = vmatprep.subr.mxu0 0.0
        %1061 = vmatpush1.msra.mxu0 0.0
        %1062 = vmatprep.subr.mxu0 0.0
        %1063 = vmatpush1.msra.mxu0 0.0
        %1064 = vmatprep.subr.mxu0 0.0
        %1065 = vmatpush1.msra.mxu0 0.0
        %1066 = vmatprep.subr.mxu0 0.0
        %1067 = vmatpush1.msra.mxu0 0.0
        %1068 = vmatprep.subr.mxu0 0.0
        %1069 = vmatpush1.msra.mxu0 0.0
        %1070 = vmatprep.subr.mxu0 0.0
        %1071 = vmatpush1.msra.mxu0 0.0
        %1072 = vmatprep.subr.mxu0 0.0
        %1073 = vmatpush1.msra.mxu0 0.0
        %1074 = vmatprep.subr.mxu0 0.0
        %1075 = vmatpush1.msra.mxu0 0.0
        %1076 = vmatprep.subr.mxu0 0.0
        %1077 = vmatpush1.msra.mxu0 0.0
        %1078 = vmatprep.mubr.f32.mxu0 0.0
        %1079 = vmatmul.mubr.f32.gmra.mrb[0].mxu0 %v1009
        %v1080 = vpop.f32.mrb[0].mxu0
        %v1081 = vadd.f32 %v1006, %v1080
        %v1082 = vpop.f32.mrb[0].mxu0
        %1083 = vmatprep.mubr.f32.mxu0 0.0
        %1084 = vmatmul.mubr.f32.gmra.mrb[0].mxu0 %v1012
        %v1085 = vpop.f32.mrb[0].mxu0
        %v1086 = vadd.f32 %v1006, %v1085
        %v1087 = vpop.f32.mrb[0].mxu0
        %1088 = vdwg.mxu0
        %v1089 = vmul.f32 %v1081, 0.35355338
        %v1090 = vmul.f32 %v1086, 0.35355338
        %v1091 = vld [vmem:[%s895] sm:$0xff]
        %v1092 = vld [vmem:[%s895 + $0x8] sm:$0xff]
        %v1093 = vld [vmem:[%s895 + $0x10] sm:$0xff]
        %v1094 = vld [vmem:[%s895 + $0x18] sm:$0xff]
        %v1095 = vld [vmem:[%s898] sm:$0x1]
        %v1097 = vlaneseq
        %v1098 = vshrl.u32 %v1097, 7
        %v1099 = vsub.s32 0, %v1098
        %v1100 = vrot.slane %v1095, %v1099
        %1102 = vmatprep.subr.mxu0 0.0
        %1103 = vmatpush1.msra.mxu0 %v1091
        %1104 = vmatprep.subr.mxu0 0.0
        %1105 = vmatpush1.msra.mxu0 %v1092
        %1106 = vmatprep.subr.mxu0 0.0
        %1107 = vmatpush1.msra.mxu0 %v1093
        %1108 = vmatprep.subr.mxu0 0.0
        %1109 = vmatpush1.msra.mxu0 %v1094
        %1110 = vmatprep.subr.mxu0 0.0
        %1111 = vmatpush1.msra.mxu0 0.0
        %1112 = vmatprep.subr.mxu0 0.0
        %1113 = vmatpush1.msra.mxu0 0.0
        %1114 = vmatprep.subr.mxu0 0.0
        %1115 = vmatpush1.msra.mxu0 0.0
        %1116 = vmatprep.subr.mxu0 0.0
        %1117 = vmatpush1.msra.mxu0 0.0
        %1118 = vmatprep.subr.mxu0 0.0
        %1119 = vmatpush1.msra.mxu0 0.0
        %1120 = vmatprep.subr.mxu0 0.0
        %1121 = vmatpush1.msra.mxu0 0.0
        %1122 = vmatprep.subr.mxu0 0.0
        %1123 = vmatpush1.msra.mxu0 0.0
        %1124 = vmatprep.subr.mxu0 0.0
        %1125 = vmatpush1.msra.mxu0 0.0
        %1126 = vmatprep.subr.mxu0 0.0
        %1127 = vmatpush1.msra.mxu0 0.0
        %1128 = vmatprep.subr.mxu0 0.0
        %1129 = vmatpush1.msra.mxu0 0.0
        %1130 = vmatprep.subr.mxu0 0.0
        %1131 = vmatpush1.msra.mxu0 0.0
        %1132 = vmatprep.subr.mxu0 0.0
        %1133 = vmatpush1.msra.mxu0 0.0
        %1134 = vmatprep.subr.mxu0 0.0
        %1135 = vmatpush1.msra.mxu0 0.0
        %1136 = vmatprep.subr.mxu0 0.0
        %1137 = vmatpush1.msra.mxu0 0.0
        %1138 = vmatprep.subr.mxu0 0.0
        %1139 = vmatpush1.msra.mxu0 0.0
        %1140 = vmatprep.subr.mxu0 0.0
        %1141 = vmatpush1.msra.mxu0 0.0
        %1142 = vmatprep.subr.mxu0 0.0
        %1143 = vmatpush1.msra.mxu0 0.0
        %1144 = vmatprep.subr.mxu0 0.0
        %1145 = vmatpush1.msra.mxu0 0.0
        %1146 = vmatprep.subr.mxu0 0.0
        %1147 = vmatpush1.msra.mxu0 0.0
        %1148 = vmatprep.subr.mxu0 0.0
        %1149 = vmatpush1.msra.mxu0 0.0
        %1150 = vmatprep.subr.mxu0 0.0
        %1151 = vmatpush1.msra.mxu0 0.0
        %1152 = vmatprep.subr.mxu0 0.0
        %1153 = vmatpush1.msra.mxu0 0.0
        %1154 = vmatprep.subr.mxu0 0.0
        %1155 = vmatpush1.msra.mxu0 0.0
        %1156 = vmatprep.subr.mxu0 0.0
        %1157 = vmatpush1.msra.mxu0 0.0
        %1158 = vmatprep.subr.mxu0 0.0
        %1159 = vmatpush1.msra.mxu0 0.0
        %1160 = vmatprep.subr.mxu0 0.0
        %1161 = vmatpush1.msra.mxu0 0.0
        %1162 = vmatprep.subr.mxu0 0.0
        %1163 = vmatpush1.msra.mxu0 0.0
        %1164 = vmatprep.subr.mxu0 0.0
        %1165 = vmatpush1.msra.mxu0 0.0
        %1166 = vmatprep.mubr.f32.mxu0 0.0
        %1167 = vmatmul.mubr.f32.gmra.mrb[0].mxu0 %v1009
        %v1168 = vpop.f32.mrb[0].mxu0
        %v1169 = vadd.f32 %v1100, %v1168
        %v1170 = vpop.f32.mrb[0].mxu0
        %1171 = vmatprep.mubr.f32.mxu0 0.0
        %1172 = vmatmul.mubr.f32.gmra.mrb[0].mxu0 %v1012
        %v1173 = vpop.f32.mrb[0].mxu0
        %v1174 = vadd.f32 %v1100, %v1173
        %v1175 = vpop.f32.mrb[0].mxu0
        %1176 = vdwg.mxu0
        %v1177 = vld [vmem:[%s903] sm:$0xff]
        %v1178 = vld [vmem:[%s903 + $0x8] sm:$0xff]
        %v1179 = vld [vmem:[%s903 + $0x10] sm:$0xff]
        %v1180 = vld [vmem:[%s903 + $0x18] sm:$0xff]
        %v1181 = vld [vmem:[%s906] sm:$0x1]
        %v1183 = vlaneseq
        %v1184 = vshrl.u32 %v1183, 7
        %v1185 = vsub.s32 0, %v1184
        %v1186 = vrot.slane %v1181, %v1185
        %1188 = vmatprep.subr.mxu0 0.0
        %1189 = vmatpush1.msra.mxu0 %v1177
        %1190 = vmatprep.subr.mxu0 0.0
        %1191 = vmatpush1.msra.mxu0 %v1178
        %1192 = vmatprep.subr.mxu0 0.0
        %1193 = vmatpush1.msra.mxu0 %v1179
        %1194 = vmatprep.subr.mxu0 0.0
        %1195 = vmatpush1.msra.mxu0 %v1180
        %1196 = vmatprep.subr.mxu0 0.0
        %1197 = vmatpush1.msra.mxu0 0.0
        %1198 = vmatprep.subr.mxu0 0.0
        %1199 = vmatpush1.msra.mxu0 0.0
        %1200 = vmatprep.subr.mxu0 0.0
        %1201 = vmatpush1.msra.mxu0 0.0
        %1202 = vmatprep.subr.mxu0 0.0
        %1203 = vmatpush1.msra.mxu0 0.0
        %1204 = vmatprep.subr.mxu0 0.0
        %1205 = vmatpush1.msra.mxu0 0.0
        %1206 = vmatprep.subr.mxu0 0.0
        %1207 = vmatpush1.msra.mxu0 0.0
        %1208 = vmatprep.subr.mxu0 0.0
        %1209 = vmatpush1.msra.mxu0 0.0
        %1210 = vmatprep.subr.mxu0 0.0
        %1211 = vmatpush1.msra.mxu0 0.0
        %1212 = vmatprep.subr.mxu0 0.0
        %1213 = vmatpush1.msra.mxu0 0.0
        %1214 = vmatprep.subr.mxu0 0.0
        %1215 = vmatpush1.msra.mxu0 0.0
        %1216 = vmatprep.subr.mxu0 0.0
        %1217 = vmatpush1.msra.mxu0 0.0
        %1218 = vmatprep.subr.mxu0 0.0
        %1219 = vmatpush1.msra.mxu0 0.0
        %1220 = vmatprep.subr.mxu0 0.0
        %1221 = vmatpush1.msra.mxu0 0.0
        %1222 = vmatprep.subr.mxu0 0.0
        %1223 = vmatpush1.msra.mxu0 0.0
        %1224 = vmatprep.subr.mxu0 0.0
        %1225 = vmatpush1.msra.mxu0 0.0
        %1226 = vmatprep.subr.mxu0 0.0
        %1227 = vmatpush1.msra.mxu0 0.0
        %1228 = vmatprep.subr.mxu0 0.0
        %1229 = vmatpush1.msra.mxu0 0.0
        %1230 = vmatprep.subr.mxu0 0.0
        %1231 = vmatpush1.msra.mxu0 0.0
        %1232 = vmatprep.subr.mxu0 0.0
        %1233 = vmatpush1.msra.mxu0 0.0
        %1234 = vmatprep.subr.mxu0 0.0
        %1235 = vmatpush1.msra.mxu0 0.0
        %1236 = vmatprep.subr.mxu0 0.0
        %1237 = vmatpush1.msra.mxu0 0.0
        %1238 = vmatprep.subr.mxu0 0.0
        %1239 = vmatpush1.msra.mxu0 0.0
        %1240 = vmatprep.subr.mxu0 0.0
        %1241 = vmatpush1.msra.mxu0 0.0
        %1242 = vmatprep.subr.mxu0 0.0
        %1243 = vmatpush1.msra.mxu0 0.0
        %1244 = vmatprep.subr.mxu0 0.0
        %1245 = vmatpush1.msra.mxu0 0.0
        %1246 = vmatprep.subr.mxu0 0.0
        %1247 = vmatpush1.msra.mxu0 0.0
        %1248 = vmatprep.subr.mxu0 0.0
        %1249 = vmatpush1.msra.mxu0 0.0
        %1250 = vmatprep.subr.mxu0 0.0
        %1251 = vmatpush1.msra.mxu0 0.0
        %1252 = vmatprep.mubr.f32.mxu0 0.0
        %1253 = vmatmul.mubr.f32.gmra.mrb[0].mxu0 %v1009
        %v1254 = vpop.f32.mrb[0].mxu0
        %v1255 = vadd.f32 %v1186, %v1254
        %v1256 = vpop.f32.mrb[0].mxu0
        %1257 = vmatprep.mubr.f32.mxu0 0.0
        %1258 = vmatmul.mubr.f32.gmra.mrb[0].mxu0 %v1012
        %v1259 = vpop.f32.mrb[0].mxu0
        %v1260 = vadd.f32 %v1186, %v1259
        %v1261 = vpop.f32.mrb[0].mxu0
        %1262 = vdwg.mxu0
        %v1263 = vld [vmem:[%s2] sm:$0xff]
        %v1264 = vld [vmem:[%s2 + $0x8] sm:$0xff]
        %v1265 = vlaneseq
        %v1266 = vand.u32 %v1265, 127
        %vm1267 = vcmp.ge.s32.totalorder %v1266, 0
        %vm1268 = vcmp.lt.s32.totalorder %v1266, 8
        %vm1269 = vmand %vm1267, %vm1268
        %v1270 = vsel %vm1269, 1, 0
        %v1271 = vcvt.s32.f32 %v1270
        %v1272 = vmul.f32 %v1089, %v1271
        %v1273 = vmul.f32 %v1090, %v1271
        %v1275 = vsel %vm953, %v1272, 0
        %v1278 = vsel %vm953, %v1273, 0
        %v1281 = vsel %vm953, %v1169, 0
        %v1284 = vsel %vm953, %v1174, 0
        %1286 = vmatprep.subr.mxu0 0.0
        %1287 = vmatpush1.xpose.msra.mxu0 %v1281
        %1288 = vmatprep.subr.mxu0 0.0
        %1289 = vmatpush1.xpose.msra.mxu0 %v1284
        %1290 = vmatprep.subr.mxu0 0.0
        %1291 = vmatpush1.xpose.msra.mxu0 0.0
        %1292 = vmatprep.subr.mxu0 0.0
        %1293 = vmatpush1.xpose.msra.mxu0 0.0
        %1294 = vmatprep.subr.mxu0 0.0
        %1295 = vmatpush1.xpose.msra.mxu0 0.0
        %1296 = vmatprep.subr.mxu0 0.0
        %1297 = vmatpush1.xpose.msra.mxu0 0.0
        %1298 = vmatprep.subr.mxu0 0.0
        %1299 = vmatpush1.xpose.msra.mxu0 0.0
        %1300 = vmatprep.subr.mxu0 0.0
        %1301 = vmatpush1.xpose.msra.mxu0 0.0
        %1302 = vmatprep.subr.mxu0 0.0
        %1303 = vmatpush1.xpose.msra.mxu0 0.0
        %1304 = vmatprep.subr.mxu0 0.0
        %1305 = vmatpush1.xpose.msra.mxu0 0.0
        %1306 = vmatprep.subr.mxu0 0.0
        %1307 = vmatpush1.xpose.msra.mxu0 0.0
        %1308 = vmatprep.subr.mxu0 0.0
        %1309 = vmatpush1.xpose.msra.mxu0 0.0
        %1310 = vmatprep.subr.mxu0 0.0
        %1311 = vmatpush1.xpose.msra.mxu0 0.0
        %1312 = vmatprep.subr.mxu0 0.0
        %1313 = vmatpush1.xpose.msra.mxu0 0.0
        %1314 = vmatprep.subr.mxu0 0.0
        %1315 = vmatpush1.xpose.msra.mxu0 0.0
        %1316 = vmatprep.subr.mxu0 0.0
        %1317 = vmatpush1.xpose.msra.mxu0 0.0
        %1318 = vmatprep.subr.mxu0 0.0
        %1319 = vmatpush1.xpose.msra.mxu0 0.0
        %1320 = vmatprep.subr.mxu0 0.0
        %1321 = vmatpush1.xpose.msra.mxu0 0.0
        %1322 = vmatprep.subr.mxu0 0.0
        %1323 = vmatpush1.xpose.msra.mxu0 0.0
        %1324 = vmatprep.subr.mxu0 0.0
        %1325 = vmatpush1.xpose.msra.mxu0 0.0
        %1326 = vmatprep.subr.mxu0 0.0
        %1327 = vmatpush1.xpose.msra.mxu0 0.0
        %1328 = vmatprep.subr.mxu0 0.0
        %1329 = vmatpush1.xpose.msra.mxu0 0.0
        %1330 = vmatprep.subr.mxu0 0.0
        %1331 = vmatpush1.xpose.msra.mxu0 0.0
        %1332 = vmatprep.subr.mxu0 0.0
        %1333 = vmatpush1.xpose.msra.mxu0 0.0
        %1334 = vmatprep.subr.mxu0 0.0
        %1335 = vmatpush1.xpose.msra.mxu0 0.0
        %1336 = vmatprep.subr.mxu0 0.0
        %1337 = vmatpush1.xpose.msra.mxu0 0.0
        %1338 = vmatprep.subr.mxu0 0.0
        %1339 = vmatpush1.xpose.msra.mxu0 0.0
        %1340 = vmatprep.subr.mxu0 0.0
        %1341 = vmatpush1.xpose.msra.mxu0 0.0
        %1342 = vmatprep.subr.mxu0 0.0
        %1343 = vmatpush1.xpose.msra.mxu0 0.0
        %1344 = vmatprep.subr.mxu0 0.0
        %1345 = vmatpush1.xpose.msra.mxu0 0.0
        %1346 = vmatprep.subr.mxu0 0.0
        %1347 = vmatpush1.xpose.msra.mxu0 0.0
        %1348 = vmatprep.subr.mxu0 0.0
        %1349 = vmatpush1.xpose.msra.mxu0 0.0
        %1350 = vmatprep.mubr.f32.mxu0 0.0
        %1351 = vmatmul.mubr.f32.gmra.mrb[0].mxu0 %v1275
        %v1352 = vpop.f32.mrb[0].mxu0
        %v1353 = vadd.f32 %v1263, %v1352
        %v1354 = vpop.f32.mrb[0].mxu0
        %1355 = vmatprep.mubr.f32.mxu0 0.0
        %1356 = vmatmul.mubr.f32.gmra.mrb[0].mxu0 %v1278
        %v1357 = vpop.f32.mrb[0].mxu0
        %v1358 = vadd.f32 %v1264, %v1357
        %v1359 = vpop.f32.mrb[0].mxu0
        %1360 = vdwg.mxu0
        %vm1361 = vcmask 130048
        %v1362 = vsel %vm1361, %v1353, -inf
        %1363 = vmax.xlane.f32.xlu0 %v1362
        %v1364 = vpop.xlane.xlu0 %1363
        %v1365 = vsel %vm1361, %v1358, -inf
        %1366 = vmax.xlane.f32.xlu0 %v1365
        %v1367 = vpop.xlane.xlu0 %1366
        %v1368 = vsub.f32 %v1353, %v1364
        %v1369 = vsub.f32 %v1358, %v1367
        %v1370 = vmul.f32 %v1368, 1.442695
        %v1371 = vpow.pop %v1370
        %v1372 = vmul.f32 %v1369, 1.442695
        %v1373 = vpow.pop %v1372
        %v1374 = vsel %vm1361, %v1371, 0.0
        %1375 = vadd.xlane.f32.xlu0 %v1374
        %v1376 = vpop.xlane.xlu0 %1375
        %v1377 = vsel %vm1361, %v1373, 0.0
        %1378 = vadd.xlane.f32.xlu0 %v1377
        %v1379 = vpop.xlane.xlu0 %1378
        %v1380 = vrcp.pop %v1376
        %v1381 = vmul.f32 %v1371, %v1380
        %v1382 = vrcp.pop %v1379
        %v1383 = vmul.f32 %v1373, %v1382
        %v1384 = vmul.f32 %v1255, %v1271
        %v1385 = vmul.f32 %v1260, %v1271
        %vm1386 = vcmp.ge.s32.totalorder %v1266, 8
        %vm1387 = vcmp.lt.s32.totalorder %v1266, 16
        %vm1388 = vmand %vm1386, %vm1387
        %v1389 = vsel %vm1388, 1, 0
        %v1390 = vcvt.s32.f32 %v1389
        %v1391 = vmul.f32 %v1089, %v1390
        %v1392 = vmul.f32 %v1090, %v1390
        %v1394 = vsel %vm953, %v1391, 0
        %v1397 = vsel %vm953, %v1392, 0
        %1399 = vmatprep.subr.mxu0 0.0
        %1400 = vmatpush1.xpose.msra.mxu0 %v1281
        %1401 = vmatprep.subr.mxu0 0.0
        %1402 = vmatpush1.xpose.msra.mxu0 %v1284
        %1403 = vmatprep.subr.mxu0 0.0
        %1404 = vmatpush1.xpose.msra.mxu0 0.0
        %1405 = vmatprep.subr.mxu0 0.0
        %1406 = vmatpush1.xpose.msra.mxu0 0.0
        %1407 = vmatprep.subr.mxu0 0.0
        %1408 = vmatpush1.xpose.msra.mxu0 0.0
        %1409 = vmatprep.subr.mxu0 0.0
        %1410 = vmatpush1.xpose.msra.mxu0 0.0
        %1411 = vmatprep.subr.mxu0 0.0
        %1412 = vmatpush1.xpose.msra.mxu0 0.0
        %1413 = vmatprep.subr.mxu0 0.0
        %1414 = vmatpush1.xpose.msra.mxu0 0.0
        %1415 = vmatprep.subr.mxu0 0.0
        %1416 = vmatpush1.xpose.msra.mxu0 0.0
        %1417 = vmatprep.subr.mxu0 0.0
        %1418 = vmatpush1.xpose.msra.mxu0 0.0
        %1419 = vmatprep.subr.mxu0 0.0
        %1420 = vmatpush1.xpose.msra.mxu0 0.0
        %1421 = vmatprep.subr.mxu0 0.0
        %1422 = vmatpush1.xpose.msra.mxu0 0.0
        %1423 = vmatprep.subr.mxu0 0.0
        %1424 = vmatpush1.xpose.msra.mxu0 0.0
        %1425 = vmatprep.subr.mxu0 0.0
        %1426 = vmatpush1.xpose.msra.mxu0 0.0
        %1427 = vmatprep.subr.mxu0 0.0
        %1428 = vmatpush1.xpose.msra.mxu0 0.0
        %1429 = vmatprep.subr.mxu0 0.0
        %1430 = vmatpush1.xpose.msra.mxu0 0.0
        %1431 = vmatprep.subr.mxu0 0.0
        %1432 = vmatpush1.xpose.msra.mxu0 0.0
        %1433 = vmatprep.subr.mxu0 0.0
        %1434 = vmatpush1.xpose.msra.mxu0 0.0
        %1435 = vmatprep.subr.mxu0 0.0
        %1436 = vmatpush1.xpose.msra.mxu0 0.0
        %1437 = vmatprep.subr.mxu0 0.0
        %1438 = vmatpush1.xpose.msra.mxu0 0.0
        %1439 = vmatprep.subr.mxu0 0.0
        %1440 = vmatpush1.xpose.msra.mxu0 0.0
        %1441 = vmatprep.subr.mxu0 0.0
        %1442 = vmatpush1.xpose.msra.mxu0 0.0
        %1443 = vmatprep.subr.mxu0 0.0
        %1444 = vmatpush1.xpose.msra.mxu0 0.0
        %1445 = vmatprep.subr.mxu0 0.0
        %1446 = vmatpush1.xpose.msra.mxu0 0.0
        %1447 = vmatprep.subr.mxu0 0.0
        %1448 = vmatpush1.xpose.msra.mxu0 0.0
        %1449 = vmatprep.subr.mxu0 0.0
        %1450 = vmatpush1.xpose.msra.mxu0 0.0
        %1451 = vmatprep.subr.mxu0 0.0
        %1452 = vmatpush1.xpose.msra.mxu0 0.0
        %1453 = vmatprep.subr.mxu0 0.0
        %1454 = vmatpush1.xpose.msra.mxu0 0.0
        %1455 = vmatprep.subr.mxu0 0.0
        %1456 = vmatpush1.xpose.msra.mxu0 0.0
        %1457 = vmatprep.subr.mxu0 0.0
        %1458 = vmatpush1.xpose.msra.mxu0 0.0
        %1459 = vmatprep.subr.mxu0 0.0
        %1460 = vmatpush1.xpose.msra.mxu0 0.0
        %1461 = vmatprep.subr.mxu0 0.0
        %1462 = vmatpush1.xpose.msra.mxu0 0.0
        %1463 = vmatprep.mubr.f32.mxu0 0.0
        %1464 = vmatmul.mubr.f32.gmra.mrb[0].mxu0 %v1394
        %v1465 = vpop.f32.mrb[0].mxu0
        %v1466 = vadd.f32 %v1263, %v1465
        %v1467 = vpop.f32.mrb[0].mxu0
        %1468 = vmatprep.mubr.f32.mxu0 0.0
        %1469 = vmatmul.mubr.f32.gmra.mrb[0].mxu0 %v1397
        %v1470 = vpop.f32.mrb[0].mxu0
        %v1471 = vadd.f32 %v1264, %v1470
        %v1472 = vpop.f32.mrb[0].mxu0
        %1473 = vdwg.mxu0
        %v1474 = vsel %vm1361, %v1466, -inf
        %1475 = vmax.xlane.f32.xlu0 %v1474
        %v1476 = vpop.xlane.xlu0 %1475
        %v1477 = vsel %vm1361, %v1471, -inf
        %1478 = vmax.xlane.f32.xlu0 %v1477
        %v1479 = vpop.xlane.xlu0 %1478
        %v1480 = vsub.f32 %v1466, %v1476
        %v1481 = vsub.f32 %v1471, %v1479
        %v1482 = vmul.f32 %v1480, 1.442695
        %v1483 = vpow.pop %v1482
        %v1484 = vmul.f32 %v1481, 1.442695
        %v1485 = vpow.pop %v1484
        %v1486 = vsel %vm1361, %v1483, 0.0
        %1487 = vadd.xlane.f32.xlu0 %v1486
        %v1488 = vpop.xlane.xlu0 %1487
        %v1489 = vsel %vm1361, %v1485, 0.0
        %1490 = vadd.xlane.f32.xlu0 %v1489
        %v1491 = vpop.xlane.xlu0 %1490
        %v1492 = vrcp.pop %v1488
        %v1493 = vmul.f32 %v1483, %v1492
        %v1494 = vrcp.pop %v1491
        %v1495 = vmul.f32 %v1485, %v1494
        %v1496 = vmul.f32 %v1255, %v1390
        %v1497 = vmul.f32 %v1260, %v1390
        %v1499 = vsel %vm1361, %v1493, 0
        %v1502 = vsel %vm1361, %v1495, 0
        %1504 = vmatprep.subr.mxu0 0.0
        %1505 = vmatpush1.msra.mxu0 %v1496
        %1506 = vmatprep.subr.mxu0 0.0
        %1507 = vmatpush1.msra.mxu0 %v1497
        %1508 = vmatprep.subr.mxu0 0.0
        %1509 = vmatpush1.msra.mxu0 0.0
        %1510 = vmatprep.subr.mxu0 0.0
        %1511 = vmatpush1.msra.mxu0 0.0
        %1512 = vmatprep.subr.mxu0 0.0
        %1513 = vmatpush1.msra.mxu0 0.0
        %1514 = vmatprep.subr.mxu0 0.0
        %1515 = vmatpush1.msra.mxu0 0.0
        %1516 = vmatprep.subr.mxu0 0.0
        %1517 = vmatpush1.msra.mxu0 0.0
        %1518 = vmatprep.subr.mxu0 0.0
        %1519 = vmatpush1.msra.mxu0 0.0
        %1520 = vmatprep.subr.mxu0 0.0
        %1521 = vmatpush1.msra.mxu0 0.0
        %1522 = vmatprep.subr.mxu0 0.0
        %1523 = vmatpush1.msra.mxu0 0.0
        %1524 = vmatprep.subr.mxu0 0.0
        %1525 = vmatpush1.msra.mxu0 0.0
        %1526 = vmatprep.subr.mxu0 0.0
        %1527 = vmatpush1.msra.mxu0 0.0
        %1528 = vmatprep.subr.mxu0 0.0
        %1529 = vmatpush1.msra.mxu0 0.0
        %1530 = vmatprep.subr.mxu0 0.0
        %1531 = vmatpush1.msra.mxu0 0.0
        %1532 = vmatprep.subr.mxu0 0.0
        %1533 = vmatpush1.msra.mxu0 0.0
        %1534 = vmatprep.subr.mxu0 0.0
        %1535 = vmatpush1.msra.mxu0 0.0
        %1536 = vmatprep.subr.mxu0 0.0
        %1537 = vmatpush1.msra.mxu0 0.0
        %1538 = vmatprep.subr.mxu0 0.0
        %1539 = vmatpush1.msra.mxu0 0.0
        %1540 = vmatprep.subr.mxu0 0.0
        %1541 = vmatpush1.msra.mxu0 0.0
        %1542 = vmatprep.subr.mxu0 0.0
        %1543 = vmatpush1.msra.mxu0 0.0
        %1544 = vmatprep.subr.mxu0 0.0
        %1545 = vmatpush1.msra.mxu0 0.0
        %1546 = vmatprep.subr.mxu0 0.0
        %1547 = vmatpush1.msra.mxu0 0.0
        %1548 = vmatprep.subr.mxu0 0.0
        %1549 = vmatpush1.msra.mxu0 0.0
        %1550 = vmatprep.subr.mxu0 0.0
        %1551 = vmatpush1.msra.mxu0 0.0
        %1552 = vmatprep.subr.mxu0 0.0
        %1553 = vmatpush1.msra.mxu0 0.0
        %1554 = vmatprep.subr.mxu0 0.0
        %1555 = vmatpush1.msra.mxu0 0.0
        %1556 = vmatprep.subr.mxu0 0.0
        %1557 = vmatpush1.msra.mxu0 0.0
        %1558 = vmatprep.subr.mxu0 0.0
        %1559 = vmatpush1.msra.mxu0 0.0
        %1560 = vmatprep.subr.mxu0 0.0
        %1561 = vmatpush1.msra.mxu0 0.0
        %1562 = vmatprep.subr.mxu0 0.0
        %1563 = vmatpush1.msra.mxu0 0.0
        %1564 = vmatprep.subr.mxu0 0.0
        %1565 = vmatpush1.msra.mxu0 0.0
        %1566 = vmatprep.subr.mxu0 0.0
        %1567 = vmatpush1.msra.mxu0 0.0
        %1568 = vmatprep.mubr.f32.mxu0 0.0
        %1569 = vmatmul.mubr.f32.gmra.mrb[0].mxu0 %v1499
        %v1570 = vpop.f32.mrb[0].mxu0
        %v1571 = vadd.f32 0.0, %v1570
        %v1572 = vpop.f32.mrb[0].mxu0
        %1573 = vmatprep.mubr.f32.mxu0 0.0
        %1574 = vmatmul.mubr.f32.gmra.mrb[0].mxu0 %v1502
        %v1575 = vpop.f32.mrb[0].mxu0
        %v1576 = vadd.f32 0.0, %v1575
        %v1577 = vpop.f32.mrb[0].mxu0
        %1578 = vdwg.mxu0
        %v1580 = vsel %vm1361, %v1381, 0
        %v1583 = vsel %vm1361, %v1383, 0
        %1585 = vmatprep.subr.mxu0 0.0
        %1586 = vmatpush1.msra.mxu0 %v1384
        %1587 = vmatprep.subr.mxu0 0.0
        %1588 = vmatpush1.msra.mxu0 %v1385
        %1589 = vmatprep.subr.mxu0 0.0
        %1590 = vmatpush1.msra.mxu0 0.0
        %1591 = vmatprep.subr.mxu0 0.0
        %1592 = vmatpush1.msra.mxu0 0.0
        %1593 = vmatprep.subr.mxu0 0.0
        %1594 = vmatpush1.msra.mxu0 0.0
        %1595 = vmatprep.subr.mxu0 0.0
        %1596 = vmatpush1.msra.mxu0 0.0
        %1597 = vmatprep.subr.mxu0 0.0
        %1598 = vmatpush1.msra.mxu0 0.0
        %1599 = vmatprep.subr.mxu0 0.0
        %1600 = vmatpush1.msra.mxu0 0.0
        %1601 = vmatprep.subr.mxu0 0.0
        %1602 = vmatpush1.msra.mxu0 0.0
        %1603 = vmatprep.subr.mxu0 0.0
        %1604 = vmatpush1.msra.mxu0 0.0
        %1605 = vmatprep.subr.mxu0 0.0
        %1606 = vmatpush1.msra.mxu0 0.0
        %1607 = vmatprep.subr.mxu0 0.0
        %1608 = vmatpush1.msra.mxu0 0.0
        %1609 = vmatprep.subr.mxu0 0.0
        %1610 = vmatpush1.msra.mxu0 0.0
        %1611 = vmatprep.subr.mxu0 0.0
        %1612 = vmatpush1.msra.mxu0 0.0
        %1613 = vmatprep.subr.mxu0 0.0
        %1614 = vmatpush1.msra.mxu0 0.0
        %1615 = vmatprep.subr.mxu0 0.0
        %1616 = vmatpush1.msra.mxu0 0.0
        %1617 = vmatprep.subr.mxu0 0.0
        %1618 = vmatpush1.msra.mxu0 0.0
        %1619 = vmatprep.subr.mxu0 0.0
        %1620 = vmatpush1.msra.mxu0 0.0
        %1621 = vmatprep.subr.mxu0 0.0
        %1622 = vmatpush1.msra.mxu0 0.0
        %1623 = vmatprep.subr.mxu0 0.0
        %1624 = vmatpush1.msra.mxu0 0.0
        %1625 = vmatprep.subr.mxu0 0.0
        %1626 = vmatpush1.msra.mxu0 0.0
        %1627 = vmatprep.subr.mxu0 0.0
        %1628 = vmatpush1.msra.mxu0 0.0
        %1629 = vmatprep.subr.mxu0 0.0
        %1630 = vmatpush1.msra.mxu0 0.0
        %1631 = vmatprep.subr.mxu0 0.0
        %1632 = vmatpush1.msra.mxu0 0.0
        %1633 = vmatprep.subr.mxu0 0.0
        %1634 = vmatpush1.msra.mxu0 0.0
        %1635 = vmatprep.subr.mxu0 0.0
        %1636 = vmatpush1.msra.mxu0 0.0
        %1637 = vmatprep.subr.mxu0 0.0
        %1638 = vmatpush1.msra.mxu0 0.0
        %1639 = vmatprep.subr.mxu0 0.0
        %1640 = vmatpush1.msra.mxu0 0.0
        %1641 = vmatprep.subr.mxu0 0.0
        %1642 = vmatpush1.msra.mxu0 0.0
        %1643 = vmatprep.subr.mxu0 0.0
        %1644 = vmatpush1.msra.mxu0 0.0
        %1645 = vmatprep.subr.mxu0 0.0
        %1646 = vmatpush1.msra.mxu0 0.0
        %1647 = vmatprep.subr.mxu0 0.0
        %1648 = vmatpush1.msra.mxu0 0.0
        %1649 = vmatprep.mubr.f32.mxu0 0.0
        %1650 = vmatmul.mubr.f32.gmra.mrb[0].mxu0 %v1580
        %v1651 = vpop.f32.mrb[0].mxu0
        %v1652 = vadd.f32 %v1571, %v1651
        %v1653 = vpop.f32.mrb[0].mxu0
        %1654 = vmatprep.mubr.f32.mxu0 0.0
        %1655 = vmatmul.mubr.f32.gmra.mrb[0].mxu0 %v1583
        %v1656 = vpop.f32.mrb[0].mxu0
        %v1657 = vadd.f32 %v1576, %v1656
        %v1658 = vpop.f32.mrb[0].mxu0
        %1659 = vdwg.mxu0
        %vm1660 = vcmp.ge.s32.totalorder %v1266, 16
        %vm1661 = vcmp.lt.s32.totalorder %v1266, 24
        %vm1662 = vmand %vm1660, %vm1661
        %v1663 = vsel %vm1662, 1, 0
        %v1664 = vcvt.s32.f32 %v1663
        %v1665 = vmul.f32 %v1089, %v1664
        %v1666 = vmul.f32 %v1090, %v1664
        %v1668 = vsel %vm953, %v1665, 0
        %v1671 = vsel %vm953, %v1666, 0
        %1673 = vmatprep.subr.mxu0 0.0
        %1674 = vmatpush1.xpose.msra.mxu0 %v1281
        %1675 = vmatprep.subr.mxu0 0.0
        %1676 = vmatpush1.xpose.msra.mxu0 %v1284
        %1677 = vmatprep.subr.mxu0 0.0
        %1678 = vmatpush1.xpose.msra.mxu0 0.0
        %1679 = vmatprep.subr.mxu0 0.0
        %1680 = vmatpush1.xpose.msra.mxu0 0.0
        %1681 = vmatprep.subr.mxu0 0.0
        %1682 = vmatpush1.xpose.msra.mxu0 0.0
        %1683 = vmatprep.subr.mxu0 0.0
        %1684 = vmatpush1.xpose.msra.mxu0 0.0
        %1685 = vmatprep.subr.mxu0 0.0
        %1686 = vmatpush1.xpose.msra.mxu0 0.0
        %1687 = vmatprep.subr.mxu0 0.0
        %1688 = vmatpush1.xpose.msra.mxu0 0.0
        %1689 = vmatprep.subr.mxu0 0.0
        %1690 = vmatpush1.xpose.msra.mxu0 0.0
        %1691 = vmatprep.subr.mxu0 0.0
        %1692 = vmatpush1.xpose.msra.mxu0 0.0
        %1693 = vmatprep.subr.mxu0 0.0
        %1694 = vmatpush1.xpose.msra.mxu0 0.0
        %1695 = vmatprep.subr.mxu0 0.0
        %1696 = vmatpush1.xpose.msra.mxu0 0.0
        %1697 = vmatprep.subr.mxu0 0.0
        %1698 = vmatpush1.xpose.msra.mxu0 0.0
        %1699 = vmatprep.subr.mxu0 0.0
        %1700 = vmatpush1.xpose.msra.mxu0 0.0
        %1701 = vmatprep.subr.mxu0 0.0
        %1702 = vmatpush1.xpose.msra.mxu0 0.0
        %1703 = vmatprep.subr.mxu0 0.0
        %1704 = vmatpush1.xpose.msra.mxu0 0.0
        %1705 = vmatprep.subr.mxu0 0.0
        %1706 = vmatpush1.xpose.msra.mxu0 0.0
        %1707 = vmatprep.subr.mxu0 0.0
        %1708 = vmatpush1.xpose.msra.mxu0 0.0
        %1709 = vmatprep.subr.mxu0 0.0
        %1710 = vmatpush1.xpose.msra.mxu0 0.0
        %1711 = vmatprep.subr.mxu0 0.0
        %1712 = vmatpush1.xpose.msra.mxu0 0.0
        %1713 = vmatprep.subr.mxu0 0.0
        %1714 = vmatpush1.xpose.msra.mxu0 0.0
        %1715 = vmatprep.subr.mxu0 0.0
        %1716 = vmatpush1.xpose.msra.mxu0 0.0
        %1717 = vmatprep.subr.mxu0 0.0
        %1718 = vmatpush1.xpose.msra.mxu0 0.0
        %1719 = vmatprep.subr.mxu0 0.0
        %1720 = vmatpush1.xpose.msra.mxu0 0.0
        %1721 = vmatprep.subr.mxu0 0.0
        %1722 = vmatpush1.xpose.msra.mxu0 0.0
        %1723 = vmatprep.subr.mxu0 0.0
        %1724 = vmatpush1.xpose.msra.mxu0 0.0
        %1725 = vmatprep.subr.mxu0 0.0
        %1726 = vmatpush1.xpose.msra.mxu0 0.0
        %1727 = vmatprep.subr.mxu0 0.0
        %1728 = vmatpush1.xpose.msra.mxu0 0.0
        %1729 = vmatprep.subr.mxu0 0.0
        %1730 = vmatpush1.xpose.msra.mxu0 0.0
        %1731 = vmatprep.subr.mxu0 0.0
        %1732 = vmatpush1.xpose.msra.mxu0 0.0
        %1733 = vmatprep.subr.mxu0 0.0
        %1734 = vmatpush1.xpose.msra.mxu0 0.0
        %1735 = vmatprep.subr.mxu0 0.0
        %1736 = vmatpush1.xpose.msra.mxu0 0.0
        %1737 = vmatprep.mubr.f32.mxu0 0.0
        %1738 = vmatmul.mubr.f32.gmra.mrb[0].mxu0 %v1668
        %v1739 = vpop.f32.mrb[0].mxu0
        %v1740 = vadd.f32 %v1263, %v1739
        %v1741 = vpop.f32.mrb[0].mxu0
        %1742 = vmatprep.mubr.f32.mxu0 0.0
        %1743 = vmatmul.mubr.f32.gmra.mrb[0].mxu0 %v1671
        %v1744 = vpop.f32.mrb[0].mxu0
        %v1745 = vadd.f32 %v1264, %v1744
        %v1746 = vpop.f32.mrb[0].mxu0
        %1747 = vdwg.mxu0
        %v1748 = vsel %vm1361, %v1740, -inf
        %1749 = vmax.xlane.f32.xlu0 %v1748
        %v1750 = vpop.xlane.xlu0 %1749
        %v1751 = vsel %vm1361, %v1745, -inf
        %1752 = vmax.xlane.f32.xlu0 %v1751
        %v1753 = vpop.xlane.xlu0 %1752
        %v1754 = vsub.f32 %v1740, %v1750
        %v1755 = vsub.f32 %v1745, %v1753
        %v1756 = vmul.f32 %v1754, 1.442695
        %v1757 = vpow.pop %v1756
        %v1758 = vmul.f32 %v1755, 1.442695
        %v1759 = vpow.pop %v1758
        %v1760 = vsel %vm1361, %v1757, 0.0
        %1761 = vadd.xlane.f32.xlu0 %v1760
        %v1762 = vpop.xlane.xlu0 %1761
        %v1763 = vsel %vm1361, %v1759, 0.0
        %1764 = vadd.xlane.f32.xlu0 %v1763
        %v1765 = vpop.xlane.xlu0 %1764
        %v1766 = vrcp.pop %v1762
        %v1767 = vmul.f32 %v1757, %v1766
        %v1768 = vrcp.pop %v1765
        %v1769 = vmul.f32 %v1759, %v1768
        %v1770 = vmul.f32 %v1255, %v1664
        %v1771 = vmul.f32 %v1260, %v1664
        %v1773 = vsel %vm1361, %v1767, 0
        %v1776 = vsel %vm1361, %v1769, 0
        %1778 = vmatprep.subr.mxu0 0.0
        %1779 = vmatpush1.msra.mxu0 %v1770
        %1780 = vmatprep.subr.mxu0 0.0
        %1781 = vmatpush1.msra.mxu0 %v1771
        %1782 = vmatprep.subr.mxu0 0.0
        %1783 = vmatpush1.msra.mxu0 0.0
        %1784 = vmatprep.subr.mxu0 0.0
        %1785 = vmatpush1.msra.mxu0 0.0
        %1786 = vmatprep.subr.mxu0 0.0
        %1787 = vmatpush1.msra.mxu0 0.0
        %1788 = vmatprep.subr.mxu0 0.0
        %1789 = vmatpush1.msra.mxu0 0.0
        %1790 = vmatprep.subr.mxu0 0.0
        %1791 = vmatpush1.msra.mxu0 0.0
        %1792 = vmatprep.subr.mxu0 0.0
        %1793 = vmatpush1.msra.mxu0 0.0
        %1794 = vmatprep.subr.mxu0 0.0
        %1795 = vmatpush1.msra.mxu0 0.0
        %1796 = vmatprep.subr.mxu0 0.0
        %1797 = vmatpush1.msra.mxu0 0.0
        %1798 = vmatprep.subr.mxu0 0.0
        %1799 = vmatpush1.msra.mxu0 0.0
        %1800 = vmatprep.subr.mxu0 0.0
        %1801 = vmatpush1.msra.mxu0 0.0
        %1802 = vmatprep.subr.mxu0 0.0
        %1803 = vmatpush1.msra.mxu0 0.0
        %1804 = vmatprep.subr.mxu0 0.0
        %1805 = vmatpush1.msra.mxu0 0.0
        %1806 = vmatprep.subr.mxu0 0.0
        %1807 = vmatpush1.msra.mxu0 0.0
        %1808 = vmatprep.subr.mxu0 0.0
        %1809 = vmatpush1.msra.mxu0 0.0
        %1810 = vmatprep.subr.mxu0 0.0
        %1811 = vmatpush1.msra.mxu0 0.0
        %1812 = vmatprep.subr.mxu0 0.0
        %1813 = vmatpush1.msra.mxu0 0.0
        %1814 = vmatprep.subr.mxu0 0.0
        %1815 = vmatpush1.msra.mxu0 0.0
        %1816 = vmatprep.subr.mxu0 0.0
        %1817 = vmatpush1.msra.mxu0 0.0
        %1818 = vmatprep.subr.mxu0 0.0
        %1819 = vmatpush1.msra.mxu0 0.0
        %1820 = vmatprep.subr.mxu0 0.0
        %1821 = vmatpush1.msra.mxu0 0.0
        %1822 = vmatprep.subr.mxu0 0.0
        %1823 = vmatpush1.msra.mxu0 0.0
        %1824 = vmatprep.subr.mxu0 0.0
        %1825 = vmatpush1.msra.mxu0 0.0
        %1826 = vmatprep.subr.mxu0 0.0
        %1827 = vmatpush1.msra.mxu0 0.0
        %1828 = vmatprep.subr.mxu0 0.0
        %1829 = vmatpush1.msra.mxu0 0.0
        %1830 = vmatprep.subr.mxu0 0.0
        %1831 = vmatpush1.msra.mxu0 0.0
        %1832 = vmatprep.subr.mxu0 0.0
        %1833 = vmatpush1.msra.mxu0 0.0
        %1834 = vmatprep.subr.mxu0 0.0
        %1835 = vmatpush1.msra.mxu0 0.0
        %1836 = vmatprep.subr.mxu0 0.0
        %1837 = vmatpush1.msra.mxu0 0.0
        %1838 = vmatprep.subr.mxu0 0.0
        %1839 = vmatpush1.msra.mxu0 0.0
        %1840 = vmatprep.subr.mxu0 0.0
        %1841 = vmatpush1.msra.mxu0 0.0
        %1842 = vmatprep.mubr.f32.mxu0 0.0
        %1843 = vmatmul.mubr.f32.gmra.mrb[0].mxu0 %v1773
        %v1844 = vpop.f32.mrb[0].mxu0
        %v1845 = vadd.f32 0.0, %v1844
        %v1846 = vpop.f32.mrb[0].mxu0
        %1847 = vmatprep.mubr.f32.mxu0 0.0
        %1848 = vmatmul.mubr.f32.gmra.mrb[0].mxu0 %v1776
        %v1849 = vpop.f32.mrb[0].mxu0
        %v1850 = vadd.f32 0.0, %v1849
        %v1851 = vpop.f32.mrb[0].mxu0
        %1852 = vdwg.mxu0
        %v1853 = vadd.f32 %v1652, %v1845
        %v1854 = vadd.f32 %v1657, %v1850
        %vm1855 = vcmp.ge.s32.totalorder %v1266, 24
        %vm1856 = vcmp.lt.s32.totalorder %v1266, 32
        %vm1857 = vmand %vm1855, %vm1856
        %v1858 = vsel %vm1857, 1, 0
        %v1859 = vcvt.s32.f32 %v1858
        %v1860 = vmul.f32 %v1089, %v1859
        %v1861 = vmul.f32 %v1090, %v1859
        %v1863 = vsel %vm953, %v1860, 0
        %v1866 = vsel %vm953, %v1861, 0
        %1868 = vmatprep.subr.mxu0 0.0
        %1869 = vmatpush1.xpose.msra.mxu0 %v1281
        %1870 = vmatprep.subr.mxu0 0.0
        %1871 = vmatpush1.xpose.msra.mxu0 %v1284
        %1872 = vmatprep.subr.mxu0 0.0
        %1873 = vmatpush1.xpose.msra.mxu0 0.0
        %1874 = vmatprep.subr.mxu0 0.0
        %1875 = vmatpush1.xpose.msra.mxu0 0.0
        %1876 = vmatprep.subr.mxu0 0.0
        %1877 = vmatpush1.xpose.msra.mxu0 0.0
        %1878 = vmatprep.subr.mxu0 0.0
        %1879 = vmatpush1.xpose.msra.mxu0 0.0
        %1880 = vmatprep.subr.mxu0 0.0
        %1881 = vmatpush1.xpose.msra.mxu0 0.0
        %1882 = vmatprep.subr.mxu0 0.0
        %1883 = vmatpush1.xpose.msra.mxu0 0.0
        %1884 = vmatprep.subr.mxu0 0.0
        %1885 = vmatpush1.xpose.msra.mxu0 0.0
        %1886 = vmatprep.subr.mxu0 0.0
        %1887 = vmatpush1.xpose.msra.mxu0 0.0
        %1888 = vmatprep.subr.mxu0 0.0
        %1889 = vmatpush1.xpose.msra.mxu0 0.0
        %1890 = vmatprep.subr.mxu0 0.0
        %1891 = vmatpush1.xpose.msra.mxu0 0.0
        %1892 = vmatprep.subr.mxu0 0.0
        %1893 = vmatpush1.xpose.msra.mxu0 0.0
        %1894 = vmatprep.subr.mxu0 0.0
        %1895 = vmatpush1.xpose.msra.mxu0 0.0
        %1896 = vmatprep.subr.mxu0 0.0
        %1897 = vmatpush1.xpose.msra.mxu0 0.0
        %1898 = vmatprep.subr.mxu0 0.0
        %1899 = vmatpush1.xpose.msra.mxu0 0.0
        %1900 = vmatprep.subr.mxu0 0.0
        %1901 = vmatpush1.xpose.msra.mxu0 0.0
        %1902 = vmatprep.subr.mxu0 0.0
        %1903 = vmatpush1.xpose.msra.mxu0 0.0
        %1904 = vmatprep.subr.mxu0 0.0
        %1905 = vmatpush1.xpose.msra.mxu0 0.0
        %1906 = vmatprep.subr.mxu0 0.0
        %1907 = vmatpush1.xpose.msra.mxu0 0.0
        %1908 = vmatprep.subr.mxu0 0.0
        %1909 = vmatpush1.xpose.msra.mxu0 0.0
        %1910 = vmatprep.subr.mxu0 0.0
        %1911 = vmatpush1.xpose.msra.mxu0 0.0
        %1912 = vmatprep.subr.mxu0 0.0
        %1913 = vmatpush1.xpose.msra.mxu0 0.0
        %1914 = vmatprep.subr.mxu0 0.0
        %1915 = vmatpush1.xpose.msra.mxu0 0.0
        %1916 = vmatprep.subr.mxu0 0.0
        %1917 = vmatpush1.xpose.msra.mxu0 0.0
        %1918 = vmatprep.subr.mxu0 0.0
        %1919 = vmatpush1.xpose.msra.mxu0 0.0
        %1920 = vmatprep.subr.mxu0 0.0
        %1921 = vmatpush1.xpose.msra.mxu0 0.0
        %1922 = vmatprep.subr.mxu0 0.0
        %1923 = vmatpush1.xpose.msra.mxu0 0.0
        %1924 = vmatprep.subr.mxu0 0.0
        %1925 = vmatpush1.xpose.msra.mxu0 0.0
        %1926 = vmatprep.subr.mxu0 0.0
        %1927 = vmatpush1.xpose.msra.mxu0 0.0
        %1928 = vmatprep.subr.mxu0 0.0
        %1929 = vmatpush1.xpose.msra.mxu0 0.0
        %1930 = vmatprep.subr.mxu0 0.0
        %1931 = vmatpush1.xpose.msra.mxu0 0.0
        %1932 = vmatprep.mubr.f32.mxu0 0.0
        %1933 = vmatmul.mubr.f32.gmra.mrb[0].mxu0 %v1863
        %v1934 = vpop.f32.mrb[0].mxu0
        %v1935 = vadd.f32 %v1263, %v1934
        %v1936 = vpop.f32.mrb[0].mxu0
        %1937 = vmatprep.mubr.f32.mxu0 0.0
        %1938 = vmatmul.mubr.f32.gmra.mrb[0].mxu0 %v1866
        %v1939 = vpop.f32.mrb[0].mxu0
        %v1940 = vadd.f32 %v1264, %v1939
        %v1941 = vpop.f32.mrb[0].mxu0
        %1942 = vdwg.mxu0
        %v1943 = vsel %vm1361, %v1935, -inf
        %1944 = vmax.xlane.f32.xlu0 %v1943
        %v1945 = vpop.xlane.xlu0 %1944
        %v1946 = vsel %vm1361, %v1940, -inf
        %1947 = vmax.xlane.f32.xlu0 %v1946
        %v1948 = vpop.xlane.xlu0 %1947
        %v1949 = vsub.f32 %v1935, %v1945
        %v1950 = vsub.f32 %v1940, %v1948
        %v1951 = vmul.f32 %v1949, 1.442695
        %v1952 = vpow.pop %v1951
        %v1953 = vmul.f32 %v1950, 1.442695
        %v1954 = vpow.pop %v1953
        %v1955 = vsel %vm1361, %v1952, 0.0
        %1956 = vadd.xlane.f32.xlu0 %v1955
        %v1957 = vpop.xlane.xlu0 %1956
        %v1958 = vsel %vm1361, %v1954, 0.0
        %1959 = vadd.xlane.f32.xlu0 %v1958
        %v1960 = vpop.xlane.xlu0 %1959
        %v1961 = vrcp.pop %v1957
        %v1962 = vmul.f32 %v1952, %v1961
        %v1963 = vrcp.pop %v1960
        %v1964 = vmul.f32 %v1954, %v1963
        %v1965 = vmul.f32 %v1255, %v1859
        %v1966 = vmul.f32 %v1260, %v1859
        %v1968 = vsel %vm1361, %v1962, 0
        %v1971 = vsel %vm1361, %v1964, 0
        %1973 = vmatprep.subr.mxu0 0.0
        %1974 = vmatpush1.msra.mxu0 %v1965
        %1975 = vmatprep.subr.mxu0 0.0
        %1976 = vmatpush1.msra.mxu0 %v1966
        %1977 = vmatprep.subr.mxu0 0.0
        %1978 = vmatpush1.msra.mxu0 0.0
        %1979 = vmatprep.subr.mxu0 0.0
        %1980 = vmatpush1.msra.mxu0 0.0
        %1981 = vmatprep.subr.mxu0 0.0
        %1982 = vmatpush1.msra.mxu0 0.0
        %1983 = vmatprep.subr.mxu0 0.0
        %1984 = vmatpush1.msra.mxu0 0.0
        %1985 = vmatprep.subr.mxu0 0.0
        %1986 = vmatpush1.msra.mxu0 0.0
        %1987 = vmatprep.subr.mxu0 0.0
        %1988 = vmatpush1.msra.mxu0 0.0
        %1989 = vmatprep.subr.mxu0 0.0
        %1990 = vmatpush1.msra.mxu0 0.0
        %1991 = vmatprep.subr.mxu0 0.0
        %1992 = vmatpush1.msra.mxu0 0.0
        %1993 = vmatprep.subr.mxu0 0.0
        %1994 = vmatpush1.msra.mxu0 0.0
        %1995 = vmatprep.subr.mxu0 0.0
        %1996 = vmatpush1.msra.mxu0 0.0
        %1997 = vmatprep.subr.mxu0 0.0
        %1998 = vmatpush1.msra.mxu0 0.0
        %1999 = vmatprep.subr.mxu0 0.0
        %2000 = vmatpush1.msra.mxu0 0.0
        %2001 = vmatprep.subr.mxu0 0.0
        %2002 = vmatpush1.msra.mxu0 0.0
        %2003 = vmatprep.subr.mxu0 0.0
        %2004 = vmatpush1.msra.mxu0 0.0
        %2005 = vmatprep.subr.mxu0 0.0
        %2006 = vmatpush1.msra.mxu0 0.0
        %2007 = vmatprep.subr.mxu0 0.0
        %2008 = vmatpush1.msra.mxu0 0.0
        %2009 = vmatprep.subr.mxu0 0.0
        %2010 = vmatpush1.msra.mxu0 0.0
        %2011 = vmatprep.subr.mxu0 0.0
        %2012 = vmatpush1.msra.mxu0 0.0
        %2013 = vmatprep.subr.mxu0 0.0
        %2014 = vmatpush1.msra.mxu0 0.0
        %2015 = vmatprep.subr.mxu0 0.0
        %2016 = vmatpush1.msra.mxu0 0.0
        %2017 = vmatprep.subr.mxu0 0.0
        %2018 = vmatpush1.msra.mxu0 0.0
        %2019 = vmatprep.subr.mxu0 0.0
        %2020 = vmatpush1.msra.mxu0 0.0
        %2021 = vmatprep.subr.mxu0 0.0
        %2022 = vmatpush1.msra.mxu0 0.0
        %2023 = vmatprep.subr.mxu0 0.0
        %2024 = vmatpush1.msra.mxu0 0.0
        %2025 = vmatprep.subr.mxu0 0.0
        %2026 = vmatpush1.msra.mxu0 0.0
        %2027 = vmatprep.subr.mxu0 0.0
        %2028 = vmatpush1.msra.mxu0 0.0
        %2029 = vmatprep.subr.mxu0 0.0
        %2030 = vmatpush1.msra.mxu0 0.0
        %2031 = vmatprep.subr.mxu0 0.0
        %2032 = vmatpush1.msra.mxu0 0.0
        %2033 = vmatprep.subr.mxu0 0.0
        %2034 = vmatpush1.msra.mxu0 0.0
        %2035 = vmatprep.subr.mxu0 0.0
        %2036 = vmatpush1.msra.mxu0 0.0
        %2037 = vmatprep.mubr.f32.mxu0 0.0
        %2038 = vmatmul.mubr.f32.gmra.mrb[0].mxu0 %v1968
        %v2039 = vpop.f32.mrb[0].mxu0
        %v2040 = vadd.f32 0.0, %v2039
        %v2041 = vpop.f32.mrb[0].mxu0
        %2042 = vmatprep.mubr.f32.mxu0 0.0
        %2043 = vmatmul.mubr.f32.gmra.mrb[0].mxu0 %v1971
        %v2044 = vpop.f32.mrb[0].mxu0
        %v2045 = vadd.f32 0.0, %v2044
        %v2046 = vpop.f32.mrb[0].mxu0
        %2047 = vdwg.mxu0
        %v2048 = vadd.f32 %v1853, %v2040
        %v2049 = vadd.f32 %v1854, %v2045
        %v2050 = vld [vmem:[%s911] sm:$0xff]
        %v2051 = vld [vmem:[%s911 + $0x8] sm:$0xff]
        %v2052 = vld [vmem:[%s911 + $0x10] sm:$0xff]
        %v2053 = vld [vmem:[%s911 + $0x18] sm:$0xff]
        %v2054 = vld [vmem:[%s914] sm:$0x1]
        %v2056 = vlaneseq
        %v2057 = vshrl.u32 %v2056, 7
        %v2058 = vsub.s32 0, %v2057
        %v2059 = vrot.slane %v2054, %v2058
        %v2062 = vsel %vm953, %v2048, 0
        %v2065 = vsel %vm953, %v2049, 0
        %2067 = vmatprep.subr.mxu0 0.0
        %2068 = vmatpush1.msra.mxu0 %v2050
        %2069 = vmatprep.subr.mxu0 0.0
        %2070 = vmatpush1.msra.mxu0 %v2051
        %2071 = vmatprep.subr.mxu0 0.0
        %2072 = vmatpush1.msra.mxu0 %v2052
        %2073 = vmatprep.subr.mxu0 0.0
        %2074 = vmatpush1.msra.mxu0 %v2053
        %2075 = vmatprep.subr.mxu0 0.0
        %2076 = vmatpush1.msra.mxu0 0.0
        %2077 = vmatprep.subr.mxu0 0.0
        %2078 = vmatpush1.msra.mxu0 0.0
        %2079 = vmatprep.subr.mxu0 0.0
        %2080 = vmatpush1.msra.mxu0 0.0
        %2081 = vmatprep.subr.mxu0 0.0
        %2082 = vmatpush1.msra.mxu0 0.0
        %2083 = vmatprep.subr.mxu0 0.0
        %2084 = vmatpush1.msra.mxu0 0.0
        %2085 = vmatprep.subr.mxu0 0.0
        %2086 = vmatpush1.msra.mxu0 0.0
        %2087 = vmatprep.subr.mxu0 0.0
        %2088 = vmatpush1.msra.mxu0 0.0
        %2089 = vmatprep.subr.mxu0 0.0
        %2090 = vmatpush1.msra.mxu0 0.0
        %2091 = vmatprep.subr.mxu0 0.0
        %2092 = vmatpush1.msra.mxu0 0.0
        %2093 = vmatprep.subr.mxu0 0.0
        %2094 = vmatpush1.msra.mxu0 0.0
        %2095 = vmatprep.subr.mxu0 0.0
        %2096 = vmatpush1.msra.mxu0 0.0
        %2097 = vmatprep.subr.mxu0 0.0
        %2098 = vmatpush1.msra.mxu0 0.0
        %2099 = vmatprep.subr.mxu0 0.0
        %2100 = vmatpush1.msra.mxu0 0.0
        %2101 = vmatprep.subr.mxu0 0.0
        %2102 = vmatpush1.msra.mxu0 0.0
        %2103 = vmatprep.subr.mxu0 0.0
        %2104 = vmatpush1.msra.mxu0 0.0
        %2105 = vmatprep.subr.mxu0 0.0
        %2106 = vmatpush1.msra.mxu0 0.0
        %2107 = vmatprep.subr.mxu0 0.0
        %2108 = vmatpush1.msra.mxu0 0.0
        %2109 = vmatprep.subr.mxu0 0.0
        %2110 = vmatpush1.msra.mxu0 0.0
        %2111 = vmatprep.subr.mxu0 0.0
        %2112 = vmatpush1.msra.mxu0 0.0
        %2113 = vmatprep.subr.mxu0 0.0
        %2114 = vmatpush1.msra.mxu0 0.0
        %2115 = vmatprep.subr.mxu0 0.0
        %2116 = vmatpush1.msra.mxu0 0.0
        %2117 = vmatprep.subr.mxu0 0.0
        %2118 = vmatpush1.msra.mxu0 0.0
        %2119 = vmatprep.subr.mxu0 0.0
        %2120 = vmatpush1.msra.mxu0 0.0
        %2121 = vmatprep.subr.mxu0 0.0
        %2122 = vmatpush1.msra.mxu0 0.0
        %2123 = vmatprep.subr.mxu0 0.0
        %2124 = vmatpush1.msra.mxu0 0.0
        %2125 = vmatprep.subr.mxu0 0.0
        %2126 = vmatpush1.msra.mxu0 0.0
        %2127 = vmatprep.subr.mxu0 0.0
        %2128 = vmatpush1.msra.mxu0 0.0
        %2129 = vmatprep.subr.mxu0 0.0
        %2130 = vmatpush1.msra.mxu0 0.0
        %2131 = vmatprep.mubr.f32.mxu0 0.0
        %2132 = vmatmul.mubr.f32.gmra.mrb[0].mxu0 %v2062
        %v2133 = vpop.f32.mrb[0].mxu0
        %v2134 = vadd.f32 %v2059, %v2133
        %v2135 = vpop.f32.mrb[0].mxu0
        %2136 = vmatprep.mubr.f32.mxu0 0.0
        %2137 = vmatmul.mubr.f32.gmra.mrb[0].mxu0 %v2065
        %v2138 = vpop.f32.mrb[0].mxu0
        %v2139 = vadd.f32 %v2059, %v2138
        %v2140 = vpop.f32.mrb[0].mxu0
        %2141 = vdwg.mxu0
        %v2142 = vadd.f32 %v949, %v2134
        %v2143 = vadd.f32 %v950, %v2139
        %v2144 = vld [vmem:[%s917] sm:$0x1]
        %v2145 = vld [vmem:[%s920] sm:$0x1]
        %v2146 = vsel %vm953, %v2142, 0.0
        %2147 = vadd.xlane.f32.xlu0 %v2146
        %v2148 = vpop.xlane.xlu0 %2147
        %v2149 = vsel %vm953, %v2143, 0.0
        %2150 = vadd.xlane.f32.xlu0 %v2149
        %v2151 = vpop.xlane.xlu0 %2150
        %v2152 = vmul.f32 %v2148, %v960
        %v2153 = vmul.f32 %v2151, %v960
        %v2154 = vsub.f32 %v2142, %v2152
        %v2155 = vsub.f32 %v2143, %v2153
        %v2156 = vmul.f32 %v2154, %v2154
        %v2157 = vmul.f32 %v2155, %v2155
        %v2158 = vsel %vm953, %v2156, 0.0
        %2159 = vadd.xlane.f32.xlu0 %v2158
        %v2160 = vpop.xlane.xlu0 %2159
        %v2161 = vsel %vm953, %v2157, 0.0
        %2162 = vadd.xlane.f32.xlu0 %v2161
        %v2163 = vpop.xlane.xlu0 %2162
        %v2164 = vmul.f32 %v2160, %v960
        %v2165 = vmul.f32 %v2163, %v960
        %v2166 = vadd.f32 %v2164, 1e-05
        %v2167 = vadd.f32 %v2165, 1e-05
        %v2168 = vrsqrt.pop %v2166
        %v2169 = vrsqrt.pop %v2167
        %v2170 = vmul.f32 %v2154, %v2168
        %v2171 = vmul.f32 %v2155, %v2169
        %v2173 = vlaneseq
        %v2174 = vshrl.u32 %v2173, 7
        %v2175 = vsub.s32 0, %v2174
        %v2176 = vrot.slane %v2144, %v2175
        %v2178 = vmul.f32 %v2170, %v2176
        %v2179 = vmul.f32 %v2171, %v2176
        %v2181 = vlaneseq
        %v2182 = vshrl.u32 %v2181, 7
        %v2183 = vsub.s32 0, %v2182
        %v2184 = vrot.slane %v2145, %v2183
        %v2186 = vadd.f32 %v2178, %v2184
        %v2187 = vadd.f32 %v2179, %v2184
        %v2188 = vld [vmem:[%s925] sm:$0xff]
        %v2189 = vld [vmem:[%s925 + $0x8] sm:$0xff]
        %v2190 = vld [vmem:[%s925 + $0x10] sm:$0xff]
        %v2191 = vld [vmem:[%s925 + $0x18] sm:$0xff]
        %v2192 = vld [vmem:[%s928] sm:$0x1]
        %v2194 = vlaneseq
        %v2195 = vshrl.u32 %v2194, 7
        %v2196 = vsub.s32 0, %v2195
        %v2197 = vrot.slane %v2192, %v2196
        %v2200 = vsel %vm953, %v2186, 0
        %v2203 = vsel %vm953, %v2187, 0
        %2205 = vmatprep.subr.mxu0 0.0
        %2206 = vmatpush1.msra.mxu0 %v2188
        %2207 = vmatprep.subr.mxu0 0.0
        %2208 = vmatpush1.msra.mxu0 %v2189
        %2209 = vmatprep.subr.mxu0 0.0
        %2210 = vmatpush1.msra.mxu0 %v2190
        %2211 = vmatprep.subr.mxu0 0.0
        %2212 = vmatpush1.msra.mxu0 %v2191
        %2213 = vmatprep.subr.mxu0 0.0
        %2214 = vmatpush1.msra.mxu0 0.0
        %2215 = vmatprep.subr.mxu0 0.0
        %2216 = vmatpush1.msra.mxu0 0.0
        %2217 = vmatprep.subr.mxu0 0.0
        %2218 = vmatpush1.msra.mxu0 0.0
        %2219 = vmatprep.subr.mxu0 0.0
        %2220 = vmatpush1.msra.mxu0 0.0
        %2221 = vmatprep.subr.mxu0 0.0
        %2222 = vmatpush1.msra.mxu0 0.0
        %2223 = vmatprep.subr.mxu0 0.0
        %2224 = vmatpush1.msra.mxu0 0.0
        %2225 = vmatprep.subr.mxu0 0.0
        %2226 = vmatpush1.msra.mxu0 0.0
        %2227 = vmatprep.subr.mxu0 0.0
        %2228 = vmatpush1.msra.mxu0 0.0
        %2229 = vmatprep.subr.mxu0 0.0
        %2230 = vmatpush1.msra.mxu0 0.0
        %2231 = vmatprep.subr.mxu0 0.0
        %2232 = vmatpush1.msra.mxu0 0.0
        %2233 = vmatprep.subr.mxu0 0.0
        %2234 = vmatpush1.msra.mxu0 0.0
        %2235 = vmatprep.subr.mxu0 0.0
        %2236 = vmatpush1.msra.mxu0 0.0
        %2237 = vmatprep.subr.mxu0 0.0
        %2238 = vmatpush1.msra.mxu0 0.0
        %2239 = vmatprep.subr.mxu0 0.0
        %2240 = vmatpush1.msra.mxu0 0.0
        %2241 = vmatprep.subr.mxu0 0.0
        %2242 = vmatpush1.msra.mxu0 0.0
        %2243 = vmatprep.subr.mxu0 0.0
        %2244 = vmatpush1.msra.mxu0 0.0
        %2245 = vmatprep.subr.mxu0 0.0
        %2246 = vmatpush1.msra.mxu0 0.0
        %2247 = vmatprep.subr.mxu0 0.0
        %2248 = vmatpush1.msra.mxu0 0.0
        %2249 = vmatprep.subr.mxu0 0.0
        %2250 = vmatpush1.msra.mxu0 0.0
        %2251 = vmatprep.subr.mxu0 0.0
        %2252 = vmatpush1.msra.mxu0 0.0
        %2253 = vmatprep.subr.mxu0 0.0
        %2254 = vmatpush1.msra.mxu0 0.0
        %2255 = vmatprep.subr.mxu0 0.0
        %2256 = vmatpush1.msra.mxu0 0.0
        %2257 = vmatprep.subr.mxu0 0.0
        %2258 = vmatpush1.msra.mxu0 0.0
        %2259 = vmatprep.subr.mxu0 0.0
        %2260 = vmatpush1.msra.mxu0 0.0
        %2261 = vmatprep.subr.mxu0 0.0
        %2262 = vmatpush1.msra.mxu0 0.0
        %2263 = vmatprep.subr.mxu0 0.0
        %2264 = vmatpush1.msra.mxu0 0.0
        %2265 = vmatprep.subr.mxu0 0.0
        %2266 = vmatpush1.msra.mxu0 0.0
        %2267 = vmatprep.subr.mxu0 0.0
        %2268 = vmatpush1.msra.mxu0 0.0
        %2269 = vmatprep.mubr.f32.mxu0 0.0
        %2270 = vmatmul.mubr.f32.gmra.mrb[0].mxu0 %v2200
        %v2271 = vpop.f32.mrb[0].mxu0
        %v2272 = vadd.f32 %v2197, %v2271
        %v2273 = vpop.f32.mrb[0].mxu0
        %2274 = vmatprep.mubr.f32.mxu0 0.0
        %2275 = vmatmul.mubr.f32.gmra.mrb[0].mxu0 %v2203
        %v2276 = vpop.f32.mrb[0].mxu0
        %v2277 = vadd.f32 %v2197, %v2276
        %v2278 = vpop.f32.mrb[0].mxu0
        %2279 = vdwg.mxu0
        %v2280 = vmul.f32 %v2272, 1.702
        %v2281 = vmul.f32 %v2277, 1.702
        %v2282 = vxor.u32 %v2280, 2147483648
        %v2283 = vxor.u32 %v2281, 2147483648
        %v2284 = vmul.f32 %v2282, 1.442695
        %v2285 = vpow.pop %v2284
        %v2286 = vmul.f32 %v2283, 1.442695
        %v2287 = vpow.pop %v2286
        %v2288 = vadd.f32 %v2285, 1.0
        %v2289 = vadd.f32 %v2287, 1.0
        %v2290 = vrcp.pop %v2288
        %v2291 = vmul.f32 1.0, %v2290
        %v2292 = vrcp.pop %v2289
        %v2293 = vmul.f32 1.0, %v2292
        %v2294 = vmul.f32 %v2272, %v2291
        %v2295 = vmul.f32 %v2277, %v2293
        %v2296 = vld [vmem:[%s933] sm:$0xff]
        %v2297 = vld [vmem:[%s933 + $0x8] sm:$0xff]
        %v2298 = vld [vmem:[%s933 + $0x10] sm:$0xff]
        %v2299 = vld [vmem:[%s933 + $0x18] sm:$0xff]
        %v2300 = vld [vmem:[%s933 + $0x20] sm:$0xff]
        %v2301 = vld [vmem:[%s933 + $0x28] sm:$0xff]
        %v2302 = vld [vmem:[%s933 + $0x30] sm:$0xff]
        %v2303 = vld [vmem:[%s933 + $0x38] sm:$0xff]
        %v2304 = vld [vmem:[%s933 + $0x40] sm:$0xff]
        %v2305 = vld [vmem:[%s933 + $0x48] sm:$0xff]
        %v2306 = vld [vmem:[%s933 + $0x50] sm:$0xff]
        %v2307 = vld [vmem:[%s933 + $0x58] sm:$0xff]
        %v2308 = vld [vmem:[%s933 + $0x60] sm:$0xff]
        %v2309 = vld [vmem:[%s933 + $0x68] sm:$0xff]
        %v2310 = vld [vmem:[%s933 + $0x70] sm:$0xff]
        %v2311 = vld [vmem:[%s933 + $0x78] sm:$0xff]
        %2312 = vmatprep.subr.mxu0 0.0
        %2313 = vmatpush1.msra.mxu0 %v2296
        %2314 = vmatprep.subr.mxu0 0.0
        %2315 = vmatpush1.msra.mxu0 %v2297
        %2316 = vmatprep.subr.mxu0 0.0
        %2317 = vmatpush1.msra.mxu0 %v2298
        %2318 = vmatprep.subr.mxu0 0.0
        %2319 = vmatpush1.msra.mxu0 %v2299
        %2320 = vmatprep.subr.mxu0 0.0
        %2321 = vmatpush1.msra.mxu0 %v2300
        %2322 = vmatprep.subr.mxu0 0.0
        %2323 = vmatpush1.msra.mxu0 %v2301
        %2324 = vmatprep.subr.mxu0 0.0
        %2325 = vmatpush1.msra.mxu0 %v2302
        %2326 = vmatprep.subr.mxu0 0.0
        %2327 = vmatpush1.msra.mxu0 %v2303
        %2328 = vmatprep.subr.mxu0 0.0
        %2329 = vmatpush1.msra.mxu0 %v2304
        %2330 = vmatprep.subr.mxu0 0.0
        %2331 = vmatpush1.msra.mxu0 %v2305
        %2332 = vmatprep.subr.mxu0 0.0
        %2333 = vmatpush1.msra.mxu0 %v2306
        %2334 = vmatprep.subr.mxu0 0.0
        %2335 = vmatpush1.msra.mxu0 %v2307
        %2336 = vmatprep.subr.mxu0 0.0
        %2337 = vmatpush1.msra.mxu0 %v2308
        %2338 = vmatprep.subr.mxu0 0.0
        %2339 = vmatpush1.msra.mxu0 %v2309
        %2340 = vmatprep.subr.mxu0 0.0
        %2341 = vmatpush1.msra.mxu0 %v2310
        %2342 = vmatprep.subr.mxu0 0.0
        %2343 = vmatpush1.msra.mxu0 %v2311
        %2344 = vmatprep.subr.mxu0 0.0
        %2345 = vmatpush1.msra.mxu0 0.0
        %2346 = vmatprep.subr.mxu0 0.0
        %2347 = vmatpush1.msra.mxu0 0.0
        %2348 = vmatprep.subr.mxu0 0.0
        %2349 = vmatpush1.msra.mxu0 0.0
        %2350 = vmatprep.subr.mxu0 0.0
        %2351 = vmatpush1.msra.mxu0 0.0
        %2352 = vmatprep.subr.mxu0 0.0
        %2353 = vmatpush1.msra.mxu0 0.0
        %2354 = vmatprep.subr.mxu0 0.0
        %2355 = vmatpush1.msra.mxu0 0.0
        %2356 = vmatprep.subr.mxu0 0.0
        %2357 = vmatpush1.msra.mxu0 0.0
        %2358 = vmatprep.subr.mxu0 0.0
        %2359 = vmatpush1.msra.mxu0 0.0
        %2360 = vmatprep.subr.mxu0 0.0
        %2361 = vmatpush1.msra.mxu0 0.0
        %2362 = vmatprep.subr.mxu0 0.0
        %2363 = vmatpush1.msra.mxu0 0.0
        %2364 = vmatprep.subr.mxu0 0.0
        %2365 = vmatpush1.msra.mxu0 0.0
        %2366 = vmatprep.subr.mxu0 0.0
        %2367 = vmatpush1.msra.mxu0 0.0
        %2368 = vmatprep.subr.mxu0 0.0
        %2369 = vmatpush1.msra.mxu0 0.0
        %2370 = vmatprep.subr.mxu0 0.0
        %2371 = vmatpush1.msra.mxu0 0.0
        %2372 = vmatprep.subr.mxu0 0.0
        %2373 = vmatpush1.msra.mxu0 0.0
        %2374 = vmatprep.subr.mxu0 0.0
        %2375 = vmatpush1.msra.mxu0 0.0
        %2376 = vmatprep.mubr.f32.mxu0 0.0
        %2377 = vmatmul.mubr.f32.gmra.mrb[0].mxu0 %v2294
        %v2378 = vpop.f32.mrb[0].mxu0
        %v2379 = vadd.f32 0.0, %v2378
        %v2380 = vpop.f32.mrb[0].mxu0
        %2381 = vmatprep.mubr.f32.mxu0 0.0
        %2382 = vmatmul.mubr.f32.gmra.mrb[0].mxu0 %v2295
        %v2383 = vpop.f32.mrb[0].mxu0
        %v2384 = vadd.f32 0.0, %v2383
        %v2385 = vpop.f32.mrb[0].mxu0
        %2386 = vdwg.mxu0
        %v2387 = vadd.f32 %v2142, %v2379
        %v2388 = vadd.f32 %v2143, %v2384
        %v2389 = vld [vmem:[%s936] sm:$0x1]
        %v2391 = vlaneseq
        %v2392 = vshrl.u32 %v2391, 7
        %v2393 = vsub.s32 0, %v2392
        %v2394 = vrot.slane %v2389, %v2393
        %v2396 = vadd.f32 %v2387, %v2394
        %v2397 = vadd.f32 %v2388, %v2394
        %2398 = vst.msk [vmem:[#allocation2] sm:$0xff] %vm953, %v2396
        %2399 = vst.msk [vmem:[#allocation2 + $0x8] sm:$0xff] %vm953, %v2397
        %p2400 = scmp.eq.s32.totalorder %s35, 1
        // Predicated region
        $region117: #{text_encoder_forward.1} parent=111 // pred_check
          %p2401 = pneg %p2400
        $region118: #{text_encoder_forward.1} parent=111 // pred_check_branch
          %2403 = sbr.rel (%p2401) target = $region120
        $region119: #{text_encoder_forward.1} parent=111 // pred_region
          %v2404 = vld [vmem:[%s3] sm:$0x3]
          %v2406 = vsel %vm1361, %v2404, 0
          %2408 = vmatprep.subr.mxu0 0.0
          %2409 = vmatpush1.msra.mxu0 %v2396
          %2410 = vmatprep.subr.mxu0 0.0
          %2411 = vmatpush1.msra.mxu0 %v2397
          %2412 = vmatprep.subr.mxu0 0.0
          %2413 = vmatpush1.msra.mxu0 0.0
          %2414 = vmatprep.subr.mxu0 0.0
          %2415 = vmatpush1.msra.mxu0 0.0
          %2416 = vmatprep.subr.mxu0 0.0
          %2417 = vmatpush1.msra.mxu0 0.0
          %2418 = vmatprep.subr.mxu0 0.0
          %2419 = vmatpush1.msra.mxu0 0.0
          %2420 = vmatprep.subr.mxu0 0.0
          %2421 = vmatpush1.msra.mxu0 0.0
          %2422 = vmatprep.subr.mxu0 0.0
          %2423 = vmatpush1.msra.mxu0 0.0
          %2424 = vmatprep.subr.mxu0 0.0
          %2425 = vmatpush1.msra.mxu0 0.0
          %2426 = vmatprep.subr.mxu0 0.0
          %2427 = vmatpush1.msra.mxu0 0.0
          %2428 = vmatprep.subr.mxu0 0.0
          %2429 = vmatpush1.msra.mxu0 0.0
          %2430 = vmatprep.subr.mxu0 0.0
          %2431 = vmatpush1.msra.mxu0 0.0
          %2432 = vmatprep.subr.mxu0 0.0
          %2433 = vmatpush1.msra.mxu0 0.0
          %2434 = vmatprep.subr.mxu0 0.0
          %2435 = vmatpush1.msra.mxu0 0.0
          %2436 = vmatprep.subr.mxu0 0.0
          %2437 = vmatpush1.msra.mxu0 0.0
          %2438 = vmatprep.subr.mxu0 0.0
          %2439 = vmatpush1.msra.mxu0 0.0
          %2440 = vmatprep.subr.mxu0 0.0
          %2441 = vmatpush1.msra.mxu0 0.0
          %2442 = vmatprep.subr.mxu0 0.0
          %2443 = vmatpush1.msra.mxu0 0.0
          %2444 = vmatprep.subr.mxu0 0.0
          %2445 = vmatpush1.msra.mxu0 0.0
          %2446 = vmatprep.subr.mxu0 0.0
          %2447 = vmatpush1.msra.mxu0 0.0
          %2448 = vmatprep.subr.mxu0 0.0
          %2449 = vmatpush1.msra.mxu0 0.0
          %2450 = vmatprep.subr.mxu0 0.0
          %2451 = vmatpush1.msra.mxu0 0.0
          %2452 = vmatprep.subr.mxu0 0.0
          %2453 = vmatpush1.msra.mxu0 0.0
          %2454 = vmatprep.subr.mxu0 0.0
          %2455 = vmatpush1.msra.mxu0 0.0
          %2456 = vmatprep.subr.mxu0 0.0
          %2457 = vmatpush1.msra.mxu0 0.0
          %2458 = vmatprep.subr.mxu0 0.0
          %2459 = vmatpush1.msra.mxu0 0.0
          %2460 = vmatprep.subr.mxu0 0.0
          %2461 = vmatpush1.msra.mxu0 0.0
          %2462 = vmatprep.subr.mxu0 0.0
          %2463 = vmatpush1.msra.mxu0 0.0
          %2464 = vmatprep.subr.mxu0 0.0
          %2465 = vmatpush1.msra.mxu0 0.0
          %2466 = vmatprep.subr.mxu0 0.0
          %2467 = vmatpush1.msra.mxu0 0.0
          %2468 = vmatprep.subr.mxu0 0.0
          %2469 = vmatpush1.msra.mxu0 0.0
          %2470 = vmatprep.subr.mxu0 0.0
          %2471 = vmatpush1.msra.mxu0 0.0
          %2472 = vmatprep.mubr.f32.mxu0 0.0
          %2473 = vmatmul.mubr.f32.gmra.mrb[0].mxu0 %v2406
          %v2474 = vpop.f32.mrb[0].mxu0
          %v2475 = vadd.f32 0.0, %v2474
          %v2476 = vpop.f32.mrb[0].mxu0
          %2477 = vdwg.mxu0
          %v2478 = vld [vmem:[%s20] sm:$0x1]
          %v2479 = vld [vmem:[%s21] sm:$0x1]
          %vm2480 = vcmask 254976
          %v2481 = vsel %vm2480, %v2475, 0.0
          %2482 = vadd.xlane.f32.xlu0 %v2481
          %v2483 = vpop.xlane.xlu0 %2482
          %v2484 = vmul.f32 %v2483, %v960
          %v2485 = vsub.f32 %v2475, %v2484
          %v2486 = vmul.f32 %v2485, %v2485
          %v2487 = vsel %vm2480, %v2486, 0.0
          %2488 = vadd.xlane.f32.xlu0 %v2487
          %v2489 = vpop.xlane.xlu0 %2488
          %v2490 = vmul.f32 %v2489, %v960
          %v2491 = vadd.f32 %v2490, 1e-05
          %v2492 = vrsqrt.pop %v2491
          %v2493 = vmul.f32 %v2485, %v2492
          %v2495 = vlaneseq
          %v2496 = vshrl.u32 %v2495, 7
          %v2497 = vsub.s32 0, %v2496
          %v2498 = vrot.slane %v2478, %v2497
          %v2500 = vmul.f32 %v2493, %v2498
          %v2502 = vlaneseq
          %v2503 = vshrl.u32 %v2502, 7
          %v2504 = vsub.s32 0, %v2503
          %v2505 = vrot.slane %v2479, %v2504
          %v2507 = vadd.f32 %v2500, %v2505
          %v2508 = vld [vmem:[%s22] sm:$0xff]
          %v2509 = vld [vmem:[%s22 + $0x8] sm:$0xff]
          %v2510 = vld [vmem:[%s22 + $0x10] sm:$0xff]
          %v2511 = vld [vmem:[%s22 + $0x18] sm:$0xff]
          %v2513 = vsel %vm953, %v2507, 0
          %2515 = vmatprep.subr.mxu0 0.0
          %2516 = vmatpush1.msra.mxu0 %v2508
          %2517 = vmatprep.subr.mxu0 0.0
          %2518 = vmatpush1.msra.mxu0 %v2509
          %2519 = vmatprep.subr.mxu0 0.0
          %2520 = vmatpush1.msra.mxu0 %v2510
          %2521 = vmatprep.subr.mxu0 0.0
          %2522 = vmatpush1.msra.mxu0 %v2511
          %2523 = vmatprep.subr.mxu0 0.0
          %2524 = vmatpush1.msra.mxu0 0.0
          %2525 = vmatprep.subr.mxu0 0.0
          %2526 = vmatpush1.msra.mxu0 0.0
          %2527 = vmatprep.subr.mxu0 0.0
          %2528 = vmatpush1.msra.mxu0 0.0
          %2529 = vmatprep.subr.mxu0 0.0
          %2530 = vmatpush1.msra.mxu0 0.0
          %2531 = vmatprep.subr.mxu0 0.0
          %2532 = vmatpush1.msra.mxu0 0.0
          %2533 = vmatprep.subr.mxu0 0.0
          %2534 = vmatpush1.msra.mxu0 0.0
          %2535 = vmatprep.subr.mxu0 0.0
          %2536 = vmatpush1.msra.mxu0 0.0
          %2537 = vmatprep.subr.mxu0 0.0
          %2538 = vmatpush1.msra.mxu0 0.0
          %2539 = vmatprep.subr.mxu0 0.0
          %2540 = vmatpush1.msra.mxu0 0.0
          %2541 = vmatprep.subr.mxu0 0.0
          %2542 = vmatpush1.msra.mxu0 0.0
          %2543 = vmatprep.subr.mxu0 0.0
          %2544 = vmatpush1.msra.mxu0 0.0
          %2545 = vmatprep.subr.mxu0 0.0
          %2546 = vmatpush1.msra.mxu0 0.0
          %2547 = vmatprep.subr.mxu0 0.0
          %2548 = vmatpush1.msra.mxu0 0.0
          %2549 = vmatprep.subr.mxu0 0.0
          %2550 = vmatpush1.msra.mxu0 0.0
          %2551 = vmatprep.subr.mxu0 0.0
          %2552 = vmatpush1.msra.mxu0 0.0
          %2553 = vmatprep.subr.mxu0 0.0
          %2554 = vmatpush1.msra.mxu0 0.0
          %2555 = vmatprep.subr.mxu0 0.0
          %2556 = vmatpush1.msra.mxu0 0.0
          %2557 = vmatprep.subr.mxu0 0.0
          %2558 = vmatpush1.msra.mxu0 0.0
          %2559 = vmatprep.subr.mxu0 0.0
          %2560 = vmatpush1.msra.mxu0 0.0
          %2561 = vmatprep.subr.mxu0 0.0
          %2562 = vmatpush1.msra.mxu0 0.0
          %2563 = vmatprep.subr.mxu0 0.0
          %2564 = vmatpush1.msra.mxu0 0.0
          %2565 = vmatprep.subr.mxu0 0.0
          %2566 = vmatpush1.msra.mxu0 0.0
          %2567 = vmatprep.subr.mxu0 0.0
          %2568 = vmatpush1.msra.mxu0 0.0
          %2569 = vmatprep.subr.mxu0 0.0
          %2570 = vmatpush1.msra.mxu0 0.0
          %2571 = vmatprep.subr.mxu0 0.0
          %2572 = vmatpush1.msra.mxu0 0.0
          %2573 = vmatprep.subr.mxu0 0.0
          %2574 = vmatpush1.msra.mxu0 0.0
          %2575 = vmatprep.subr.mxu0 0.0
          %2576 = vmatpush1.msra.mxu0 0.0
          %2577 = vmatprep.subr.mxu0 0.0
          %2578 = vmatpush1.msra.mxu0 0.0
          %2579 = vmatprep.mubr.f32.mxu0 0.0
          %2580 = vmatmul.mubr.f32.gmra.mrb[0].mxu0 %v2513
          %v2581 = vpop.f32.mrb[0].mxu0
          %v2582 = vadd.f32 0.0, %v2581
          %v2583 = vpop.f32.mrb[0].mxu0
          %2584 = vdwg.mxu0
          %vm2585 = vcmask 123904
          %2586 = vst.msk [vmem:[#allocation3] sm:$0x3] %vm2585, %v2582
        $region120: #{text_encoder_forward.1} parent=111 // pred_fallthru
          _
        // Predicated region
        $region121: #{text_encoder_forward.1} parent=111 // pred_check
          %p2587 = pneg %p611
        $region122: #{text_encoder_forward.1} parent=111 // pred_check_branch
          %2589 = sbr.rel (%p2587) target = $region124
        $region123: #{text_encoder_forward.1} parent=111 // pred_region
          %s2591 = ssub.s32 32, 32
          %2592 = vsyncadd [#allocation4], %s2591
          %s2594 = sshll.u32 [#allocation3], 4
          %s2595 = int_to_ptr.vmem [resolvable:$true] %s2594
          %2597 = dma.vmem_to_hbm [thread:$0]  %s2595, 32, %s23, [#allocation4]
        $region124: #{text_encoder_forward.1} parent=111 // pred_fallthru
          _
        // Predicated region
        $region125: #{text_encoder_forward.1} parent=111 // pred_check
          %p2598 = pneg %p611
        $region126: #{text_encoder_forward.1} parent=111 // pred_check_branch
          %2600 = sbr.rel (%p2598) target = $region128
        $region127: #{text_encoder_forward.1} parent=111 // pred_region
          %2601 = dma.done [#allocation4], 32
        $region128: #{text_encoder_forward.1} parent=111 // pred_fallthru
          _
      $region112: #{text_encoder_forward.1} parent=5 // pred_fallthru
        _
      %p2602 = scmp.le.s32.totalorder 2, %s30
      // Predicated region
      $region129: #{text_encoder_forward.1} parent=5 // pred_check
        %p2603 = pneg %p2602
      $region130: #{text_encoder_forward.1} parent=5 // pred_check_branch
        %2605 = sbr.rel (%p2603) target = $region132
      $region131: #{text_encoder_forward.1} parent=5 // pred_region
        %s2606 = ssub.s32 %s30, 2
      $region132: #{text_encoder_forward.1} parent=5 // pred_fallthru
        _
    $region6: #{text_encoder_forward.1} parent=1 // loop_footer
      %s34 = sadd.s32 1, %s30
    $region7: #{text_encoder_forward.1} parent=1 // loop_footer_branch
      %29 = sbr.rel target = $region3
    $region8: #{text_encoder_forward.1} parent=1 // loop_exit
      _
    %2607 = vsyncpa [#allocation4], 1
    %s2608 = scalar_lea.sflag [#allocation4], 1
    %2609 = vsyncpa %s2608, 1

</llo_original>
